<compile_context>
chip_gen: v5e
topology: v5e:2x2
jax: 0.10.0
libtpu: 0.0.40
codegen_flags: <defaults>
</compile_context>

<pallas_src>
import functools

import jax
import jax.numpy as jnp
from jax import lax
from jax.experimental import pallas as pl
from jax.experimental.pallas import tpu as pltpu


# ----------------------------------------------------------------------------
# Fused kernel: one grid step == BN batch elements.  Activation slabs are
# (T*BN rows, V*C lanes); everything stays in vregs / VMEM scratch.
# ----------------------------------------------------------------------------
def _hybrid_ssm_kernel(
        y_ref,       # (1, T*BN, Vt)   torso measurements, row = t*BN + n
        a_encT_ref,  # (Vt, Vt)        A_enc^T
        e_lift_ref,  # (Vt, Vt*C)      kron(I_Vt, w_enc)
        b_enc_ref,   # (1, Vt*C)       tile(b_enc, Vt)
        a_invE_ref,  # (Vt*C, Vh*C)    kron(A_inv^T, I_C)
        wtwo_ref,    # (Vh*C, Vh*C)    kron(I_Vh, W_trans @ W_obs)
        bcorr_ref,   # (1, Vh*C)       tile(b_corr, Vh)
        wtrans_ref,  # (Vh*C, Vh*C)    kron(I_Vh, W_trans)
        wode_ref,    # (Vh*C, Vh*C)    kron(I_Vh, W_ode)
        bode_ref,    # (1, Vh*C)       tile(b_ode, Vh)
        wh_ref,      # (Vh*C, Vh*C)    kron(I_Vh, W_h)
        mx_ref,      # (Vh, Vh*C)      kron(A_dec, w_dec)
        xb_ref,      # (Vh, 1)         b_dec
        mlx_ref,     # (Vh, Vh*C)      kron(L @ A_dec, w_dec)
        lb_ref,      # (Vh, 1)         b_dec * (L @ 1)
        my_ref,      # (Vt, Vh*C)      kron(H @ A_dec, w_dec)
        hb_ref,      # (Vt, 1)         b_dec * (H @ 1)
        x_out,       # (1, Vh, T*BN)
        lx_out,      # (1, Vh, T*BN)
        y_out,       # (1, Vt, T*BN)
        obs_buf,     # VMEM scratch (T*BN, Vh*C)
        zbuf,        # VMEM scratch (T*BN, Vh*C)
        *, bn, t_len):
    f32 = jnp.float32

    # ---------------- encoder: adjacency first, then channel lift -----------
    y_s = y_ref[0]                                                 # (T*BN, Vt)
    m = jnp.dot(y_s, a_encT_ref[...], preferred_element_type=f32)  # (T*BN, Vt)
    zt = jnp.tanh(
        jnp.dot(m, e_lift_ref[...], preferred_element_type=f32)    # (T*BN, Vt*C)
        + b_enc_ref[...])

    # -------- inverse mapping: torso latent -> heart latent -----------------
    # TODO(synk): torch_geometric SplineConv over edge_index/edge_attr has no
    #             clean Pallas equivalent without the graph data; dense
    #             adjacency + block-diagonal channel mixes are used instead.
    zh_pre = jnp.dot(zt, a_invE_ref[...],
                     preferred_element_type=f32)                   # (T*BN, Vh*C)

    # -------- hoisted observation branch (W_trans @ W_obs folded) -----------
    obs_buf[...] = (jnp.dot(zh_pre, wtwo_ref[...], preferred_element_type=f32)
                    + bcorr_ref[...])                               # (T*BN, Vh*C)

    # -------- sequential time modelling on batched (BN, Vh*C) state ---------
    z0 = jnp.dot(zh_pre[0:bn, :], wtrans_ref[...],
                 preferred_element_type=f32)                        # (BN, Vh*C)
    zbuf[0:bn, :] = z0
    last = z0
    for t in range(1, t_len):            # T is compile-time -> unrolled
        dh = jnp.tanh(jnp.dot(last, wode_ref[...], preferred_element_type=f32)
                      + bode_ref[...])
        h_pred = last + dh               # explicit Euler transition, dt=1, steps=1
        h = jnp.tanh(obs_buf[t * bn:(t + 1) * bn, :]
                     + jnp.dot(h_pred, wh_ref[...], preferred_element_type=f32))
        zbuf[t * bn:(t + 1) * bn, :] = h
        last = h

    # -------- fused decoder readout + A_dec / L / H (lane-dense outputs) ----
    zz = zbuf[...]                                                  # (T*BN, Vh*C)
    nt = (((1,), (1,)), ((), ()))        # contract the (node*channel) axis
    x_out[0] = lax.dot_general(mx_ref[...], zz, nt,
                               preferred_element_type=f32) + xb_ref[...]
    lx_out[0] = lax.dot_general(mlx_ref[...], zz, nt,
                                preferred_element_type=f32) + lb_ref[...]
    y_out[0] = lax.dot_general(my_ref[...], zz, nt,
                               preferred_element_type=f32) + hb_ref[...]


# ----------------------------------------------------------------------------
# Wrapper (mirrors HybridSSM.forward): builds the batched slab layouts and the
# kron / prefused parameter views, launches the fused kernel, un-permutes.
# ----------------------------------------------------------------------------
def hybrid_ssm_forward(y, p, *, bn=16):
    """y: (N, Vt, T) torso measurements. Returns ((x, LX, y_pred), None)."""
    N, Vt, T = y.shape
    C = p["W_ode"].shape[0]
    Vh = p["A_dec"].shape[0]
    assert (bn * T) % 8 == 0, "bn*T must be a multiple of 8 (sublane tiling)"

    G = (N + bn - 1) // bn               # number of grid steps (>=2 preferred)
    Np = G * bn
    y_pad = jnp.pad(y, ((0, Np - N), (0, 0), (0, 0))) if Np != N else y
    # (Np, Vt, T) -> (G, T*bn, Vt) with row index = t*bn + n (layout plumbing
    # done in the wrapper so the kernel only sees lane-/sublane-dense slabs).
    y_s = (y_pad.reshape(G, bn, Vt, T).transpose(0, 3, 1, 2)
           .reshape(G, T * bn, Vt))

    eye_vt = jnp.eye(Vt, dtype=jnp.float32)
    eye_vh = jnp.eye(Vh, dtype=jnp.float32)
    eye_c = jnp.eye(C, dtype=jnp.float32)

    a_encT = p["A_enc"].T                                    # (Vt, Vt)
    e_lift = jnp.kron(eye_vt, p["w_enc"])                    # (Vt, Vt*C)
    b_enc_t = jnp.tile(p["b_enc"], (1, Vt))                  # (1, Vt*C)
    a_invE = jnp.kron(p["A_inv"].T, eye_c)                   # (Vt*C, Vh*C)
    wtwo_blk = jnp.kron(eye_vh, p["W_trans"] @ p["W_obs"])   # (Vh*C, Vh*C)
    bcorr_t = jnp.tile(p["b_corr"], (1, Vh))                 # (1, Vh*C)
    wtrans_blk = jnp.kron(eye_vh, p["W_trans"])              # (Vh*C, Vh*C)
    wode_blk = jnp.kron(eye_vh, p["W_ode"])                  # (Vh*C, Vh*C)
    bode_t = jnp.tile(p["b_ode"], (1, Vh))                   # (1, Vh*C)
    wh_blk = jnp.kron(eye_vh, p["W_h"])                      # (Vh*C, Vh*C)

    # Prefused decoder / regularization readouts (exact up to reassociation).
    la = p["L"] @ p["A_dec"]
    ha = p["H"] @ p["A_dec"]
    mx = jnp.kron(p["A_dec"], p["w_dec"])                    # (Vh, Vh*C)
    mlx = jnp.kron(la, p["w_dec"])                           # (Vh, Vh*C)
    my = jnp.kron(ha, p["w_dec"])                            # (Vt, Vh*C)
    b_dec = p["b_dec"][0, 0]
    xb = b_dec * jnp.ones((Vh, 1), jnp.float32)
    lb = b_dec * jnp.sum(p["L"], axis=1, keepdims=True)
    hb = b_dec * jnp.sum(p["H"], axis=1, keepdims=True)

    weights = (a_encT, e_lift, b_enc_t, a_invE, wtwo_blk, bcorr_t, wtrans_blk,
               wode_blk, bode_t, wh_blk, mx, xb, mlx, lb, my, hb)

    def full_spec(a):
        nd = a.ndim
        return pl.BlockSpec(a.shape, lambda g: (0,) * nd)

    TBN = T * bn
    in_specs = ([pl.BlockSpec((1, TBN, Vt), lambda g: (g, 0, 0))]
                + [full_spec(w) for w in weights])
    out_specs = [pl.BlockSpec((1, Vh, TBN), lambda g: (g, 0, 0)),
                 pl.BlockSpec((1, Vh, TBN), lambda g: (g, 0, 0)),
                 pl.BlockSpec((1, Vt, TBN), lambda g: (g, 0, 0))]
    out_shape = (jax.ShapeDtypeStruct((G, Vh, TBN), jnp.float32),
                 jax.ShapeDtypeStruct((G, Vh, TBN), jnp.float32),
                 jax.ShapeDtypeStruct((G, Vt, TBN), jnp.float32))

    kernel = functools.partial(_hybrid_ssm_kernel, bn=bn, t_len=T)
    x_slab, lx_slab, y_slab = pl.pallas_call(
        kernel,
        out_shape=out_shape,
        grid=(G,),
        in_specs=in_specs,
        out_specs=out_specs,
        scratch_shapes=[pltpu.VMEM((TBN, Vh * C), jnp.float32),   # obs_buf
                        pltpu.VMEM((TBN, Vh * C), jnp.float32)],  # zbuf
        compiler_params=pltpu.CompilerParams(
            dimension_semantics=("parallel",)),
    )(y_s, *weights)

    def unslab(s, V):
        return (s.reshape(G, V, T, bn).transpose(0, 3, 1, 2)
                .reshape(Np, V, T)[:N])

    return (unslab(x_slab, Vh), unslab(lx_slab, Vh), unslab(y_slab, Vt)), None


# ----------------------------------------------------------------------------
# Pure-JAX reference (per-time-step formulation) for a numerical sanity check.
# ----------------------------------------------------------------------------
def reference_forward(y, p):
    N, Vt, T = y.shape
    y_ntv = jnp.transpose(y, (0, 2, 1))                                # (N,T,Vt)
    lifted = y_ntv[..., None] * p["w_enc"][0]                          # (N,T,Vt,C)
    z_torso = jnp.tanh(
        jnp.einsum("uv,ntvc->ntuc", p["A_enc"], lifted) + p["b_enc"][0])
    z_heart = jnp.einsum("hv,ntvc->nthc", p["A_inv"], z_torso)
    z_heart = jnp.einsum("nthc,cd->nthd", z_heart, p["W_trans"])       # (N,T,Vh,C)

    outs = [z_heart[:, 0]]
    last = z_heart[:, 0]
    for t in range(1, T):
        dh = jnp.tanh(last @ p["W_ode"] + p["b_ode"][0])
        h_pred = last + dh
        h = jnp.tanh(z_heart[:, t] @ p["W_obs"] + h_pred @ p["W_h"]
                     + p["b_corr"][0])
        outs.append(h)
        last = h
    z = jnp.stack(outs, axis=1)                                        # (N,T,Vh,C)

    hdec = jnp.einsum("uv,ntvc->ntuc", p["A_dec"], z)
    xs = jnp.einsum("ntuc,c->ntu", hdec, p["w_dec"][0]) + p["b_dec"][0, 0]
    x = jnp.transpose(xs, (0, 2, 1))                                   # (N,Vh,T)
    LX = jnp.einsum("uv,nvt->nut", p["L"], x)
    y_pred = jnp.einsum("uv,nvt->nut", p["H"], x)
    return x, LX, y_pred


def init_params(key, Vt, Vh, C):
    ks = jax.random.split(key, 16)
    s = 0.1
    return {
        "A_enc":   s * jax.random.normal(ks[0], (Vt, Vt), jnp.float32),
        "w_enc":   s * jax.random.normal(ks[1], (1, C), jnp.float32),
        "b_enc":   s * jax.random.normal(ks[2], (1, C), jnp.float32),
        "A_inv":   s * jax.random.normal(ks[3], (Vh, Vt), jnp.float32),
        "W_trans": s * jax.random.normal(ks[4], (C, C), jnp.float32),
        "W_ode":   s * jax.random.normal(ks[5], (C, C), jnp.float32),
        "b_ode":   s * jax.random.normal(ks[6], (1, C), jnp.float32),
        "W_obs":   s * jax.random.normal(ks[7], (C, C), jnp.float32),
        "W_h":     s * jax.random.normal(ks[8], (C, C), jnp.float32),
        "b_corr":  s * jax.random.normal(ks[9], (1, C), jnp.float32),
        "A_dec":   s * jax.random.normal(ks[10], (Vh, Vh), jnp.float32),
        "w_dec":   s * jax.random.normal(ks[11], (1, C), jnp.float32),
        "b_dec":   s * jax.random.normal(ks[12], (1, 1), jnp.float32),
        "L":       s * jax.random.normal(ks[13], (Vh, Vh), jnp.float32),
        "H":       s * jax.random.normal(ks[14], (Vt, Vh), jnp.float32),
    }


if __name__ == "__main__":
    N, T = 32, 8                # batch, seq_len (N=32 -> 2 parallel grid steps)
    Vt, Vh = 12, 16             # torso nodes, heart nodes
    C = 16                      # latent_dim
    # num_filters only parameterizes the (omitted) graph-conv widths.

    key = jax.random.PRNGKey(0)
    k_in, k_par = jax.random.split(key)
    y = jax.random.normal(k_in, (N, Vt, T), jnp.float32)
    params = init_params(k_par, Vt, Vh, C)

    (x, LX, y_pred), _ = jax.jit(hybrid_ssm_forward)(y, params)
    jax.block_until_ready((x, LX, y_pred))

    assert x.shape == (N, Vh, T)
    assert LX.shape == (N, Vh, T)
    assert y_pred.shape == (N, Vt, T)

    # Numerical check vs. pure-JAX reference (tolerance allows for MXU f32
    # pass differences and the blessed contraction reorderings).
    with jax.default_matmul_precision("highest"):
        xr, LXr, yr = reference_forward(y, params)
    err = max(float(jnp.max(jnp.abs(x - xr))),
              float(jnp.max(jnp.abs(LX - LXr))),
              float(jnp.max(jnp.abs(y_pred - yr))))
    assert err < 2e-2, f"kernel/reference mismatch: max abs err = {err}"
    print("KERNEL_OK")
</pallas_src>

<mosaic_0001>
module attributes {stable_mosaic.version = 11 : i64} {
  func.func @_hybrid_ssm_kernel(%arg0: i32, %arg1: memref<1x128x12xf32, #tpu.memory_space<vmem>>, %arg2: memref<12x12xf32, #tpu.memory_space<vmem>>, %arg3: memref<12x192xf32, #tpu.memory_space<vmem>>, %arg4: memref<1x192xf32, #tpu.memory_space<vmem>>, %arg5: memref<192x256xf32, #tpu.memory_space<vmem>>, %arg6: memref<256x256xf32, #tpu.memory_space<vmem>>, %arg7: memref<1x256xf32, #tpu.memory_space<vmem>>, %arg8: memref<256x256xf32, #tpu.memory_space<vmem>>, %arg9: memref<256x256xf32, #tpu.memory_space<vmem>>, %arg10: memref<1x256xf32, #tpu.memory_space<vmem>>, %arg11: memref<256x256xf32, #tpu.memory_space<vmem>>, %arg12: memref<16x256xf32, #tpu.memory_space<vmem>>, %arg13: memref<16x1xf32, #tpu.memory_space<vmem>>, %arg14: memref<16x256xf32, #tpu.memory_space<vmem>>, %arg15: memref<16x1xf32, #tpu.memory_space<vmem>>, %arg16: memref<12x256xf32, #tpu.memory_space<vmem>>, %arg17: memref<12x1xf32, #tpu.memory_space<vmem>>, %arg18: memref<1x16x128xf32, #tpu.memory_space<vmem>>, %arg19: memref<1x16x128xf32, #tpu.memory_space<vmem>>, %arg20: memref<1x12x128xf32, #tpu.memory_space<vmem>>, %arg21: memref<128x256xf32, #tpu.memory_space<vmem>>, %arg22: memref<128x256xf32, #tpu.memory_space<vmem>>) attributes {dimension_semantics = [#tpu.dimension_semantics<parallel>], iteration_bounds = array<i64: 2>, scalar_prefetch = 0 : i64, scratch_operands = 2 : i64, tpu.core_type = #tpu.core_type<tc>, window_params = [{transform_indices = @transform_0, window_bounds = array<i64: 1, 128, 12>}, {pipeline_mode = #tpu.pipeline_mode<synchronous>, transform_indices = @transform_1, window_bounds = array<i64: 12, 12>}, {pipeline_mode = #tpu.pipeline_mode<synchronous>, transform_indices = @transform_2, window_bounds = array<i64: 12, 192>}, {pipeline_mode = #tpu.pipeline_mode<synchronous>, transform_indices = @transform_3, window_bounds = array<i64: 1, 192>}, {pipeline_mode = #tpu.pipeline_mode<synchronous>, transform_indices = @transform_4, window_bounds = array<i64: 192, 256>}, {pipeline_mode = #tpu.pipeline_mode<synchronous>, transform_indices = @transform_5, window_bounds = array<i64: 256, 256>}, {pipeline_mode = #tpu.pipeline_mode<synchronous>, transform_indices = @transform_6, window_bounds = array<i64: 1, 256>}, {pipeline_mode = #tpu.pipeline_mode<synchronous>, transform_indices = @transform_7, window_bounds = array<i64: 256, 256>}, {pipeline_mode = #tpu.pipeline_mode<synchronous>, transform_indices = @transform_8, window_bounds = array<i64: 256, 256>}, {pipeline_mode = #tpu.pipeline_mode<synchronous>, transform_indices = @transform_9, window_bounds = array<i64: 1, 256>}, {pipeline_mode = #tpu.pipeline_mode<synchronous>, transform_indices = @transform_10, window_bounds = array<i64: 256, 256>}, {pipeline_mode = #tpu.pipeline_mode<synchronous>, transform_indices = @transform_11, window_bounds = array<i64: 16, 256>}, {pipeline_mode = #tpu.pipeline_mode<synchronous>, transform_indices = @transform_12, window_bounds = array<i64: 16, 1>}, {pipeline_mode = #tpu.pipeline_mode<synchronous>, transform_indices = @transform_13, window_bounds = array<i64: 16, 256>}, {pipeline_mode = #tpu.pipeline_mode<synchronous>, transform_indices = @transform_14, window_bounds = array<i64: 16, 1>}, {pipeline_mode = #tpu.pipeline_mode<synchronous>, transform_indices = @transform_15, window_bounds = array<i64: 12, 256>}, {pipeline_mode = #tpu.pipeline_mode<synchronous>, transform_indices = @transform_16, window_bounds = array<i64: 12, 1>}, {transform_indices = @transform_17, window_bounds = array<i64: 1, 16, 128>}, {transform_indices = @transform_18, window_bounds = array<i64: 1, 16, 128>}, {transform_indices = @transform_19, window_bounds = array<i64: 1, 12, 128>}]} {
    %c0 = arith.constant 0 : index
    %c0_0 = arith.constant 0 : index
    %c0_1 = arith.constant 0 : index
    %0 = vector.load %arg1[%c0, %c0_0, %c0_1] : memref<1x128x12xf32, #tpu.memory_space<vmem>>, vector<1x128x12xf32>
    %1 = vector.shape_cast %0 : vector<1x128x12xf32> to vector<128x12xf32>
    %c0_2 = arith.constant 0 : index
    %c0_3 = arith.constant 0 : index
    %2 = vector.load %arg2[%c0_2, %c0_3] : memref<12x12xf32, #tpu.memory_space<vmem>>, vector<12x12xf32>
    %cst = arith.constant dense<0.000000e+00> : vector<128x12xf32>
    %3 = tpu.matmul %1, %2, %cst {dimension_numbers = #tpu.dot_dimension_numbers<[1], [0], [0], [1], [0, 0, 1, 1], [], []>} : vector<128x12xf32>, vector<12x12xf32>, vector<128x12xf32> -> vector<128x12xf32>
    %c0_4 = arith.constant 0 : index
    %c0_5 = arith.constant 0 : index
    %4 = vector.load %arg3[%c0_4, %c0_5] : memref<12x192xf32, #tpu.memory_space<vmem>>, vector<12x192xf32>
    %cst_6 = arith.constant dense<0.000000e+00> : vector<128x192xf32>
    %5 = tpu.matmul %3, %4, %cst_6 {dimension_numbers = #tpu.dot_dimension_numbers<[1], [0], [0], [1], [0, 0, 1, 1], [], []>} : vector<128x12xf32>, vector<12x192xf32>, vector<128x192xf32> -> vector<128x192xf32>
    %c0_7 = arith.constant 0 : index
    %c0_8 = arith.constant 0 : index
    %6 = vector.load %arg4[%c0_7, %c0_8] : memref<1x192xf32, #tpu.memory_space<vmem>>, vector<1x192xf32>
    %7 = vector.broadcast %6 : vector<1x192xf32> to vector<128x192xf32>
    %8 = arith.addf %5, %7 : vector<128x192xf32>
    %9 = math.tanh %8 : vector<128x192xf32>
    %c0_9 = arith.constant 0 : index
    %c0_10 = arith.constant 0 : index
    %10 = vector.load %arg5[%c0_9, %c0_10] : memref<192x256xf32, #tpu.memory_space<vmem>>, vector<192x256xf32>
    %cst_11 = arith.constant dense<0.000000e+00> : vector<128x256xf32>
    %11 = tpu.matmul %9, %10, %cst_11 {dimension_numbers = #tpu.dot_dimension_numbers<[1], [0], [0], [1], [0, 0, 1, 1], [], []>} : vector<128x192xf32>, vector<192x256xf32>, vector<128x256xf32> -> vector<128x256xf32>
    %c0_12 = arith.constant 0 : index
    %c0_13 = arith.constant 0 : index
    %12 = vector.load %arg6[%c0_12, %c0_13] : memref<256x256xf32, #tpu.memory_space<vmem>>, vector<256x256xf32>
    %cst_14 = arith.constant dense<0.000000e+00> : vector<128x256xf32>
    %13 = tpu.matmul %11, %12, %cst_14 {dimension_numbers = #tpu.dot_dimension_numbers<[1], [0], [0], [1], [0, 0, 1, 1], [], []>} : vector<128x256xf32>, vector<256x256xf32>, vector<128x256xf32> -> vector<128x256xf32>
    %c0_15 = arith.constant 0 : index
    %c0_16 = arith.constant 0 : index
    %14 = vector.load %arg7[%c0_15, %c0_16] : memref<1x256xf32, #tpu.memory_space<vmem>>, vector<1x256xf32>
    %15 = vector.broadcast %14 : vector<1x256xf32> to vector<128x256xf32>
    %16 = arith.addf %13, %15 : vector<128x256xf32>
    %c0_17 = arith.constant 0 : index
    %c0_18 = arith.constant 0 : index
    %17 = vector.load %arg21[%c0_17, %c0_18] : memref<128x256xf32, #tpu.memory_space<vmem>>, vector<128x256xf32>
    tpu.vector_store %arg21[%c0_17, %c0_18], %16 {strides = array<i32>} : memref<128x256xf32, #tpu.memory_space<vmem>>, vector<128x256xf32>,
    %18 = vector.extract_strided_slice %11 {offsets = [0, 0], sizes = [16, 256], strides = [1, 1]} : vector<128x256xf32> to vector<16x256xf32>
    %c0_19 = arith.constant 0 : index
    %c0_20 = arith.constant 0 : index
    %19 = vector.load %arg8[%c0_19, %c0_20] : memref<256x256xf32, #tpu.memory_space<vmem>>, vector<256x256xf32>
    %cst_21 = arith.constant dense<0.000000e+00> : vector<16x256xf32>
    %20 = tpu.matmul %18, %19, %cst_21 {dimension_numbers = #tpu.dot_dimension_numbers<[1], [0], [0], [1], [0, 0, 1, 1], [], []>} : vector<16x256xf32>, vector<256x256xf32>, vector<16x256xf32> -> vector<16x256xf32>
    %c0_22 = arith.constant 0 : index
    %c0_23 = arith.constant 0 : index
    %21 = vector.load %arg22[%c0_22, %c0_23] : memref<128x256xf32, #tpu.memory_space<vmem>>, vector<16x256xf32>
    tpu.vector_store %arg22[%c0_22, %c0_23], %20 {strides = array<i32>} : memref<128x256xf32, #tpu.memory_space<vmem>>, vector<16x256xf32>,
    %c0_24 = arith.constant 0 : index
    %c0_25 = arith.constant 0 : index
    %22 = vector.load %arg9[%c0_24, %c0_25] : memref<256x256xf32, #tpu.memory_space<vmem>>, vector<256x256xf32>
    %cst_26 = arith.constant dense<0.000000e+00> : vector<16x256xf32>
    %23 = tpu.matmul %20, %22, %cst_26 {dimension_numbers = #tpu.dot_dimension_numbers<[1], [0], [0], [1], [0, 0, 1, 1], [], []>} : vector<16x256xf32>, vector<256x256xf32>, vector<16x256xf32> -> vector<16x256xf32>
    %c0_27 = arith.constant 0 : index
    %c0_28 = arith.constant 0 : index
    %24 = vector.load %arg10[%c0_27, %c0_28] : memref<1x256xf32, #tpu.memory_space<vmem>>, vector<1x256xf32>
    %25 = vector.broadcast %24 : vector<1x256xf32> to vector<16x256xf32>
    %26 = arith.addf %23, %25 : vector<16x256xf32>
    %27 = math.tanh %26 : vector<16x256xf32>
    %28 = arith.addf %20, %27 : vector<16x256xf32>
    %c16 = arith.constant 16 : index
    %c0_29 = arith.constant 0 : index
    %29 = vector.load %arg21[%c16, %c0_29] : memref<128x256xf32, #tpu.memory_space<vmem>>, vector<16x256xf32>
    %c0_30 = arith.constant 0 : index
    %c0_31 = arith.constant 0 : index
    %30 = vector.load %arg11[%c0_30, %c0_31] : memref<256x256xf32, #tpu.memory_space<vmem>>, vector<256x256xf32>
    %cst_32 = arith.constant dense<0.000000e+00> : vector<16x256xf32>
    %31 = tpu.matmul %28, %30, %cst_32 {dimension_numbers = #tpu.dot_dimension_numbers<[1], [0], [0], [1], [0, 0, 1, 1], [], []>} : vector<16x256xf32>, vector<256x256xf32>, vector<16x256xf32> -> vector<16x256xf32>
    %32 = arith.addf %29, %31 : vector<16x256xf32>
    %33 = math.tanh %32 : vector<16x256xf32>
    %c16_33 = arith.constant 16 : index
    %c0_34 = arith.constant 0 : index
    %34 = vector.load %arg22[%c16_33, %c0_34] : memref<128x256xf32, #tpu.memory_space<vmem>>, vector<16x256xf32>
    tpu.vector_store %arg22[%c16_33, %c0_34], %33 {strides = array<i32>} : memref<128x256xf32, #tpu.memory_space<vmem>>, vector<16x256xf32>,
    %c0_35 = arith.constant 0 : index
    %c0_36 = arith.constant 0 : index
    %35 = vector.load %arg9[%c0_35, %c0_36] : memref<256x256xf32, #tpu.memory_space<vmem>>, vector<256x256xf32>
    %cst_37 = arith.constant dense<0.000000e+00> : vector<16x256xf32>
    %36 = tpu.matmul %33, %35, %cst_37 {dimension_numbers = #tpu.dot_dimension_numbers<[1], [0], [0], [1], [0, 0, 1, 1], [], []>} : vector<16x256xf32>, vector<256x256xf32>, vector<16x256xf32> -> vector<16x256xf32>
    %c0_38 = arith.constant 0 : index
    %c0_39 = arith.constant 0 : index
    %37 = vector.load %arg10[%c0_38, %c0_39] : memref<1x256xf32, #tpu.memory_space<vmem>>, vector<1x256xf32>
    %38 = vector.broadcast %37 : vector<1x256xf32> to vector<16x256xf32>
    %39 = arith.addf %36, %38 : vector<16x256xf32>
    %40 = math.tanh %39 : vector<16x256xf32>
    %41 = arith.addf %33, %40 : vector<16x256xf32>
    %c32 = arith.constant 32 : index
    %c0_40 = arith.constant 0 : index
    %42 = vector.load %arg21[%c32, %c0_40] : memref<128x256xf32, #tpu.memory_space<vmem>>, vector<16x256xf32>
    %c0_41 = arith.constant 0 : index
    %c0_42 = arith.constant 0 : index
    %43 = vector.load %arg11[%c0_41, %c0_42] : memref<256x256xf32, #tpu.memory_space<vmem>>, vector<256x256xf32>
    %cst_43 = arith.constant dense<0.000000e+00> : vector<16x256xf32>
    %44 = tpu.matmul %41, %43, %cst_43 {dimension_numbers = #tpu.dot_dimension_numbers<[1], [0], [0], [1], [0, 0, 1, 1], [], []>} : vector<16x256xf32>, vector<256x256xf32>, vector<16x256xf32> -> vector<16x256xf32>
    %45 = arith.addf %42, %44 : vector<16x256xf32>
    %46 = math.tanh %45 : vector<16x256xf32>
    %c32_44 = arith.constant 32 : index
    %c0_45 = arith.constant 0 : index
    %47 = vector.load %arg22[%c32_44, %c0_45] : memref<128x256xf32, #tpu.memory_space<vmem>>, vector<16x256xf32>
    tpu.vector_store %arg22[%c32_44, %c0_45], %46 {strides = array<i32>} : memref<128x256xf32, #tpu.memory_space<vmem>>, vector<16x256xf32>,
    %c0_46 = arith.constant 0 : index
    %c0_47 = arith.constant 0 : index
    %48 = vector.load %arg9[%c0_46, %c0_47] : memref<256x256xf32, #tpu.memory_space<vmem>>, vector<256x256xf32>
    %cst_48 = arith.constant dense<0.000000e+00> : vector<16x256xf32>
    %49 = tpu.matmul %46, %48, %cst_48 {dimension_numbers = #tpu.dot_dimension_numbers<[1], [0], [0], [1], [0, 0, 1, 1], [], []>} : vector<16x256xf32>, vector<256x256xf32>, vector<16x256xf32> -> vector<16x256xf32>
    %c0_49 = arith.constant 0 : index
    %c0_50 = arith.constant 0 : index
    %50 = vector.load %arg10[%c0_49, %c0_50] : memref<1x256xf32, #tpu.memory_space<vmem>>, vector<1x256xf32>
    %51 = vector.broadcast %50 : vector<1x256xf32> to vector<16x256xf32>
    %52 = arith.addf %49, %51 : vector<16x256xf32>
    %53 = math.tanh %52 : vector<16x256xf32>
    %54 = arith.addf %46, %53 : vector<16x256xf32>
    %c48 = arith.constant 48 : index
    %c0_51 = arith.constant 0 : index
    %55 = vector.load %arg21[%c48, %c0_51] : memref<128x256xf32, #tpu.memory_space<vmem>>, vector<16x256xf32>
    %c0_52 = arith.constant 0 : index
    %c0_53 = arith.constant 0 : index
    %56 = vector.load %arg11[%c0_52, %c0_53] : memref<256x256xf32, #tpu.memory_space<vmem>>, vector<256x256xf32>
    %cst_54 = arith.constant dense<0.000000e+00> : vector<16x256xf32>
    %57 = tpu.matmul %54, %56, %cst_54 {dimension_numbers = #tpu.dot_dimension_numbers<[1], [0], [0], [1], [0, 0, 1, 1], [], []>} : vector<16x256xf32>, vector<256x256xf32>, vector<16x256xf32> -> vector<16x256xf32>
    %58 = arith.addf %55, %57 : vector<16x256xf32>
    %59 = math.tanh %58 : vector<16x256xf32>
    %c48_55 = arith.constant 48 : index
    %c0_56 = arith.constant 0 : index
    %60 = vector.load %arg22[%c48_55, %c0_56] : memref<128x256xf32, #tpu.memory_space<vmem>>, vector<16x256xf32>
    tpu.vector_store %arg22[%c48_55, %c0_56], %59 {strides = array<i32>} : memref<128x256xf32, #tpu.memory_space<vmem>>, vector<16x256xf32>,
    %c0_57 = arith.constant 0 : index
    %c0_58 = arith.constant 0 : index
    %61 = vector.load %arg9[%c0_57, %c0_58] : memref<256x256xf32, #tpu.memory_space<vmem>>, vector<256x256xf32>
    %cst_59 = arith.constant dense<0.000000e+00> : vector<16x256xf32>
    %62 = tpu.matmul %59, %61, %cst_59 {dimension_numbers = #tpu.dot_dimension_numbers<[1], [0], [0], [1], [0, 0, 1, 1], [], []>} : vector<16x256xf32>, vector<256x256xf32>, vector<16x256xf32> -> vector<16x256xf32>
    %c0_60 = arith.constant 0 : index
    %c0_61 = arith.constant 0 : index
    %63 = vector.load %arg10[%c0_60, %c0_61] : memref<1x256xf32, #tpu.memory_space<vmem>>, vector<1x256xf32>
    %64 = vector.broadcast %63 : vector<1x256xf32> to vector<16x256xf32>
    %65 = arith.addf %62, %64 : vector<16x256xf32>
    %66 = math.tanh %65 : vector<16x256xf32>
    %67 = arith.addf %59, %66 : vector<16x256xf32>
    %c64 = arith.constant 64 : index
    %c0_62 = arith.constant 0 : index
    %68 = vector.load %arg21[%c64, %c0_62] : memref<128x256xf32, #tpu.memory_space<vmem>>, vector<16x256xf32>
    %c0_63 = arith.constant 0 : index
    %c0_64 = arith.constant 0 : index
    %69 = vector.load %arg11[%c0_63, %c0_64] : memref<256x256xf32, #tpu.memory_space<vmem>>, vector<256x256xf32>
    %cst_65 = arith.constant dense<0.000000e+00> : vector<16x256xf32>
    %70 = tpu.matmul %67, %69, %cst_65 {dimension_numbers = #tpu.dot_dimension_numbers<[1], [0], [0], [1], [0, 0, 1, 1], [], []>} : vector<16x256xf32>, vector<256x256xf32>, vector<16x256xf32> -> vector<16x256xf32>
    %71 = arith.addf %68, %70 : vector<16x256xf32>
    %72 = math.tanh %71 : vector<16x256xf32>
    %c64_66 = arith.constant 64 : index
    %c0_67 = arith.constant 0 : index
    %73 = vector.load %arg22[%c64_66, %c0_67] : memref<128x256xf32, #tpu.memory_space<vmem>>, vector<16x256xf32>
    tpu.vector_store %arg22[%c64_66, %c0_67], %72 {strides = array<i32>} : memref<128x256xf32, #tpu.memory_space<vmem>>, vector<16x256xf32>,
    %c0_68 = arith.constant 0 : index
    %c0_69 = arith.constant 0 : index
    %74 = vector.load %arg9[%c0_68, %c0_69] : memref<256x256xf32, #tpu.memory_space<vmem>>, vector<256x256xf32>
    %cst_70 = arith.constant dense<0.000000e+00> : vector<16x256xf32>
    %75 = tpu.matmul %72, %74, %cst_70 {dimension_numbers = #tpu.dot_dimension_numbers<[1], [0], [0], [1], [0, 0, 1, 1], [], []>} : vector<16x256xf32>, vector<256x256xf32>, vector<16x256xf32> -> vector<16x256xf32>
    %c0_71 = arith.constant 0 : index
    %c0_72 = arith.constant 0 : index
    %76 = vector.load %arg10[%c0_71, %c0_72] : memref<1x256xf32, #tpu.memory_space<vmem>>, vector<1x256xf32>
    %77 = vector.broadcast %76 : vector<1x256xf32> to vector<16x256xf32>
    %78 = arith.addf %75, %77 : vector<16x256xf32>
    %79 = math.tanh %78 : vector<16x256xf32>
    %80 = arith.addf %72, %79 : vector<16x256xf32>
    %c80 = arith.constant 80 : index
    %c0_73 = arith.constant 0 : index
    %81 = vector.load %arg21[%c80, %c0_73] : memref<128x256xf32, #tpu.memory_space<vmem>>, vector<16x256xf32>
    %c0_74 = arith.constant 0 : index
    %c0_75 = arith.constant 0 : index
    %82 = vector.load %arg11[%c0_74, %c0_75] : memref<256x256xf32, #tpu.memory_space<vmem>>, vector<256x256xf32>
    %cst_76 = arith.constant dense<0.000000e+00> : vector<16x256xf32>
    %83 = tpu.matmul %80, %82, %cst_76 {dimension_numbers = #tpu.dot_dimension_numbers<[1], [0], [0], [1], [0, 0, 1, 1], [], []>} : vector<16x256xf32>, vector<256x256xf32>, vector<16x256xf32> -> vector<16x256xf32>
    %84 = arith.addf %81, %83 : vector<16x256xf32>
    %85 = math.tanh %84 : vector<16x256xf32>
    %c80_77 = arith.constant 80 : index
    %c0_78 = arith.constant 0 : index
    %86 = vector.load %arg22[%c80_77, %c0_78] : memref<128x256xf32, #tpu.memory_space<vmem>>, vector<16x256xf32>
    tpu.vector_store %arg22[%c80_77, %c0_78], %85 {strides = array<i32>} : memref<128x256xf32, #tpu.memory_space<vmem>>, vector<16x256xf32>,
    %c0_79 = arith.constant 0 : index
    %c0_80 = arith.constant 0 : index
    %87 = vector.load %arg9[%c0_79, %c0_80] : memref<256x256xf32, #tpu.memory_space<vmem>>, vector<256x256xf32>
    %cst_81 = arith.constant dense<0.000000e+00> : vector<16x256xf32>
    %88 = tpu.matmul %85, %87, %cst_81 {dimension_numbers = #tpu.dot_dimension_numbers<[1], [0], [0], [1], [0, 0, 1, 1], [], []>} : vector<16x256xf32>, vector<256x256xf32>, vector<16x256xf32> -> vector<16x256xf32>
    %c0_82 = arith.constant 0 : index
    %c0_83 = arith.constant 0 : index
    %89 = vector.load %arg10[%c0_82, %c0_83] : memref<1x256xf32, #tpu.memory_space<vmem>>, vector<1x256xf32>
    %90 = vector.broadcast %89 : vector<1x256xf32> to vector<16x256xf32>
    %91 = arith.addf %88, %90 : vector<16x256xf32>
    %92 = math.tanh %91 : vector<16x256xf32>
    %93 = arith.addf %85, %92 : vector<16x256xf32>
    %c96 = arith.constant 96 : index
    %c0_84 = arith.constant 0 : index
    %94 = vector.load %arg21[%c96, %c0_84] : memref<128x256xf32, #tpu.memory_space<vmem>>, vector<16x256xf32>
    %c0_85 = arith.constant 0 : index
    %c0_86 = arith.constant 0 : index
    %95 = vector.load %arg11[%c0_85, %c0_86] : memref<256x256xf32, #tpu.memory_space<vmem>>, vector<256x256xf32>
    %cst_87 = arith.constant dense<0.000000e+00> : vector<16x256xf32>
    %96 = tpu.matmul %93, %95, %cst_87 {dimension_numbers = #tpu.dot_dimension_numbers<[1], [0], [0], [1], [0, 0, 1, 1], [], []>} : vector<16x256xf32>, vector<256x256xf32>, vector<16x256xf32> -> vector<16x256xf32>
    %97 = arith.addf %94, %96 : vector<16x256xf32>
    %98 = math.tanh %97 : vector<16x256xf32>
    %c96_88 = arith.constant 96 : index
    %c0_89 = arith.constant 0 : index
    %99 = vector.load %arg22[%c96_88, %c0_89] : memref<128x256xf32, #tpu.memory_space<vmem>>, vector<16x256xf32>
    tpu.vector_store %arg22[%c96_88, %c0_89], %98 {strides = array<i32>} : memref<128x256xf32, #tpu.memory_space<vmem>>, vector<16x256xf32>,
    %c0_90 = arith.constant 0 : index
    %c0_91 = arith.constant 0 : index
    %100 = vector.load %arg9[%c0_90, %c0_91] : memref<256x256xf32, #tpu.memory_space<vmem>>, vector<256x256xf32>
    %cst_92 = arith.constant dense<0.000000e+00> : vector<16x256xf32>
    %101 = tpu.matmul %98, %100, %cst_92 {dimension_numbers = #tpu.dot_dimension_numbers<[1], [0], [0], [1], [0, 0, 1, 1], [], []>} : vector<16x256xf32>, vector<256x256xf32>, vector<16x256xf32> -> vector<16x256xf32>
    %c0_93 = arith.constant 0 : index
    %c0_94 = arith.constant 0 : index
    %102 = vector.load %arg10[%c0_93, %c0_94] : memref<1x256xf32, #tpu.memory_space<vmem>>, vector<1x256xf32>
    %103 = vector.broadcast %102 : vector<1x256xf32> to vector<16x256xf32>
    %104 = arith.addf %101, %103 : vector<16x256xf32>
    %105 = math.tanh %104 : vector<16x256xf32>
    %106 = arith.addf %98, %105 : vector<16x256xf32>
    %c112 = arith.constant 112 : index
    %c0_95 = arith.constant 0 : index
    %107 = vector.load %arg21[%c112, %c0_95] : memref<128x256xf32, #tpu.memory_space<vmem>>, vector<16x256xf32>
    %c0_96 = arith.constant 0 : index
    %c0_97 = arith.constant 0 : index
    %108 = vector.load %arg11[%c0_96, %c0_97] : memref<256x256xf32, #tpu.memory_space<vmem>>, vector<256x256xf32>
    %cst_98 = arith.constant dense<0.000000e+00> : vector<16x256xf32>
    %109 = tpu.matmul %106, %108, %cst_98 {dimension_numbers = #tpu.dot_dimension_numbers<[1], [0], [0], [1], [0, 0, 1, 1], [], []>} : vector<16x256xf32>, vector<256x256xf32>, vector<16x256xf32> -> vector<16x256xf32>
    %110 = arith.addf %107, %109 : vector<16x256xf32>
    %111 = math.tanh %110 : vector<16x256xf32>
    %c112_99 = arith.constant 112 : index
    %c0_100 = arith.constant 0 : index
    %112 = vector.load %arg22[%c112_99, %c0_100] : memref<128x256xf32, #tpu.memory_space<vmem>>, vector<16x256xf32>
    tpu.vector_store %arg22[%c112_99, %c0_100], %111 {strides = array<i32>} : memref<128x256xf32, #tpu.memory_space<vmem>>, vector<16x256xf32>,
    %c0_101 = arith.constant 0 : index
    %c0_102 = arith.constant 0 : index
    %113 = vector.load %arg22[%c0_101, %c0_102] : memref<128x256xf32, #tpu.memory_space<vmem>>, vector<128x256xf32>
    %c0_103 = arith.constant 0 : index
    %c0_104 = arith.constant 0 : index
    %114 = vector.load %arg12[%c0_103, %c0_104] : memref<16x256xf32, #tpu.memory_space<vmem>>, vector<16x256xf32>
    %cst_105 = arith.constant dense<0.000000e+00> : vector<16x128xf32>
    %115 = tpu.matmul %114, %113, %cst_105 {dimension_numbers = #tpu.dot_dimension_numbers<[1], [1], [0], [0], [0, 0, 1, 0], [], []>} : vector<16x256xf32>, vector<128x256xf32>, vector<16x128xf32> -> vector<16x128xf32>
    %c0_106 = arith.constant 0 : index
    %c0_107 = arith.constant 0 : index
    %116 = vector.load %arg13[%c0_106, %c0_107] : memref<16x1xf32, #tpu.memory_space<vmem>>, vector<16x1xf32>
    %117 = vector.broadcast %116 : vector<16x1xf32> to vector<16x128xf32>
    %118 = arith.addf %115, %117 : vector<16x128xf32>
    %c0_108 = arith.constant 0 : index
    %c0_109 = arith.constant 0 : index
    %c0_110 = arith.constant 0 : index
    %119 = vector.load %arg18[%c0_108, %c0_109, %c0_110] : memref<1x16x128xf32, #tpu.memory_space<vmem>>, vector<1x16x128xf32>
    %120 = vector.shape_cast %119 : vector<1x16x128xf32> to vector<16x128xf32>
    %121 = vector.shape_cast %118 : vector<16x128xf32> to vector<1x16x128xf32>
    tpu.vector_store %arg18[%c0_108, %c0_109, %c0_110], %121 {strides = array<i32>} : memref<1x16x128xf32, #tpu.memory_space<vmem>>, vector<1x16x128xf32>,
    %c0_111 = arith.constant 0 : index
    %c0_112 = arith.constant 0 : index
    %122 = vector.load %arg14[%c0_111, %c0_112] : memref<16x256xf32, #tpu.memory_space<vmem>>, vector<16x256xf32>
    %cst_113 = arith.constant dense<0.000000e+00> : vector<16x128xf32>
    %123 = tpu.matmul %122, %113, %cst_113 {dimension_numbers = #tpu.dot_dimension_numbers<[1], [1], [0], [0], [0, 0, 1, 0], [], []>} : vector<16x256xf32>, vector<128x256xf32>, vector<16x128xf32> -> vector<16x128xf32>
    %c0_114 = arith.constant 0 : index
    %c0_115 = arith.constant 0 : index
    %124 = vector.load %arg15[%c0_114, %c0_115] : memref<16x1xf32, #tpu.memory_space<vmem>>, vector<16x1xf32>
    %125 = vector.broadcast %124 : vector<16x1xf32> to vector<16x128xf32>
    %126 = arith.addf %123, %125 : vector<16x128xf32>
    %c0_116 = arith.constant 0 : index
    %c0_117 = arith.constant 0 : index
    %c0_118 = arith.constant 0 : index
    %127 = vector.load %arg19[%c0_116, %c0_117, %c0_118] : memref<1x16x128xf32, #tpu.memory_space<vmem>>, vector<1x16x128xf32>
    %128 = vector.shape_cast %127 : vector<1x16x128xf32> to vector<16x128xf32>
    %129 = vector.shape_cast %126 : vector<16x128xf32> to vector<1x16x128xf32>
    tpu.vector_store %arg19[%c0_116, %c0_117, %c0_118], %129 {strides = array<i32>} : memref<1x16x128xf32, #tpu.memory_space<vmem>>, vector<1x16x128xf32>,
    %c0_119 = arith.constant 0 : index
    %c0_120 = arith.constant 0 : index
    %130 = vector.load %arg16[%c0_119, %c0_120] : memref<12x256xf32, #tpu.memory_space<vmem>>, vector<12x256xf32>
    %cst_121 = arith.constant dense<0.000000e+00> : vector<12x128xf32>
    %131 = tpu.matmul %130, %113, %cst_121 {dimension_numbers = #tpu.dot_dimension_numbers<[1], [1], [0], [0], [0, 0, 1, 0], [], []>} : vector<12x256xf32>, vector<128x256xf32>, vector<12x128xf32> -> vector<12x128xf32>
    %c0_122 = arith.constant 0 : index
    %c0_123 = arith.constant 0 : index
    %132 = vector.load %arg17[%c0_122, %c0_123] : memref<12x1xf32, #tpu.memory_space<vmem>>, vector<12x1xf32>
    %133 = vector.broadcast %132 : vector<12x1xf32> to vector<12x128xf32>
    %134 = arith.addf %131, %133 : vector<12x128xf32>
    %c0_124 = arith.constant 0 : index
    %c0_125 = arith.constant 0 : index
    %c0_126 = arith.constant 0 : index
    %135 = vector.load %arg20[%c0_124, %c0_125, %c0_126] : memref<1x12x128xf32, #tpu.memory_space<vmem>>, vector<1x12x128xf32>
    %136 = vector.shape_cast %135 : vector<1x12x128xf32> to vector<12x128xf32>
    %137 = vector.shape_cast %134 : vector<12x128xf32> to vector<1x12x128xf32>
    tpu.vector_store %arg20[%c0_124, %c0_125, %c0_126], %137 {strides = array<i32>} : memref<1x12x128xf32, #tpu.memory_space<vmem>>, vector<1x12x128xf32>,
    return
  }
  func.func @transform_0(%arg0: i32) -> (i32, i32, i32) {
    %c0_i32 = arith.constant 0 : i32
    %c0_i32_0 = arith.constant 0 : i32
    %c0_i32_1 = arith.constant 0 : i32
    return %arg0, %c0_i32, %c0_i32_0 : i32, i32, i32
  }
  func.func @transform_1(%arg0: i32) -> (i32, i32) {
    %c0_i32 = arith.constant 0 : i32
    %c0_i32_0 = arith.constant 0 : i32
    %c0_i32_1 = arith.constant 0 : i32
    return %c0_i32, %c0_i32_0 : i32, i32
  }
  func.func @transform_2(%arg0: i32) -> (i32, i32) {
    %c0_i32 = arith.constant 0 : i32
    %c0_i32_0 = arith.constant 0 : i32
    %c0_i32_1 = arith.constant 0 : i32
    return %c0_i32, %c0_i32_0 : i32, i32
  }
  func.func @transform_3(%arg0: i32) -> (i32, i32) {
    %c0_i32 = arith.constant 0 : i32
    %c0_i32_0 = arith.constant 0 : i32
    %c0_i32_1 = arith.constant 0 : i32
    return %c0_i32, %c0_i32_0 : i32, i32
  }
  func.func @transform_4(%arg0: i32) -> (i32, i32) {
    %c0_i32 = arith.constant 0 : i32
    %c0_i32_0 = arith.constant 0 : i32
    %c0_i32_1 = arith.constant 0 : i32
    return %c0_i32, %c0_i32_0 : i32, i32
  }
  func.func @transform_5(%arg0: i32) -> (i32, i32) {
    %c0_i32 = arith.constant 0 : i32
    %c0_i32_0 = arith.constant 0 : i32
    %c0_i32_1 = arith.constant 0 : i32
    return %c0_i32, %c0_i32_0 : i32, i32
  }
  func.func @transform_6(%arg0: i32) -> (i32, i32) {
    %c0_i32 = arith.constant 0 : i32
    %c0_i32_0 = arith.constant 0 : i32
    %c0_i32_1 = arith.constant 0 : i32
    return %c0_i32, %c0_i32_0 : i32, i32
  }
  func.func @transform_7(%arg0: i32) -> (i32, i32) {
    %c0_i32 = arith.constant 0 : i32
    %c0_i32_0 = arith.constant 0 : i32
    %c0_i32_1 = arith.constant 0 : i32
    return %c0_i32, %c0_i32_0 : i32, i32
  }
  func.func @transform_8(%arg0: i32) -> (i32, i32) {
    %c0_i32 = arith.constant 0 : i32
    %c0_i32_0 = arith.constant 0 : i32
    %c0_i32_1 = arith.constant 0 : i32
    return %c0_i32, %c0_i32_0 : i32, i32
  }
  func.func @transform_9(%arg0: i32) -> (i32, i32) {
    %c0_i32 = arith.constant 0 : i32
    %c0_i32_0 = arith.constant 0 : i32
    %c0_i32_1 = arith.constant 0 : i32
    return %c0_i32, %c0_i32_0 : i32, i32
  }
  func.func @transform_10(%arg0: i32) -> (i32, i32) {
    %c0_i32 = arith.constant 0 : i32
    %c0_i32_0 = arith.constant 0 : i32
    %c0_i32_1 = arith.constant 0 : i32
    return %c0_i32, %c0_i32_0 : i32, i32
  }
  func.func @transform_11(%arg0: i32) -> (i32, i32) {
    %c0_i32 = arith.constant 0 : i32
    %c0_i32_0 = arith.constant 0 : i32
    %c0_i32_1 = arith.constant 0 : i32
    return %c0_i32, %c0_i32_0 : i32, i32
  }
  func.func @transform_12(%arg0: i32) -> (i32, i32) {
    %c0_i32 = arith.constant 0 : i32
    %c0_i32_0 = arith.constant 0 : i32
    %c0_i32_1 = arith.constant 0 : i32
    return %c0_i32, %c0_i32_0 : i32, i32
  }
  func.func @transform_13(%arg0: i32) -> (i32, i32) {
    %c0_i32 = arith.constant 0 : i32
    %c0_i32_0 = arith.constant 0 : i32
    %c0_i32_1 = arith.constant 0 : i32
    return %c0_i32, %c0_i32_0 : i32, i32
  }
  func.func @transform_14(%arg0: i32) -> (i32, i32) {
    %c0_i32 = arith.constant 0 : i32
    %c0_i32_0 = arith.constant 0 : i32
    %c0_i32_1 = arith.constant 0 : i32
    return %c0_i32, %c0_i32_0 : i32, i32
  }
  func.func @transform_15(%arg0: i32) -> (i32, i32) {
    %c0_i32 = arith.constant 0 : i32
    %c0_i32_0 = arith.constant 0 : i32
    %c0_i32_1 = arith.constant 0 : i32
    return %c0_i32, %c0_i32_0 : i32, i32
  }
  func.func @transform_16(%arg0: i32) -> (i32, i32) {
    %c0_i32 = arith.constant 0 : i32
    %c0_i32_0 = arith.constant 0 : i32
    %c0_i32_1 = arith.constant 0 : i32
    return %c0_i32, %c0_i32_0 : i32, i32
  }
  func.func @transform_17(%arg0: i32) -> (i32, i32, i32) {
    %c0_i32 = arith.constant 0 : i32
    %c0_i32_0 = arith.constant 0 : i32
    %c0_i32_1 = arith.constant 0 : i32
    return %arg0, %c0_i32, %c0_i32_0 : i32, i32, i32
  }
  func.func @transform_18(%arg0: i32) -> (i32, i32, i32) {
    %c0_i32 = arith.constant 0 : i32
    %c0_i32_0 = arith.constant 0 : i32
    %c0_i32_1 = arith.constant 0 : i32
    return %arg0, %c0_i32, %c0_i32_0 : i32, i32, i32
  }
  func.func @transform_19(%arg0: i32) -> (i32, i32, i32) {
    %c0_i32 = arith.constant 0 : i32
    %c0_i32_0 = arith.constant 0 : i32
    %c0_i32_1 = arith.constant 0 : i32
    return %arg0, %c0_i32, %c0_i32_0 : i32, i32, i32
  }
}

</mosaic_0001>

<llo_original>
// kernel: mul.75
$region0: #{mul.75}
  #allocation0 [shape = 's32[1]{0}', space=sflag, size = 0x4, scoped, tag = 'scoped memory for mul.75']
  %s0 = inlined_call_operand.<no memory space> [shape: f32[], index: 0, kind: input, shape index: {}]
  %s1 = inlined_call_operand.vmem [shape: f32[16,1], index: 1, kind: output, shape index: {}]
  %v2 = vstv %s0
  %3 = vst [vmem:[%s1] sm:$0xff] %v2
  %s4 = scalar_lea.vmem %s1, 8
  %5 = vst [vmem:[%s4] sm:$0xff] %v2

// kernel: hybrid_ssm_forward.1
$region0: #{hybrid_ssm_forward.1}
  #allocation0 [shape = 'u32[]', space=smem, size = 0x4, offset = 0x4, fixed_abs, tag = 'smem constant byte address 0x4 - core index']
  #allocation1 [shape = 'u32[72,128]{1,0:T(1,128)}', space=vmem, size = 0x9000, scoped, tag = 'internal scratch']
  #allocation2 [shape = 'f32[128,256]{1,0:T(8,128)}', space=vmem, size = 0x20000, scoped, tag = 'scratch operand']
  #allocation3 [shape = 'f32[128,256]{1,0:T(8,128)}', space=vmem, size = 0x20000, scoped, tag = 'scratch operand']
  %s0 = inlined_call_operand.vmem [shape: f32[2,128,12], index: 0, kind: input, shape index: {}]
  %s1 = inlined_call_operand.vmem [shape: f32[12,12], index: 1, kind: input, shape index: {}]
  %s2 = inlined_call_operand.vmem [shape: f32[12,192], index: 2, kind: input, shape index: {}]
  %s3 = inlined_call_operand.vmem [shape: f32[1,192], index: 3, kind: input, shape index: {}]
  %s4 = inlined_call_operand.vmem [shape: f32[192,256], index: 4, kind: input, shape index: {}]
  %s5 = inlined_call_operand.vmem [shape: f32[256,256], index: 5, kind: input, shape index: {}]
  %s6 = inlined_call_operand.vmem [shape: f32[1,256], index: 6, kind: input, shape index: {}]
  %s7 = inlined_call_operand.vmem [shape: f32[256,256], index: 7, kind: input, shape index: {}]
  %s8 = inlined_call_operand.vmem [shape: f32[256,256], index: 8, kind: input, shape index: {}]
  %s9 = inlined_call_operand.vmem [shape: f32[1,256], index: 9, kind: input, shape index: {}]
  %s10 = inlined_call_operand.vmem [shape: f32[256,256], index: 10, kind: input, shape index: {}]
  %s11 = inlined_call_operand.vmem [shape: f32[16,256], index: 11, kind: input, shape index: {}]
  %s12 = inlined_call_operand.vmem [shape: f32[16,1], index: 12, kind: input, shape index: {}]
  %s13 = inlined_call_operand.vmem [shape: f32[16,256], index: 13, kind: input, shape index: {}]
  %s14 = inlined_call_operand.vmem [shape: f32[16,1], index: 14, kind: input, shape index: {}]
  %s15 = inlined_call_operand.vmem [shape: f32[12,256], index: 15, kind: input, shape index: {}]
  %s16 = inlined_call_operand.vmem [shape: f32[12,1], index: 16, kind: input, shape index: {}]
  %s17 = inlined_call_operand.vmem [shape: f32[2,16,128], index: 17, kind: output, shape index: {0}]
  %s18 = inlined_call_operand.vmem [shape: f32[2,16,128], index: 18, kind: output, shape index: {1}]
  %s19 = inlined_call_operand.vmem [shape: f32[2,12,128], index: 19, kind: output, shape index: {2}]
  %20 = xla_tuple %s17, %s18, %s19
  %s21 = sld [smem:[#allocation0]]
  $region117: #{hybrid_ssm_forward.1} parent=0
    _
  %s23 = ssub.s32 1, %s21
  %s24 = scalar_select 0, %s23, %s21
  loop: start=0, step=1, limit=4
  $region2: #{hybrid_ssm_forward.1} parent=0 // loop_pre_header
    _
  $region3: #{hybrid_ssm_forward.1} parent=0 // loop_header
    %s26 = sphi 0, %s30
    %p27 = scmp.ge.s32.totalorder %s26, 4
    %s36 = sphi 0, %s38
    %s39 = sphi 0, %s36
    %s40 = sphi 0, %s39
    %s56 = sphi 0, %s40
    %s60 = sphi 0, %s60
    %s62 = sphi 0, %s60
    %s63 = sphi 0, %s62
    %s77 = sphi 0, %s63
    %s81 = sphi 0, %s81
    %s83 = sphi 0, %s81
    %s84 = sphi 0, %s83
    %s98 = sphi 0, %s84
    %s102 = sphi 0, %s102
    %s104 = sphi 0, %s102
    %s105 = sphi 0, %s104
    %s119 = sphi 0, %s105
    %s123 = sphi 0, %s123
    %s125 = sphi 0, %s123
    %s126 = sphi 0, %s125
    %s140 = sphi 0, %s126
    %s144 = sphi 0, %s144
    %s146 = sphi 0, %s144
    %s147 = sphi 0, %s146
    %s161 = sphi 0, %s147
    %s165 = sphi 0, %s165
    %s167 = sphi 0, %s165
    %s168 = sphi 0, %s167
    %s182 = sphi 0, %s168
    %s186 = sphi 0, %s186
    %s188 = sphi 0, %s186
    %s189 = sphi 0, %s188
    %s203 = sphi 0, %s189
    %s207 = sphi 0, %s207
    %s209 = sphi 0, %s207
    %s210 = sphi 0, %s209
    %s224 = sphi 0, %s210
    %s228 = sphi 0, %s228
    %s230 = sphi 0, %s228
    %s231 = sphi 0, %s230
    %s245 = sphi 0, %s231
    %s249 = sphi 0, %s249
    %s251 = sphi 0, %s249
    %s252 = sphi 0, %s251
    %s266 = sphi 0, %s252
    %s270 = sphi 0, %s270
    %s272 = sphi 0, %s270
    %s273 = sphi 0, %s272
    %s287 = sphi 0, %s273
    %s291 = sphi 0, %s291
    %s293 = sphi 0, %s291
    %s294 = sphi 0, %s293
    %s308 = sphi 0, %s294
    %s312 = sphi 0, %s312
    %s314 = sphi 0, %s312
    %s315 = sphi 0, %s314
    %s329 = sphi 0, %s315
    %s333 = sphi 0, %s333
    %s335 = sphi 0, %s333
    %s336 = sphi 0, %s335
    %s350 = sphi 0, %s336
    %s354 = sphi 0, %s354
    %s356 = sphi 0, %s354
    %s357 = sphi 0, %s356
    %s371 = sphi 0, %s357
    %s375 = sphi 0, %s375
    %s377 = sphi 0, %s375
    %s378 = sphi 0, %s377
    %s392 = sphi 0, %s378
    %s398 = sphi 0, %s400
    %s401 = sphi 0, %s398
    %s402 = sphi 0, %s401
    %s418 = sphi 0, %s402
    %s424 = sphi 0, %s426
    %s427 = sphi 0, %s424
    %s428 = sphi 0, %s427
    %s444 = sphi 0, %s428
    %s450 = sphi 0, %s452
    %s453 = sphi 0, %s450
    %s454 = sphi 0, %s453
    %s470 = sphi 0, %s454
  $region4: #{hybrid_ssm_forward.1} parent=0 // loop_header_branch
    %29 = sbr.rel (%p27) target = $region8
  $region5: #{hybrid_ssm_forward.1} parent=0 // loop_body
    %s31 = ssub.s32 %s26, 1
    %s32 = ssub.s32 %s26, 2
    %s33 = sadd.s32 %s26, 1
    %s34 = ssub.s32 %s26, %s33
    %p35 = scmp.eq.s32.totalorder %s34, 0
    %s37 = sadd.s32 %s36, 1
    %s38 = scalar_select %p35, %s36, %s37
    %p41 = pneg %p35
    %p42 = scmp.eq.s32.totalorder %s26, 1
    %p43 = por %p41, %p42
    %p44 = scmp.ne.s32.totalorder %s36, %s39
    %p45 = scmp.eq.s32.totalorder %s26, 0
    %p46 = por %p44, %p45
    %p47 = scmp.ne.s32.totalorder %s36, %s39
    %p48 = scmp.eq.s32.totalorder %s31, 1
    %p49 = por %p47, %p48
    %p50 = scmp.ne.s32.totalorder %s39, %s40
    %p51 = scmp.eq.s32.totalorder %s31, 0
    %p52 = por %p50, %p51
    %p53 = scmp.ne.s32.totalorder %s39, %s40
    %p54 = scmp.eq.s32.totalorder %s32, 1
    %p55 = por %p53, %p54
    %p57 = scmp.ne.s32.totalorder %s40, %s56
    %p58 = scmp.eq.s32.totalorder %s32, 0
    %p59 = por %p57, %p58
    %s61 = sadd.s32 %s60, 1
    %p64 = scmp.eq.s32.totalorder %s26, 1
    %p65 = scmp.ne.s32.totalorder %s60, %s62
    %p66 = scmp.eq.s32.totalorder %s26, 0
    %p67 = por %p65, %p66
    %p68 = scmp.ne.s32.totalorder %s60, %s62
    %p69 = scmp.eq.s32.totalorder %s31, 1
    %p70 = por %p68, %p69
    %p71 = scmp.ne.s32.totalorder %s62, %s63
    %p72 = scmp.eq.s32.totalorder %s31, 0
    %p73 = por %p71, %p72
    %p74 = scmp.ne.s32.totalorder %s62, %s63
    %p75 = scmp.eq.s32.totalorder %s32, 1
    %p76 = por %p74, %p75
    %p78 = scmp.ne.s32.totalorder %s63, %s77
    %p79 = scmp.eq.s32.totalorder %s32, 0
    %p80 = por %p78, %p79
    %s82 = sadd.s32 %s81, 1
    %p85 = scmp.eq.s32.totalorder %s26, 1
    %p86 = scmp.ne.s32.totalorder %s81, %s83
    %p87 = scmp.eq.s32.totalorder %s26, 0
    %p88 = por %p86, %p87
    %p89 = scmp.ne.s32.totalorder %s81, %s83
    %p90 = scmp.eq.s32.totalorder %s31, 1
    %p91 = por %p89, %p90
    %p92 = scmp.ne.s32.totalorder %s83, %s84
    %p93 = scmp.eq.s32.totalorder %s31, 0
    %p94 = por %p92, %p93
    %p95 = scmp.ne.s32.totalorder %s83, %s84
    %p96 = scmp.eq.s32.totalorder %s32, 1
    %p97 = por %p95, %p96
    %p99 = scmp.ne.s32.totalorder %s84, %s98
    %p100 = scmp.eq.s32.totalorder %s32, 0
    %p101 = por %p99, %p100
    %s103 = sadd.s32 %s102, 1
    %p106 = scmp.eq.s32.totalorder %s26, 1
    %p107 = scmp.ne.s32.totalorder %s102, %s104
    %p108 = scmp.eq.s32.totalorder %s26, 0
    %p109 = por %p107, %p108
    %p110 = scmp.ne.s32.totalorder %s102, %s104
    %p111 = scmp.eq.s32.totalorder %s31, 1
    %p112 = por %p110, %p111
    %p113 = scmp.ne.s32.totalorder %s104, %s105
    %p114 = scmp.eq.s32.totalorder %s31, 0
    %p115 = por %p113, %p114
    %p116 = scmp.ne.s32.totalorder %s104, %s105
    %p117 = scmp.eq.s32.totalorder %s32, 1
    %p118 = por %p116, %p117
    %p120 = scmp.ne.s32.totalorder %s105, %s119
    %p121 = scmp.eq.s32.totalorder %s32, 0
    %p122 = por %p120, %p121
    %s124 = sadd.s32 %s123, 1
    %p127 = scmp.eq.s32.totalorder %s26, 1
    %p128 = scmp.ne.s32.totalorder %s123, %s125
    %p129 = scmp.eq.s32.totalorder %s26, 0
    %p130 = por %p128, %p129
    %p131 = scmp.ne.s32.totalorder %s123, %s125
    %p132 = scmp.eq.s32.totalorder %s31, 1
    %p133 = por %p131, %p132
    %p134 = scmp.ne.s32.totalorder %s125, %s126
    %p135 = scmp.eq.s32.totalorder %s31, 0
    %p136 = por %p134, %p135
    %p137 = scmp.ne.s32.totalorder %s125, %s126
    %p138 = scmp.eq.s32.totalorder %s32, 1
    %p139 = por %p137, %p138
    %p141 = scmp.ne.s32.totalorder %s126, %s140
    %p142 = scmp.eq.s32.totalorder %s32, 0
    %p143 = por %p141, %p142
    %s145 = sadd.s32 %s144, 1
    %p148 = scmp.eq.s32.totalorder %s26, 1
    %p149 = scmp.ne.s32.totalorder %s144, %s146
    %p150 = scmp.eq.s32.totalorder %s26, 0
    %p151 = por %p149, %p150
    %p152 = scmp.ne.s32.totalorder %s144, %s146
    %p153 = scmp.eq.s32.totalorder %s31, 1
    %p154 = por %p152, %p153
    %p155 = scmp.ne.s32.totalorder %s146, %s147
    %p156 = scmp.eq.s32.totalorder %s31, 0
    %p157 = por %p155, %p156
    %p158 = scmp.ne.s32.totalorder %s146, %s147
    %p159 = scmp.eq.s32.totalorder %s32, 1
    %p160 = por %p158, %p159
    %p162 = scmp.ne.s32.totalorder %s147, %s161
    %p163 = scmp.eq.s32.totalorder %s32, 0
    %p164 = por %p162, %p163
    %s166 = sadd.s32 %s165, 1
    %p169 = scmp.eq.s32.totalorder %s26, 1
    %p170 = scmp.ne.s32.totalorder %s165, %s167
    %p171 = scmp.eq.s32.totalorder %s26, 0
    %p172 = por %p170, %p171
    %p173 = scmp.ne.s32.totalorder %s165, %s167
    %p174 = scmp.eq.s32.totalorder %s31, 1
    %p175 = por %p173, %p174
    %p176 = scmp.ne.s32.totalorder %s167, %s168
    %p177 = scmp.eq.s32.totalorder %s31, 0
    %p178 = por %p176, %p177
    %p179 = scmp.ne.s32.totalorder %s167, %s168
    %p180 = scmp.eq.s32.totalorder %s32, 1
    %p181 = por %p179, %p180
    %p183 = scmp.ne.s32.totalorder %s168, %s182
    %p184 = scmp.eq.s32.totalorder %s32, 0
    %p185 = por %p183, %p184
    %s187 = sadd.s32 %s186, 1
    %p190 = scmp.eq.s32.totalorder %s26, 1
    %p191 = scmp.ne.s32.totalorder %s186, %s188
    %p192 = scmp.eq.s32.totalorder %s26, 0
    %p193 = por %p191, %p192
    %p194 = scmp.ne.s32.totalorder %s186, %s188
    %p195 = scmp.eq.s32.totalorder %s31, 1
    %p196 = por %p194, %p195
    %p197 = scmp.ne.s32.totalorder %s188, %s189
    %p198 = scmp.eq.s32.totalorder %s31, 0
    %p199 = por %p197, %p198
    %p200 = scmp.ne.s32.totalorder %s188, %s189
    %p201 = scmp.eq.s32.totalorder %s32, 1
    %p202 = por %p200, %p201
    %p204 = scmp.ne.s32.totalorder %s189, %s203
    %p205 = scmp.eq.s32.totalorder %s32, 0
    %p206 = por %p204, %p205
    %s208 = sadd.s32 %s207, 1
    %p211 = scmp.eq.s32.totalorder %s26, 1
    %p212 = scmp.ne.s32.totalorder %s207, %s209
    %p213 = scmp.eq.s32.totalorder %s26, 0
    %p214 = por %p212, %p213
    %p215 = scmp.ne.s32.totalorder %s207, %s209
    %p216 = scmp.eq.s32.totalorder %s31, 1
    %p217 = por %p215, %p216
    %p218 = scmp.ne.s32.totalorder %s209, %s210
    %p219 = scmp.eq.s32.totalorder %s31, 0
    %p220 = por %p218, %p219
    %p221 = scmp.ne.s32.totalorder %s209, %s210
    %p222 = scmp.eq.s32.totalorder %s32, 1
    %p223 = por %p221, %p222
    %p225 = scmp.ne.s32.totalorder %s210, %s224
    %p226 = scmp.eq.s32.totalorder %s32, 0
    %p227 = por %p225, %p226
    %s229 = sadd.s32 %s228, 1
    %p232 = scmp.eq.s32.totalorder %s26, 1
    %p233 = scmp.ne.s32.totalorder %s228, %s230
    %p234 = scmp.eq.s32.totalorder %s26, 0
    %p235 = por %p233, %p234
    %p236 = scmp.ne.s32.totalorder %s228, %s230
    %p237 = scmp.eq.s32.totalorder %s31, 1
    %p238 = por %p236, %p237
    %p239 = scmp.ne.s32.totalorder %s230, %s231
    %p240 = scmp.eq.s32.totalorder %s31, 0
    %p241 = por %p239, %p240
    %p242 = scmp.ne.s32.totalorder %s230, %s231
    %p243 = scmp.eq.s32.totalorder %s32, 1
    %p244 = por %p242, %p243
    %p246 = scmp.ne.s32.totalorder %s231, %s245
    %p247 = scmp.eq.s32.totalorder %s32, 0
    %p248 = por %p246, %p247
    %s250 = sadd.s32 %s249, 1
    %p253 = scmp.eq.s32.totalorder %s26, 1
    %p254 = scmp.ne.s32.totalorder %s249, %s251
    %p255 = scmp.eq.s32.totalorder %s26, 0
    %p256 = por %p254, %p255
    %p257 = scmp.ne.s32.totalorder %s249, %s251
    %p258 = scmp.eq.s32.totalorder %s31, 1
    %p259 = por %p257, %p258
    %p260 = scmp.ne.s32.totalorder %s251, %s252
    %p261 = scmp.eq.s32.totalorder %s31, 0
    %p262 = por %p260, %p261
    %p263 = scmp.ne.s32.totalorder %s251, %s252
    %p264 = scmp.eq.s32.totalorder %s32, 1
    %p265 = por %p263, %p264
    %p267 = scmp.ne.s32.totalorder %s252, %s266
    %p268 = scmp.eq.s32.totalorder %s32, 0
    %p269 = por %p267, %p268
    %s271 = sadd.s32 %s270, 1
    %p274 = scmp.eq.s32.totalorder %s26, 1
    %p275 = scmp.ne.s32.totalorder %s270, %s272
    %p276 = scmp.eq.s32.totalorder %s26, 0
    %p277 = por %p275, %p276
    %p278 = scmp.ne.s32.totalorder %s270, %s272
    %p279 = scmp.eq.s32.totalorder %s31, 1
    %p280 = por %p278, %p279
    %p281 = scmp.ne.s32.totalorder %s272, %s273
    %p282 = scmp.eq.s32.totalorder %s31, 0
    %p283 = por %p281, %p282
    %p284 = scmp.ne.s32.totalorder %s272, %s273
    %p285 = scmp.eq.s32.totalorder %s32, 1
    %p286 = por %p284, %p285
    %p288 = scmp.ne.s32.totalorder %s273, %s287
    %p289 = scmp.eq.s32.totalorder %s32, 0
    %p290 = por %p288, %p289
    %s292 = sadd.s32 %s291, 1
    %p295 = scmp.eq.s32.totalorder %s26, 1
    %p296 = scmp.ne.s32.totalorder %s291, %s293
    %p297 = scmp.eq.s32.totalorder %s26, 0
    %p298 = por %p296, %p297
    %p299 = scmp.ne.s32.totalorder %s291, %s293
    %p300 = scmp.eq.s32.totalorder %s31, 1
    %p301 = por %p299, %p300
    %p302 = scmp.ne.s32.totalorder %s293, %s294
    %p303 = scmp.eq.s32.totalorder %s31, 0
    %p304 = por %p302, %p303
    %p305 = scmp.ne.s32.totalorder %s293, %s294
    %p306 = scmp.eq.s32.totalorder %s32, 1
    %p307 = por %p305, %p306
    %p309 = scmp.ne.s32.totalorder %s294, %s308
    %p310 = scmp.eq.s32.totalorder %s32, 0
    %p311 = por %p309, %p310
    %s313 = sadd.s32 %s312, 1
    %p316 = scmp.eq.s32.totalorder %s26, 1
    %p317 = scmp.ne.s32.totalorder %s312, %s314
    %p318 = scmp.eq.s32.totalorder %s26, 0
    %p319 = por %p317, %p318
    %p320 = scmp.ne.s32.totalorder %s312, %s314
    %p321 = scmp.eq.s32.totalorder %s31, 1
    %p322 = por %p320, %p321
    %p323 = scmp.ne.s32.totalorder %s314, %s315
    %p324 = scmp.eq.s32.totalorder %s31, 0
    %p325 = por %p323, %p324
    %p326 = scmp.ne.s32.totalorder %s314, %s315
    %p327 = scmp.eq.s32.totalorder %s32, 1
    %p328 = por %p326, %p327
    %p330 = scmp.ne.s32.totalorder %s315, %s329
    %p331 = scmp.eq.s32.totalorder %s32, 0
    %p332 = por %p330, %p331
    %s334 = sadd.s32 %s333, 1
    %p337 = scmp.eq.s32.totalorder %s26, 1
    %p338 = scmp.ne.s32.totalorder %s333, %s335
    %p339 = scmp.eq.s32.totalorder %s26, 0
    %p340 = por %p338, %p339
    %p341 = scmp.ne.s32.totalorder %s333, %s335
    %p342 = scmp.eq.s32.totalorder %s31, 1
    %p343 = por %p341, %p342
    %p344 = scmp.ne.s32.totalorder %s335, %s336
    %p345 = scmp.eq.s32.totalorder %s31, 0
    %p346 = por %p344, %p345
    %p347 = scmp.ne.s32.totalorder %s335, %s336
    %p348 = scmp.eq.s32.totalorder %s32, 1
    %p349 = por %p347, %p348
    %p351 = scmp.ne.s32.totalorder %s336, %s350
    %p352 = scmp.eq.s32.totalorder %s32, 0
    %p353 = por %p351, %p352
    %s355 = sadd.s32 %s354, 1
    %p358 = scmp.eq.s32.totalorder %s26, 1
    %p359 = scmp.ne.s32.totalorder %s354, %s356
    %p360 = scmp.eq.s32.totalorder %s26, 0
    %p361 = por %p359, %p360
    %p362 = scmp.ne.s32.totalorder %s354, %s356
    %p363 = scmp.eq.s32.totalorder %s31, 1
    %p364 = por %p362, %p363
    %p365 = scmp.ne.s32.totalorder %s356, %s357
    %p366 = scmp.eq.s32.totalorder %s31, 0
    %p367 = por %p365, %p366
    %p368 = scmp.ne.s32.totalorder %s356, %s357
    %p369 = scmp.eq.s32.totalorder %s32, 1
    %p370 = por %p368, %p369
    %p372 = scmp.ne.s32.totalorder %s357, %s371
    %p373 = scmp.eq.s32.totalorder %s32, 0
    %p374 = por %p372, %p373
    %s376 = sadd.s32 %s375, 1
    %p379 = scmp.eq.s32.totalorder %s26, 1
    %p380 = scmp.ne.s32.totalorder %s375, %s377
    %p381 = scmp.eq.s32.totalorder %s26, 0
    %p382 = por %p380, %p381
    %p383 = scmp.ne.s32.totalorder %s375, %s377
    %p384 = scmp.eq.s32.totalorder %s31, 1
    %p385 = por %p383, %p384
    %p386 = scmp.ne.s32.totalorder %s377, %s378
    %p387 = scmp.eq.s32.totalorder %s31, 0
    %p388 = por %p386, %p387
    %p389 = scmp.ne.s32.totalorder %s377, %s378
    %p390 = scmp.eq.s32.totalorder %s32, 1
    %p391 = por %p389, %p390
    %p393 = scmp.ne.s32.totalorder %s378, %s392
    %p394 = scmp.eq.s32.totalorder %s32, 0
    %p395 = por %p393, %p394
    %s396 = ssub.s32 %s26, %s33
    %p397 = scmp.eq.s32.totalorder %s396, 0
    %s399 = sadd.s32 %s398, 1
    %s400 = scalar_select %p397, %s398, %s399
    %p403 = pneg %p397
    %p404 = scmp.eq.s32.totalorder %s26, 1
    %p405 = por %p403, %p404
    %p406 = scmp.ne.s32.totalorder %s398, %s401
    %p407 = scmp.eq.s32.totalorder %s26, 0
    %p408 = por %p406, %p407
    %p409 = scmp.ne.s32.totalorder %s398, %s401
    %p410 = scmp.eq.s32.totalorder %s31, 1
    %p411 = por %p409, %p410
    %p412 = scmp.ne.s32.totalorder %s401, %s402
    %p413 = scmp.eq.s32.totalorder %s31, 0
    %p414 = por %p412, %p413
    %p415 = scmp.ne.s32.totalorder %s401, %s402
    %p416 = scmp.eq.s32.totalorder %s32, 1
    %p417 = por %p415, %p416
    %p419 = scmp.ne.s32.totalorder %s402, %s418
    %p420 = scmp.eq.s32.totalorder %s32, 0
    %p421 = por %p419, %p420
    %s422 = ssub.s32 %s26, %s33
    %p423 = scmp.eq.s32.totalorder %s422, 0
    %s425 = sadd.s32 %s424, 1
    %s426 = scalar_select %p423, %s424, %s425
    %p429 = pneg %p423
    %p430 = scmp.eq.s32.totalorder %s26, 1
    %p431 = por %p429, %p430
    %p432 = scmp.ne.s32.totalorder %s424, %s427
    %p433 = scmp.eq.s32.totalorder %s26, 0
    %p434 = por %p432, %p433
    %p435 = scmp.ne.s32.totalorder %s424, %s427
    %p436 = scmp.eq.s32.totalorder %s31, 1
    %p437 = por %p435, %p436
    %p438 = scmp.ne.s32.totalorder %s427, %s428
    %p439 = scmp.eq.s32.totalorder %s31, 0
    %p440 = por %p438, %p439
    %p441 = scmp.ne.s32.totalorder %s427, %s428
    %p442 = scmp.eq.s32.totalorder %s32, 1
    %p443 = por %p441, %p442
    %p445 = scmp.ne.s32.totalorder %s428, %s444
    %p446 = scmp.eq.s32.totalorder %s32, 0
    %p447 = por %p445, %p446
    %s448 = ssub.s32 %s26, %s33
    %p449 = scmp.eq.s32.totalorder %s448, 0
    %s451 = sadd.s32 %s450, 1
    %s452 = scalar_select %p449, %s450, %s451
    %p455 = pneg %p449
    %p456 = scmp.eq.s32.totalorder %s26, 1
    %p457 = por %p455, %p456
    %p458 = scmp.ne.s32.totalorder %s450, %s453
    %p459 = scmp.eq.s32.totalorder %s26, 0
    %p460 = por %p458, %p459
    %p461 = scmp.ne.s32.totalorder %s450, %s453
    %p462 = scmp.eq.s32.totalorder %s31, 1
    %p463 = por %p461, %p462
    %p464 = scmp.ne.s32.totalorder %s453, %s454
    %p465 = scmp.eq.s32.totalorder %s31, 0
    %p466 = por %p464, %p465
    %p467 = scmp.ne.s32.totalorder %s453, %s454
    %p468 = scmp.eq.s32.totalorder %s32, 1
    %p469 = por %p467, %p468
    %p471 = scmp.ne.s32.totalorder %s454, %s470
    %p472 = scmp.eq.s32.totalorder %s32, 0
    %p473 = por %p471, %p472
    %p474 = scmp.le.s32.totalorder 1, %s26
    %p475 = scmp.lt.s32.totalorder %s26, 3
    %p476 = pnand %p474, %p475
    %p477 = pneg %p476
    // Predicated region
    $region9: #{hybrid_ssm_forward.1} parent=5 // pred_check
      _
    $region10: #{hybrid_ssm_forward.1} parent=5 // pred_check_branch
      %479 = sbr.rel (%p476) target = $region12
    $region11: #{hybrid_ssm_forward.1} parent=5 // pred_region
      %s480 = ssub.s32 %s26, 1
      // Predicated region
      $region13: #{hybrid_ssm_forward.1} parent=11 // pred_check
        %p481 = pneg %p73
      $region14: #{hybrid_ssm_forward.1} parent=11 // pred_check_branch
        %483 = sbr.rel (%p481) target = $region16
      $region15: #{hybrid_ssm_forward.1} parent=11 // pred_region
        _
      $region16: #{hybrid_ssm_forward.1} parent=11 // pred_fallthru
        _
      // Predicated region
      $region17: #{hybrid_ssm_forward.1} parent=11 // pred_check
        %p484 = pneg %p94
      $region18: #{hybrid_ssm_forward.1} parent=11 // pred_check_branch
        %486 = sbr.rel (%p484) target = $region20
      $region19: #{hybrid_ssm_forward.1} parent=11 // pred_region
        _
      $region20: #{hybrid_ssm_forward.1} parent=11 // pred_fallthru
        _
      // Predicated region
      $region21: #{hybrid_ssm_forward.1} parent=11 // pred_check
        %p487 = pneg %p115
      $region22: #{hybrid_ssm_forward.1} parent=11 // pred_check_branch
        %489 = sbr.rel (%p487) target = $region24
      $region23: #{hybrid_ssm_forward.1} parent=11 // pred_region
        _
      $region24: #{hybrid_ssm_forward.1} parent=11 // pred_fallthru
        _
      // Predicated region
      $region25: #{hybrid_ssm_forward.1} parent=11 // pred_check
        %p490 = pneg %p136
      $region26: #{hybrid_ssm_forward.1} parent=11 // pred_check_branch
        %492 = sbr.rel (%p490) target = $region28
      $region27: #{hybrid_ssm_forward.1} parent=11 // pred_region
        _
      $region28: #{hybrid_ssm_forward.1} parent=11 // pred_fallthru
        _
      // Predicated region
      $region29: #{hybrid_ssm_forward.1} parent=11 // pred_check
        %p493 = pneg %p157
      $region30: #{hybrid_ssm_forward.1} parent=11 // pred_check_branch
        %495 = sbr.rel (%p493) target = $region32
      $region31: #{hybrid_ssm_forward.1} parent=11 // pred_region
        _
      $region32: #{hybrid_ssm_forward.1} parent=11 // pred_fallthru
        _
      // Predicated region
      $region33: #{hybrid_ssm_forward.1} parent=11 // pred_check
        %p496 = pneg %p178
      $region34: #{hybrid_ssm_forward.1} parent=11 // pred_check_branch
        %498 = sbr.rel (%p496) target = $region36
      $region35: #{hybrid_ssm_forward.1} parent=11 // pred_region
        _
      $region36: #{hybrid_ssm_forward.1} parent=11 // pred_fallthru
        _
      // Predicated region
      $region37: #{hybrid_ssm_forward.1} parent=11 // pred_check
        %p499 = pneg %p199
      $region38: #{hybrid_ssm_forward.1} parent=11 // pred_check_branch
        %501 = sbr.rel (%p499) target = $region40
      $region39: #{hybrid_ssm_forward.1} parent=11 // pred_region
        _
      $region40: #{hybrid_ssm_forward.1} parent=11 // pred_fallthru
        _
      // Predicated region
      $region41: #{hybrid_ssm_forward.1} parent=11 // pred_check
        %p502 = pneg %p220
      $region42: #{hybrid_ssm_forward.1} parent=11 // pred_check_branch
        %504 = sbr.rel (%p502) target = $region44
      $region43: #{hybrid_ssm_forward.1} parent=11 // pred_region
        _
      $region44: #{hybrid_ssm_forward.1} parent=11 // pred_fallthru
        _
      // Predicated region
      $region45: #{hybrid_ssm_forward.1} parent=11 // pred_check
        %p505 = pneg %p241
      $region46: #{hybrid_ssm_forward.1} parent=11 // pred_check_branch
        %507 = sbr.rel (%p505) target = $region48
      $region47: #{hybrid_ssm_forward.1} parent=11 // pred_region
        _
      $region48: #{hybrid_ssm_forward.1} parent=11 // pred_fallthru
        _
      // Predicated region
      $region49: #{hybrid_ssm_forward.1} parent=11 // pred_check
        %p508 = pneg %p262
      $region50: #{hybrid_ssm_forward.1} parent=11 // pred_check_branch
        %510 = sbr.rel (%p508) target = $region52
      $region51: #{hybrid_ssm_forward.1} parent=11 // pred_region
        _
      $region52: #{hybrid_ssm_forward.1} parent=11 // pred_fallthru
        _
      // Predicated region
      $region53: #{hybrid_ssm_forward.1} parent=11 // pred_check
        %p511 = pneg %p283
      $region54: #{hybrid_ssm_forward.1} parent=11 // pred_check_branch
        %513 = sbr.rel (%p511) target = $region56
      $region55: #{hybrid_ssm_forward.1} parent=11 // pred_region
        _
      $region56: #{hybrid_ssm_forward.1} parent=11 // pred_fallthru
        _
      // Predicated region
      $region57: #{hybrid_ssm_forward.1} parent=11 // pred_check
        %p514 = pneg %p304
      $region58: #{hybrid_ssm_forward.1} parent=11 // pred_check_branch
        %516 = sbr.rel (%p514) target = $region60
      $region59: #{hybrid_ssm_forward.1} parent=11 // pred_region
        _
      $region60: #{hybrid_ssm_forward.1} parent=11 // pred_fallthru
        _
      // Predicated region
      $region61: #{hybrid_ssm_forward.1} parent=11 // pred_check
        %p517 = pneg %p325
      $region62: #{hybrid_ssm_forward.1} parent=11 // pred_check_branch
        %519 = sbr.rel (%p517) target = $region64
      $region63: #{hybrid_ssm_forward.1} parent=11 // pred_region
        _
      $region64: #{hybrid_ssm_forward.1} parent=11 // pred_fallthru
        _
      // Predicated region
      $region65: #{hybrid_ssm_forward.1} parent=11 // pred_check
        %p520 = pneg %p346
      $region66: #{hybrid_ssm_forward.1} parent=11 // pred_check_branch
        %522 = sbr.rel (%p520) target = $region68
      $region67: #{hybrid_ssm_forward.1} parent=11 // pred_region
        _
      $region68: #{hybrid_ssm_forward.1} parent=11 // pred_fallthru
        _
      // Predicated region
      $region69: #{hybrid_ssm_forward.1} parent=11 // pred_check
        %p523 = pneg %p367
      $region70: #{hybrid_ssm_forward.1} parent=11 // pred_check_branch
        %525 = sbr.rel (%p523) target = $region72
      $region71: #{hybrid_ssm_forward.1} parent=11 // pred_region
        _
      $region72: #{hybrid_ssm_forward.1} parent=11 // pred_fallthru
        _
      // Predicated region
      $region73: #{hybrid_ssm_forward.1} parent=11 // pred_check
        %p526 = pneg %p388
      $region74: #{hybrid_ssm_forward.1} parent=11 // pred_check_branch
        %528 = sbr.rel (%p526) target = $region76
      $region75: #{hybrid_ssm_forward.1} parent=11 // pred_region
        _
      $region76: #{hybrid_ssm_forward.1} parent=11 // pred_fallthru
        _
    $region12: #{hybrid_ssm_forward.1} parent=5 // pred_fallthru
      _
    %p529 = scmp.lt.s32.totalorder %s26, 2
    // Predicated region
    $region77: #{hybrid_ssm_forward.1} parent=5 // pred_check
      %p530 = pneg %p529
    $region78: #{hybrid_ssm_forward.1} parent=5 // pred_check_branch
      %532 = sbr.rel (%p530) target = $region80
    $region79: #{hybrid_ssm_forward.1} parent=5 // pred_region
      // Predicated region
      $region81: #{hybrid_ssm_forward.1} parent=79 // pred_check
        %p533 = pneg %p46
      $region82: #{hybrid_ssm_forward.1} parent=79 // pred_check_branch
        %535 = sbr.rel (%p533) target = $region84
      $region83: #{hybrid_ssm_forward.1} parent=79 // pred_region
        %p536 = scmp.lt.s32.totalorder %s26, 1
        %s537 = scalar_select %p536, %s26, 1
        %s538 = smul.addr %s537, 16
        %s539 = smul.addr %s538, 8
        %s540 = scalar_lea.vmem %s0, %s539
      $region84: #{hybrid_ssm_forward.1} parent=79 // pred_fallthru
        _
    $region80: #{hybrid_ssm_forward.1} parent=5 // pred_fallthru
      _
    %p541 = scmp.le.s32.totalorder 1, %s26
    %p542 = scmp.lt.s32.totalorder %s26, 3
    %p543 = pnand %p541, %p542
    %p544 = pneg %p543
    // Predicated region
    $region85: #{hybrid_ssm_forward.1} parent=5 // pred_check
      _
    $region86: #{hybrid_ssm_forward.1} parent=5 // pred_check_branch
      %546 = sbr.rel (%p543) target = $region88
    $region87: #{hybrid_ssm_forward.1} parent=5 // pred_region
      %s547 = ssub.s32 %s26, 1
      %p548 = scmp.lt.s32.totalorder %s31, 1
      %s549 = scalar_select %p548, %s31, 1
      %s550 = smul.addr %s549, 16
      %s551 = smul.addr %s550, 8
      %s552 = scalar_lea.vmem %s0, %s551
      %p553 = pneg %p52
      %p554 = pneg %p49
      %p555 = pneg %p73
      %p556 = pneg %p70
      %p557 = pneg %p94
      %p558 = pneg %p91
      %p559 = pneg %p115
      %p560 = pneg %p112
      %p561 = pneg %p136
      %p562 = pneg %p133
      %p563 = pneg %p157
      %p564 = pneg %p154
      %p565 = pneg %p178
      %p566 = pneg %p175
      %p567 = pneg %p199
      %p568 = pneg %p196
      %p569 = pneg %p220
      %p570 = pneg %p217
      %p571 = pneg %p241
      %p572 = pneg %p238
      %p573 = pneg %p262
      %p574 = pneg %p259
      %p575 = pneg %p283
      %p576 = pneg %p280
      %p577 = pneg %p304
      %p578 = pneg %p301
      %p579 = pneg %p325
      %p580 = pneg %p322
      %p581 = pneg %p346
      %p582 = pneg %p343
      %p583 = pneg %p367
      %p584 = pneg %p364
      %p585 = pneg %p388
      %p586 = pneg %p385
      %p587 = pneg %p414
      %p588 = pneg %p411
      %p589 = scmp.lt.s32.totalorder %s31, 1
      %s590 = scalar_select %p589, %s31, 1
      %s591 = smul.addr %s590, 2
      %s592 = smul.addr %s591, 8
      %s593 = scalar_lea.vmem %s17, %s592
      %p594 = pneg %p440
      %p595 = pneg %p437
      %p596 = scmp.lt.s32.totalorder %s31, 1
      %s597 = scalar_select %p596, %s31, 1
      %s598 = smul.addr %s597, 2
      %s599 = smul.addr %s598, 8
      %s600 = scalar_lea.vmem %s18, %s599
      %p601 = pneg %p466
      %p602 = pneg %p463
      %p603 = scmp.lt.s32.totalorder %s31, 1
      %s604 = scalar_select %p603, %s31, 1
      %s605 = smul.addr %s604, 2
      %s606 = smul.addr %s605, 8
      %s607 = scalar_lea.vmem %s19, %s606
      %p608 = scmp.lt.s32.totalorder %s31, 1
      %s609 = scalar_select %p608, %s31, 1
      %s610 = smul.addr %s609, 16
      %s611 = smul.addr %s610, 8
      %s612 = scalar_lea.vmem %s0, %s611
      %p613 = scmp.lt.s32.totalorder %s31, 1
      %s614 = scalar_select %p613, %s31, 1
      %s615 = smul.addr %s614, 2
      %s616 = smul.addr %s615, 8
      %s617 = scalar_lea.vmem %s17, %s616
      %p618 = scmp.lt.s32.totalorder %s31, 1
      %s619 = scalar_select %p618, %s31, 1
      %s620 = smul.addr %s619, 2
      %s621 = smul.addr %s620, 8
      %s622 = scalar_lea.vmem %s18, %s621
      %p623 = scmp.lt.s32.totalorder %s31, 1
      %s624 = scalar_select %p623, %s31, 1
      %s625 = smul.addr %s624, 2
      %s626 = smul.addr %s625, 8
      %s627 = scalar_lea.vmem %s19, %s626
      %v628 = vld [vmem:[%s612] sm:$0xff]
      %v629 = vld [vmem:[%s612 + $0x8] sm:$0xff]
      %v630 = vld [vmem:[%s612 + $0x10] sm:$0xff]
      %v631 = vld [vmem:[%s612 + $0x18] sm:$0xff]
      %v632 = vld [vmem:[%s612 + $0x20] sm:$0xff]
      %v633 = vld [vmem:[%s612 + $0x28] sm:$0xff]
      %v634 = vld [vmem:[%s612 + $0x30] sm:$0xff]
      %v635 = vld [vmem:[%s612 + $0x38] sm:$0xff]
      %v636 = vld [vmem:[%s612 + $0x40] sm:$0xff]
      %v637 = vld [vmem:[%s612 + $0x48] sm:$0xff]
      %v638 = vld [vmem:[%s612 + $0x50] sm:$0xff]
      %v639 = vld [vmem:[%s612 + $0x58] sm:$0xff]
      %v640 = vld [vmem:[%s612 + $0x60] sm:$0xff]
      %v641 = vld [vmem:[%s612 + $0x68] sm:$0xff]
      %v642 = vld [vmem:[%s612 + $0x70] sm:$0xff]
      %v643 = vld [vmem:[%s612 + $0x78] sm:$0xff]
      %v644 = vld [vmem:[%s1] sm:$0xff]
      %v645 = vld [vmem:[%s1 + $0x8] sm:$0xf]
      %vm646 = vcmask 97280
      %v648 = vsel %vm646, %v628, 0
      %v651 = vsel %vm646, %v629, 0
      %v654 = vsel %vm646, %v630, 0
      %v657 = vsel %vm646, %v631, 0
      %v660 = vsel %vm646, %v632, 0
      %v663 = vsel %vm646, %v633, 0
      %v666 = vsel %vm646, %v634, 0
      %v669 = vsel %vm646, %v635, 0
      %v672 = vsel %vm646, %v636, 0
      %v675 = vsel %vm646, %v637, 0
      %v678 = vsel %vm646, %v638, 0
      %v681 = vsel %vm646, %v639, 0
      %v684 = vsel %vm646, %v640, 0
      %v687 = vsel %vm646, %v641, 0
      %v690 = vsel %vm646, %v642, 0
      %v693 = vsel %vm646, %v643, 0
      %vm695 = vcmask 1043456
      %v697 = vsel %vm695, %v645, 0
      %699 = vmatpush.msra.mxu0 0.0
      %700 = vmatpush.msra.mxu0 0.0
      %701 = vmatpush.msra.mxu0 0.0
      %702 = vmatpush.msra.mxu0 0.0
      %703 = vmatpush.msra.mxu0 0.0
      %704 = vmatpush.msra.mxu0 0.0
      %705 = vmatpush.msra.mxu0 0.0
      %706 = vmatpush.msra.mxu0 0.0
      %707 = vmatpush.msra.mxu0 0.0
      %708 = vmatpush.msra.mxu0 0.0
      %709 = vmatpush.msra.mxu0 0.0
      %710 = vmatpush.msra.mxu0 0.0
      %711 = vmatpush.msra.mxu0 0.0
      %712 = vmatpush.msra.mxu0 0.0
      %713 = vmatpush.msra.mxu0 %v697
      %714 = vmatpush.msra.mxu0 %v644
      %715 = vmatmul.f32.gmra.mxu0 %v648
      %v716 = vpop.f32.mrf.mxu0
      %v717 = vadd.f32 0.0, %v716
      %718 = vmatmul.f32.gmra.mxu0 %v651
      %v719 = vpop.f32.mrf.mxu0
      %v720 = vadd.f32 0.0, %v719
      %721 = vmatmul.f32.gmra.mxu0 %v654
      %v722 = vpop.f32.mrf.mxu0
      %v723 = vadd.f32 0.0, %v722
      %724 = vmatmul.f32.gmra.mxu0 %v657
      %v725 = vpop.f32.mrf.mxu0
      %v726 = vadd.f32 0.0, %v725
      %727 = vmatmul.f32.gmra.mxu0 %v660
      %v728 = vpop.f32.mrf.mxu0
      %v729 = vadd.f32 0.0, %v728
      %730 = vmatmul.f32.gmra.mxu0 %v663
      %v731 = vpop.f32.mrf.mxu0
      %v732 = vadd.f32 0.0, %v731
      %733 = vmatmul.f32.gmra.mxu0 %v666
      %v734 = vpop.f32.mrf.mxu0
      %v735 = vadd.f32 0.0, %v734
      %736 = vmatmul.f32.gmra.mxu0 %v669
      %v737 = vpop.f32.mrf.mxu0
      %v738 = vadd.f32 0.0, %v737
      %739 = vmatmul.f32.gmra.mxu0 %v672
      %v740 = vpop.f32.mrf.mxu0
      %v741 = vadd.f32 0.0, %v740
      %742 = vmatmul.f32.gmra.mxu0 %v675
      %v743 = vpop.f32.mrf.mxu0
      %v744 = vadd.f32 0.0, %v743
      %745 = vmatmul.f32.gmra.mxu0 %v678
      %v746 = vpop.f32.mrf.mxu0
      %v747 = vadd.f32 0.0, %v746
      %748 = vmatmul.f32.gmra.mxu0 %v681
      %v749 = vpop.f32.mrf.mxu0
      %v750 = vadd.f32 0.0, %v749
      %751 = vmatmul.f32.gmra.mxu0 %v684
      %v752 = vpop.f32.mrf.mxu0
      %v753 = vadd.f32 0.0, %v752
      %754 = vmatmul.f32.gmra.mxu0 %v687
      %v755 = vpop.f32.mrf.mxu0
      %v756 = vadd.f32 0.0, %v755
      %757 = vmatmul.f32.gmra.mxu0 %v690
      %v758 = vpop.f32.mrf.mxu0
      %v759 = vadd.f32 0.0, %v758
      %760 = vmatmul.f32.gmra.mxu0 %v693
      %v761 = vpop.f32.mrf.mxu0
      %v762 = vadd.f32 0.0, %v761
      %763 = vdwg.mxu0
      %v764 = vld [vmem:[%s2] sm:$0xff]
      %v765 = vld [vmem:[%s2 + $0x8] sm:$0xff]
      %v766 = vld [vmem:[%s2 + $0x10] sm:$0xf]
      %v767 = vld [vmem:[%s2 + $0x18] sm:$0xf]
      %v768 = vld [vmem:[%s3] sm:$0x3]
      %v770 = vperm.slane %v768, 0
      %v771 = vperm.slane %v768, 1
      %v775 = vsel %vm646, %v717, 0
      %v778 = vsel %vm646, %v720, 0
      %v781 = vsel %vm646, %v723, 0
      %v784 = vsel %vm646, %v726, 0
      %v787 = vsel %vm646, %v729, 0
      %v790 = vsel %vm646, %v732, 0
      %v793 = vsel %vm646, %v735, 0
      %v796 = vsel %vm646, %v738, 0
      %v799 = vsel %vm646, %v741, 0
      %v802 = vsel %vm646, %v744, 0
      %v805 = vsel %vm646, %v747, 0
      %v808 = vsel %vm646, %v750, 0
      %v811 = vsel %vm646, %v753, 0
      %v814 = vsel %vm646, %v756, 0
      %v817 = vsel %vm646, %v759, 0
      %v820 = vsel %vm646, %v762, 0
      %v823 = vsel %vm695, %v766, 0
      %v826 = vsel %vm695, %v767, 0
      %828 = vmatpush.msra.mxu0 0.0
      %829 = vmatpush.msra.mxu0 0.0
      %830 = vmatpush.msra.mxu0 0.0
      %831 = vmatpush.msra.mxu0 0.0
      %832 = vmatpush.msra.mxu0 0.0
      %833 = vmatpush.msra.mxu0 0.0
      %834 = vmatpush.msra.mxu0 0.0
      %835 = vmatpush.msra.mxu0 0.0
      %836 = vmatpush.msra.mxu0 0.0
      %837 = vmatpush.msra.mxu0 0.0
      %838 = vmatpush.msra.mxu0 0.0
      %839 = vmatpush.msra.mxu0 0.0
      %840 = vmatpush.msra.mxu0 0.0
      %841 = vmatpush.msra.mxu0 0.0
      %842 = vmatpush.msra.mxu0 %v823
      %843 = vmatpush.msra.mxu0 %v764
      %844 = vmatmul.f32.gmra.mxu0 %v775
      %v845 = vpop.f32.mrf.mxu0
      %v846 = vadd.f32 %v770, %v845
      %847 = vmatmul.f32.gmra.mxu0 %v778
      %v848 = vpop.f32.mrf.mxu0
      %v849 = vadd.f32 %v770, %v848
      %850 = vmatmul.f32.gmra.mxu0 %v781
      %v851 = vpop.f32.mrf.mxu0
      %v852 = vadd.f32 %v770, %v851
      %853 = vmatmul.f32.gmra.mxu0 %v784
      %v854 = vpop.f32.mrf.mxu0
      %v855 = vadd.f32 %v770, %v854
      %856 = vmatmul.f32.gmra.mxu0 %v787
      %v857 = vpop.f32.mrf.mxu0
      %v858 = vadd.f32 %v770, %v857
      %859 = vmatmul.f32.gmra.mxu0 %v790
      %v860 = vpop.f32.mrf.mxu0
      %v861 = vadd.f32 %v770, %v860
      %862 = vmatmul.f32.gmra.mxu0 %v793
      %v863 = vpop.f32.mrf.mxu0
      %v864 = vadd.f32 %v770, %v863
      %865 = vmatmul.f32.gmra.mxu0 %v796
      %v866 = vpop.f32.mrf.mxu0
      %v867 = vadd.f32 %v770, %v866
      %868 = vmatmul.f32.gmra.mxu0 %v799
      %v869 = vpop.f32.mrf.mxu0
      %v870 = vadd.f32 %v770, %v869
      %871 = vmatmul.f32.gmra.mxu0 %v802
      %v872 = vpop.f32.mrf.mxu0
      %v873 = vadd.f32 %v770, %v872
      %874 = vmatmul.f32.gmra.mxu0 %v805
      %v875 = vpop.f32.mrf.mxu0
      %v876 = vadd.f32 %v770, %v875
      %877 = vmatmul.f32.gmra.mxu0 %v808
      %v878 = vpop.f32.mrf.mxu0
      %v879 = vadd.f32 %v770, %v878
      %880 = vmatmul.f32.gmra.mxu0 %v811
      %v881 = vpop.f32.mrf.mxu0
      %v882 = vadd.f32 %v770, %v881
      %883 = vmatmul.f32.gmra.mxu0 %v814
      %v884 = vpop.f32.mrf.mxu0
      %v885 = vadd.f32 %v770, %v884
      %886 = vmatmul.f32.gmra.mxu0 %v817
      %v887 = vpop.f32.mrf.mxu0
      %v888 = vadd.f32 %v770, %v887
      %889 = vmatmul.f32.gmra.mxu0 %v820
      %v890 = vpop.f32.mrf.mxu0
      %v891 = vadd.f32 %v770, %v890
      %892 = vdwg.mxu0
      %893 = vmatpush.msra.mxu0 0.0
      %894 = vmatpush.msra.mxu0 0.0
      %895 = vmatpush.msra.mxu0 0.0
      %896 = vmatpush.msra.mxu0 0.0
      %897 = vmatpush.msra.mxu0 0.0
      %898 = vmatpush.msra.mxu0 0.0
      %899 = vmatpush.msra.mxu0 0.0
      %900 = vmatpush.msra.mxu0 0.0
      %901 = vmatpush.msra.mxu0 0.0
      %902 = vmatpush.msra.mxu0 0.0
      %903 = vmatpush.msra.mxu0 0.0
      %904 = vmatpush.msra.mxu0 0.0
      %905 = vmatpush.msra.mxu0 0.0
      %906 = vmatpush.msra.mxu0 0.0
      %907 = vmatpush.msra.mxu0 %v826
      %908 = vmatpush.msra.mxu0 %v765
      %909 = vmatmul.f32.gmra.mxu0 %v775
      %v910 = vpop.f32.mrf.mxu0
      %v911 = vadd.f32 %v771, %v910
      %912 = vmatmul.f32.gmra.mxu0 %v778
      %v913 = vpop.f32.mrf.mxu0
      %v914 = vadd.f32 %v771, %v913
      %915 = vmatmul.f32.gmra.mxu0 %v781
      %v916 = vpop.f32.mrf.mxu0
      %v917 = vadd.f32 %v771, %v916
      %918 = vmatmul.f32.gmra.mxu0 %v784
      %v919 = vpop.f32.mrf.mxu0
      %v920 = vadd.f32 %v771, %v919
      %921 = vmatmul.f32.gmra.mxu0 %v787
      %v922 = vpop.f32.mrf.mxu0
      %v923 = vadd.f32 %v771, %v922
      %924 = vmatmul.f32.gmra.mxu0 %v790
      %v925 = vpop.f32.mrf.mxu0
      %v926 = vadd.f32 %v771, %v925
      %927 = vmatmul.f32.gmra.mxu0 %v793
      %v928 = vpop.f32.mrf.mxu0
      %v929 = vadd.f32 %v771, %v928
      %930 = vmatmul.f32.gmra.mxu0 %v796
      %v931 = vpop.f32.mrf.mxu0
      %v932 = vadd.f32 %v771, %v931
      %933 = vmatmul.f32.gmra.mxu0 %v799
      %v934 = vpop.f32.mrf.mxu0
      %v935 = vadd.f32 %v771, %v934
      %936 = vmatmul.f32.gmra.mxu0 %v802
      %v937 = vpop.f32.mrf.mxu0
      %v938 = vadd.f32 %v771, %v937
      %939 = vmatmul.f32.gmra.mxu0 %v805
      %v940 = vpop.f32.mrf.mxu0
      %v941 = vadd.f32 %v771, %v940
      %942 = vmatmul.f32.gmra.mxu0 %v808
      %v943 = vpop.f32.mrf.mxu0
      %v944 = vadd.f32 %v771, %v943
      %945 = vmatmul.f32.gmra.mxu0 %v811
      %v946 = vpop.f32.mrf.mxu0
      %v947 = vadd.f32 %v771, %v946
      %948 = vmatmul.f32.gmra.mxu0 %v814
      %v949 = vpop.f32.mrf.mxu0
      %v950 = vadd.f32 %v771, %v949
      %951 = vmatmul.f32.gmra.mxu0 %v817
      %v952 = vpop.f32.mrf.mxu0
      %v953 = vadd.f32 %v771, %v952
      %954 = vmatmul.f32.gmra.mxu0 %v820
      %v955 = vpop.f32.mrf.mxu0
      %v956 = vadd.f32 %v771, %v955
      %957 = vdwg.mxu0
      %v958 = vtanh.pop %v846
      %v959 = vtanh.pop %v911
      %v960 = vtanh.pop %v849
      %v961 = vtanh.pop %v914
      %v962 = vtanh.pop %v852
      %v963 = vtanh.pop %v917
      %v964 = vtanh.pop %v855
      %v965 = vtanh.pop %v920
      %v966 = vtanh.pop %v858
      %v967 = vtanh.pop %v923
      %v968 = vtanh.pop %v861
      %v969 = vtanh.pop %v926
      %v970 = vtanh.pop %v864
      %v971 = vtanh.pop %v929
      %v972 = vtanh.pop %v867
      %v973 = vtanh.pop %v932
      %v974 = vtanh.pop %v870
      %v975 = vtanh.pop %v935
      %v976 = vtanh.pop %v873
      %v977 = vtanh.pop %v938
      %v978 = vtanh.pop %v876
      %v979 = vtanh.pop %v941
      %v980 = vtanh.pop %v879
      %v981 = vtanh.pop %v944
      %v982 = vtanh.pop %v882
      %v983 = vtanh.pop %v947
      %v984 = vtanh.pop %v885
      %v985 = vtanh.pop %v950
      %v986 = vtanh.pop %v888
      %v987 = vtanh.pop %v953
      %v988 = vtanh.pop %v891
      %v989 = vtanh.pop %v956
      %v990 = vld [vmem:[%s4] sm:$0xff]
      %v991 = vld [vmem:[%s4 + $0x8] sm:$0xff]
      %v992 = vld [vmem:[%s4 + $0x10] sm:$0xff]
      %v993 = vld [vmem:[%s4 + $0x18] sm:$0xff]
      %v994 = vld [vmem:[%s4 + $0x20] sm:$0xff]
      %v995 = vld [vmem:[%s4 + $0x28] sm:$0xff]
      %v996 = vld [vmem:[%s4 + $0x30] sm:$0xff]
      %v997 = vld [vmem:[%s4 + $0x38] sm:$0xff]
      %v998 = vld [vmem:[%s4 + $0x40] sm:$0xff]
      %v999 = vld [vmem:[%s4 + $0x48] sm:$0xff]
      %v1000 = vld [vmem:[%s4 + $0x50] sm:$0xff]
      %v1001 = vld [vmem:[%s4 + $0x58] sm:$0xff]
      %v1002 = vld [vmem:[%s4 + $0x60] sm:$0xff]
      %v1003 = vld [vmem:[%s4 + $0x68] sm:$0xff]
      %v1004 = vld [vmem:[%s4 + $0x70] sm:$0xff]
      %v1005 = vld [vmem:[%s4 + $0x78] sm:$0xff]
      %v1006 = vld [vmem:[%s4 + $0x80] sm:$0xff]
      %v1007 = vld [vmem:[%s4 + $0x88] sm:$0xff]
      %v1008 = vld [vmem:[%s4 + $0x90] sm:$0xff]
      %v1009 = vld [vmem:[%s4 + $0x98] sm:$0xff]
      %v1010 = vld [vmem:[%s4 + $0xa0] sm:$0xff]
      %v1011 = vld [vmem:[%s4 + $0xa8] sm:$0xff]
      %v1012 = vld [vmem:[%s4 + $0xb0] sm:$0xff]
      %v1013 = vld [vmem:[%s4 + $0xb8] sm:$0xff]
      %v1014 = vld [vmem:[%s4 + $0xc0] sm:$0xff]
      %v1015 = vld [vmem:[%s4 + $0xc8] sm:$0xff]
      %v1016 = vld [vmem:[%s4 + $0xd0] sm:$0xff]
      %v1017 = vld [vmem:[%s4 + $0xd8] sm:$0xff]
      %v1018 = vld [vmem:[%s4 + $0xe0] sm:$0xff]
      %v1019 = vld [vmem:[%s4 + $0xe8] sm:$0xff]
      %v1020 = vld [vmem:[%s4 + $0xf0] sm:$0xff]
      %v1021 = vld [vmem:[%s4 + $0xf8] sm:$0xff]
      %v1022 = vld [vmem:[%s4 + $0x100] sm:$0xff]
      %v1023 = vld [vmem:[%s4 + $0x108] sm:$0xff]
      %v1024 = vld [vmem:[%s4 + $0x110] sm:$0xff]
      %v1025 = vld [vmem:[%s4 + $0x118] sm:$0xff]
      %v1026 = vld [vmem:[%s4 + $0x120] sm:$0xff]
      %v1027 = vld [vmem:[%s4 + $0x128] sm:$0xff]
      %v1028 = vld [vmem:[%s4 + $0x130] sm:$0xff]
      %v1029 = vld [vmem:[%s4 + $0x138] sm:$0xff]
      %v1030 = vld [vmem:[%s4 + $0x140] sm:$0xff]
      %v1031 = vld [vmem:[%s4 + $0x148] sm:$0xff]
      %v1032 = vld [vmem:[%s4 + $0x150] sm:$0xff]
      %v1033 = vld [vmem:[%s4 + $0x158] sm:$0xff]
      %v1034 = vld [vmem:[%s4 + $0x160] sm:$0xff]
      %v1035 = vld [vmem:[%s4 + $0x168] sm:$0xff]
      %v1036 = vld [vmem:[%s4 + $0x170] sm:$0xff]
      %v1037 = vld [vmem:[%s4 + $0x178] sm:$0xff]
      %vm1038 = vcmask 523264
      %v1040 = vsel %vm1038, %v959, 0
      %v1043 = vsel %vm1038, %v961, 0
      %v1046 = vsel %vm1038, %v963, 0
      %v1049 = vsel %vm1038, %v965, 0
      %v1052 = vsel %vm1038, %v967, 0
      %v1055 = vsel %vm1038, %v969, 0
      %v1058 = vsel %vm1038, %v971, 0
      %v1061 = vsel %vm1038, %v973, 0
      %v1064 = vsel %vm1038, %v975, 0
      %v1067 = vsel %vm1038, %v977, 0
      %v1070 = vsel %vm1038, %v979, 0
      %v1073 = vsel %vm1038, %v981, 0
      %v1076 = vsel %vm1038, %v983, 0
      %v1079 = vsel %vm1038, %v985, 0
      %v1082 = vsel %vm1038, %v987, 0
      %v1085 = vsel %vm1038, %v989, 0
      %1087 = vmatpush.msra.mxu0 %v1020
      %1088 = vmatpush.msra.mxu0 %v1018
      %1089 = vmatpush.msra.mxu0 %v1016
      %1090 = vmatpush.msra.mxu0 %v1014
      %1091 = vmatpush.msra.mxu0 %v1012
      %1092 = vmatpush.msra.mxu0 %v1010
      %1093 = vmatpush.msra.mxu0 %v1008
      %1094 = vmatpush.msra.mxu0 %v1006
      %1095 = vmatpush.msra.mxu0 %v1004
      %1096 = vmatpush.msra.mxu0 %v1002
      %1097 = vmatpush.msra.mxu0 %v1000
      %1098 = vmatpush.msra.mxu0 %v998
      %1099 = vmatpush.msra.mxu0 %v996
      %1100 = vmatpush.msra.mxu0 %v994
      %1101 = vmatpush.msra.mxu0 %v992
      %1102 = vmatpush.msra.mxu0 %v990
      %1103 = vmatmul.f32.gmra.mxu0 %v958
      %v1104 = vpop.f32.mrf.mxu0
      %v1105 = vadd.f32 0.0, %v1104
      %1106 = vmatmul.f32.gmra.mxu0 %v960
      %v1107 = vpop.f32.mrf.mxu0
      %v1108 = vadd.f32 0.0, %v1107
      %1109 = vmatmul.f32.gmra.mxu0 %v962
      %v1110 = vpop.f32.mrf.mxu0
      %v1111 = vadd.f32 0.0, %v1110
      %1112 = vmatmul.f32.gmra.mxu0 %v964
      %v1113 = vpop.f32.mrf.mxu0
      %v1114 = vadd.f32 0.0, %v1113
      %1115 = vmatmul.f32.gmra.mxu0 %v966
      %v1116 = vpop.f32.mrf.mxu0
      %v1117 = vadd.f32 0.0, %v1116
      %1118 = vmatmul.f32.gmra.mxu0 %v968
      %v1119 = vpop.f32.mrf.mxu0
      %v1120 = vadd.f32 0.0, %v1119
      %1121 = vmatmul.f32.gmra.mxu0 %v970
      %v1122 = vpop.f32.mrf.mxu0
      %v1123 = vadd.f32 0.0, %v1122
      %1124 = vmatmul.f32.gmra.mxu0 %v972
      %v1125 = vpop.f32.mrf.mxu0
      %v1126 = vadd.f32 0.0, %v1125
      %1127 = vmatmul.f32.gmra.mxu0 %v974
      %v1128 = vpop.f32.mrf.mxu0
      %v1129 = vadd.f32 0.0, %v1128
      %1130 = vmatmul.f32.gmra.mxu0 %v976
      %v1131 = vpop.f32.mrf.mxu0
      %v1132 = vadd.f32 0.0, %v1131
      %1133 = vmatmul.f32.gmra.mxu0 %v978
      %v1134 = vpop.f32.mrf.mxu0
      %v1135 = vadd.f32 0.0, %v1134
      %1136 = vmatmul.f32.gmra.mxu0 %v980
      %v1137 = vpop.f32.mrf.mxu0
      %v1138 = vadd.f32 0.0, %v1137
      %1139 = vmatmul.f32.gmra.mxu0 %v982
      %v1140 = vpop.f32.mrf.mxu0
      %v1141 = vadd.f32 0.0, %v1140
      %1142 = vmatmul.f32.gmra.mxu0 %v984
      %v1143 = vpop.f32.mrf.mxu0
      %v1144 = vadd.f32 0.0, %v1143
      %1145 = vmatmul.f32.gmra.mxu0 %v986
      %v1146 = vpop.f32.mrf.mxu0
      %v1147 = vadd.f32 0.0, %v1146
      %1148 = vmatmul.f32.gmra.mxu0 %v988
      %v1149 = vpop.f32.mrf.mxu0
      %v1150 = vadd.f32 0.0, %v1149
      %1151 = vdwg.mxu0
      %1152 = vmatpush.msra.mxu0 0.0
      %1153 = vmatpush.msra.mxu0 0.0
      %1154 = vmatpush.msra.mxu0 0.0
      %1155 = vmatpush.msra.mxu0 0.0
      %1156 = vmatpush.msra.mxu0 0.0
      %1157 = vmatpush.msra.mxu0 0.0
      %1158 = vmatpush.msra.mxu0 0.0
      %1159 = vmatpush.msra.mxu0 0.0
      %1160 = vmatpush.msra.mxu0 %v1036
      %1161 = vmatpush.msra.mxu0 %v1034
      %1162 = vmatpush.msra.mxu0 %v1032
      %1163 = vmatpush.msra.mxu0 %v1030
      %1164 = vmatpush.msra.mxu0 %v1028
      %1165 = vmatpush.msra.mxu0 %v1026
      %1166 = vmatpush.msra.mxu0 %v1024
      %1167 = vmatpush.msra.mxu0 %v1022
      %1168 = vmatmul.f32.gmra.mxu0 %v1040
      %v1169 = vpop.f32.mrf.mxu0
      %v1170 = vadd.f32 %v1105, %v1169
      %1171 = vmatmul.f32.gmra.mxu0 %v1043
      %v1172 = vpop.f32.mrf.mxu0
      %v1173 = vadd.f32 %v1108, %v1172
      %1174 = vmatmul.f32.gmra.mxu0 %v1046
      %v1175 = vpop.f32.mrf.mxu0
      %v1176 = vadd.f32 %v1111, %v1175
      %1177 = vmatmul.f32.gmra.mxu0 %v1049
      %v1178 = vpop.f32.mrf.mxu0
      %v1179 = vadd.f32 %v1114, %v1178
      %1180 = vmatmul.f32.gmra.mxu0 %v1052
      %v1181 = vpop.f32.mrf.mxu0
      %v1182 = vadd.f32 %v1117, %v1181
      %1183 = vmatmul.f32.gmra.mxu0 %v1055
      %v1184 = vpop.f32.mrf.mxu0
      %v1185 = vadd.f32 %v1120, %v1184
      %1186 = vmatmul.f32.gmra.mxu0 %v1058
      %v1187 = vpop.f32.mrf.mxu0
      %v1188 = vadd.f32 %v1123, %v1187
      %1189 = vmatmul.f32.gmra.mxu0 %v1061
      %v1190 = vpop.f32.mrf.mxu0
      %v1191 = vadd.f32 %v1126, %v1190
      %1192 = vmatmul.f32.gmra.mxu0 %v1064
      %v1193 = vpop.f32.mrf.mxu0
      %v1194 = vadd.f32 %v1129, %v1193
      %1195 = vmatmul.f32.gmra.mxu0 %v1067
      %v1196 = vpop.f32.mrf.mxu0
      %v1197 = vadd.f32 %v1132, %v1196
      %1198 = vmatmul.f32.gmra.mxu0 %v1070
      %v1199 = vpop.f32.mrf.mxu0
      %v1200 = vadd.f32 %v1135, %v1199
      %1201 = vmatmul.f32.gmra.mxu0 %v1073
      %v1202 = vpop.f32.mrf.mxu0
      %v1203 = vadd.f32 %v1138, %v1202
      %1204 = vmatmul.f32.gmra.mxu0 %v1076
      %v1205 = vpop.f32.mrf.mxu0
      %v1206 = vadd.f32 %v1141, %v1205
      %1207 = vmatmul.f32.gmra.mxu0 %v1079
      %v1208 = vpop.f32.mrf.mxu0
      %v1209 = vadd.f32 %v1144, %v1208
      %1210 = vmatmul.f32.gmra.mxu0 %v1082
      %v1211 = vpop.f32.mrf.mxu0
      %v1212 = vadd.f32 %v1147, %v1211
      %1213 = vmatmul.f32.gmra.mxu0 %v1085
      %v1214 = vpop.f32.mrf.mxu0
      %v1215 = vadd.f32 %v1150, %v1214
      %1216 = vdwg.mxu0
      %1217 = vmatpush.msra.mxu0 %v1021
      %1218 = vmatpush.msra.mxu0 %v1019
      %1219 = vmatpush.msra.mxu0 %v1017
      %1220 = vmatpush.msra.mxu0 %v1015
      %1221 = vmatpush.msra.mxu0 %v1013
      %1222 = vmatpush.msra.mxu0 %v1011
      %1223 = vmatpush.msra.mxu0 %v1009
      %1224 = vmatpush.msra.mxu0 %v1007
      %1225 = vmatpush.msra.mxu0 %v1005
      %1226 = vmatpush.msra.mxu0 %v1003
      %1227 = vmatpush.msra.mxu0 %v1001
      %1228 = vmatpush.msra.mxu0 %v999
      %1229 = vmatpush.msra.mxu0 %v997
      %1230 = vmatpush.msra.mxu0 %v995
      %1231 = vmatpush.msra.mxu0 %v993
      %1232 = vmatpush.msra.mxu0 %v991
      %1233 = vmatmul.f32.gmra.mxu0 %v958
      %v1234 = vpop.f32.mrf.mxu0
      %v1235 = vadd.f32 0.0, %v1234
      %1236 = vmatmul.f32.gmra.mxu0 %v960
      %v1237 = vpop.f32.mrf.mxu0
      %v1238 = vadd.f32 0.0, %v1237
      %1239 = vmatmul.f32.gmra.mxu0 %v962
      %v1240 = vpop.f32.mrf.mxu0
      %v1241 = vadd.f32 0.0, %v1240
      %1242 = vmatmul.f32.gmra.mxu0 %v964
      %v1243 = vpop.f32.mrf.mxu0
      %v1244 = vadd.f32 0.0, %v1243
      %1245 = vmatmul.f32.gmra.mxu0 %v966
      %v1246 = vpop.f32.mrf.mxu0
      %v1247 = vadd.f32 0.0, %v1246
      %1248 = vmatmul.f32.gmra.mxu0 %v968
      %v1249 = vpop.f32.mrf.mxu0
      %v1250 = vadd.f32 0.0, %v1249
      %1251 = vmatmul.f32.gmra.mxu0 %v970
      %v1252 = vpop.f32.mrf.mxu0
      %v1253 = vadd.f32 0.0, %v1252
      %1254 = vmatmul.f32.gmra.mxu0 %v972
      %v1255 = vpop.f32.mrf.mxu0
      %v1256 = vadd.f32 0.0, %v1255
      %1257 = vmatmul.f32.gmra.mxu0 %v974
      %v1258 = vpop.f32.mrf.mxu0
      %v1259 = vadd.f32 0.0, %v1258
      %1260 = vmatmul.f32.gmra.mxu0 %v976
      %v1261 = vpop.f32.mrf.mxu0
      %v1262 = vadd.f32 0.0, %v1261
      %1263 = vmatmul.f32.gmra.mxu0 %v978
      %v1264 = vpop.f32.mrf.mxu0
      %v1265 = vadd.f32 0.0, %v1264
      %1266 = vmatmul.f32.gmra.mxu0 %v980
      %v1267 = vpop.f32.mrf.mxu0
      %v1268 = vadd.f32 0.0, %v1267
      %1269 = vmatmul.f32.gmra.mxu0 %v982
      %v1270 = vpop.f32.mrf.mxu0
      %v1271 = vadd.f32 0.0, %v1270
      %1272 = vmatmul.f32.gmra.mxu0 %v984
      %v1273 = vpop.f32.mrf.mxu0
      %v1274 = vadd.f32 0.0, %v1273
      %1275 = vmatmul.f32.gmra.mxu0 %v986
      %v1276 = vpop.f32.mrf.mxu0
      %v1277 = vadd.f32 0.0, %v1276
      %1278 = vmatmul.f32.gmra.mxu0 %v988
      %v1279 = vpop.f32.mrf.mxu0
      %v1280 = vadd.f32 0.0, %v1279
      %1281 = vdwg.mxu0
      %1282 = vmatpush.msra.mxu0 0.0
      %1283 = vmatpush.msra.mxu0 0.0
      %1284 = vmatpush.msra.mxu0 0.0
      %1285 = vmatpush.msra.mxu0 0.0
      %1286 = vmatpush.msra.mxu0 0.0
      %1287 = vmatpush.msra.mxu0 0.0
      %1288 = vmatpush.msra.mxu0 0.0
      %1289 = vmatpush.msra.mxu0 0.0
      %1290 = vmatpush.msra.mxu0 %v1037
      %1291 = vmatpush.msra.mxu0 %v1035
      %1292 = vmatpush.msra.mxu0 %v1033
      %1293 = vmatpush.msra.mxu0 %v1031
      %1294 = vmatpush.msra.mxu0 %v1029
      %1295 = vmatpush.msra.mxu0 %v1027
      %1296 = vmatpush.msra.mxu0 %v1025
      %1297 = vmatpush.msra.mxu0 %v1023
      %1298 = vmatmul.f32.gmra.mxu0 %v1040
      %v1299 = vpop.f32.mrf.mxu0
      %v1300 = vadd.f32 %v1235, %v1299
      %1301 = vmatmul.f32.gmra.mxu0 %v1043
      %v1302 = vpop.f32.mrf.mxu0
      %v1303 = vadd.f32 %v1238, %v1302
      %1304 = vmatmul.f32.gmra.mxu0 %v1046
      %v1305 = vpop.f32.mrf.mxu0
      %v1306 = vadd.f32 %v1241, %v1305
      %1307 = vmatmul.f32.gmra.mxu0 %v1049
      %v1308 = vpop.f32.mrf.mxu0
      %v1309 = vadd.f32 %v1244, %v1308
      %1310 = vmatmul.f32.gmra.mxu0 %v1052
      %v1311 = vpop.f32.mrf.mxu0
      %v1312 = vadd.f32 %v1247, %v1311
      %1313 = vmatmul.f32.gmra.mxu0 %v1055
      %v1314 = vpop.f32.mrf.mxu0
      %v1315 = vadd.f32 %v1250, %v1314
      %1316 = vmatmul.f32.gmra.mxu0 %v1058
      %v1317 = vpop.f32.mrf.mxu0
      %v1318 = vadd.f32 %v1253, %v1317
      %1319 = vmatmul.f32.gmra.mxu0 %v1061
      %v1320 = vpop.f32.mrf.mxu0
      %v1321 = vadd.f32 %v1256, %v1320
      %1322 = vmatmul.f32.gmra.mxu0 %v1064
      %v1323 = vpop.f32.mrf.mxu0
      %v1324 = vadd.f32 %v1259, %v1323
      %1325 = vmatmul.f32.gmra.mxu0 %v1067
      %v1326 = vpop.f32.mrf.mxu0
      %v1327 = vadd.f32 %v1262, %v1326
      %1328 = vmatmul.f32.gmra.mxu0 %v1070
      %v1329 = vpop.f32.mrf.mxu0
      %v1330 = vadd.f32 %v1265, %v1329
      %1331 = vmatmul.f32.gmra.mxu0 %v1073
      %v1332 = vpop.f32.mrf.mxu0
      %v1333 = vadd.f32 %v1268, %v1332
      %1334 = vmatmul.f32.gmra.mxu0 %v1076
      %v1335 = vpop.f32.mrf.mxu0
      %v1336 = vadd.f32 %v1271, %v1335
      %1337 = vmatmul.f32.gmra.mxu0 %v1079
      %v1338 = vpop.f32.mrf.mxu0
      %v1339 = vadd.f32 %v1274, %v1338
      %1340 = vmatmul.f32.gmra.mxu0 %v1082
      %v1341 = vpop.f32.mrf.mxu0
      %v1342 = vadd.f32 %v1277, %v1341
      %1343 = vmatmul.f32.gmra.mxu0 %v1085
      %v1344 = vpop.f32.mrf.mxu0
      %v1345 = vadd.f32 %v1280, %v1344
      %1346 = vdwg.mxu0
      %v1347 = vld [vmem:[%s5] sm:$0xff]
      %v1348 = vld [vmem:[%s5 + $0x8] sm:$0xff]
      %v1349 = vld [vmem:[%s5 + $0x10] sm:$0xff]
      %v1350 = vld [vmem:[%s5 + $0x18] sm:$0xff]
      %v1351 = vld [vmem:[%s5 + $0x20] sm:$0xff]
      %v1352 = vld [vmem:[%s5 + $0x28] sm:$0xff]
      %v1353 = vld [vmem:[%s5 + $0x30] sm:$0xff]
      %v1354 = vld [vmem:[%s5 + $0x38] sm:$0xff]
      %v1355 = vld [vmem:[%s5 + $0x40] sm:$0xff]
      %v1356 = vld [vmem:[%s5 + $0x48] sm:$0xff]
      %v1357 = vld [vmem:[%s5 + $0x50] sm:$0xff]
      %v1358 = vld [vmem:[%s5 + $0x58] sm:$0xff]
      %v1359 = vld [vmem:[%s5 + $0x60] sm:$0xff]
      %v1360 = vld [vmem:[%s5 + $0x68] sm:$0xff]
      %v1361 = vld [vmem:[%s5 + $0x70] sm:$0xff]
      %v1362 = vld [vmem:[%s5 + $0x78] sm:$0xff]
      %v1363 = vld [vmem:[%s5 + $0x80] sm:$0xff]
      %v1364 = vld [vmem:[%s5 + $0x88] sm:$0xff]
      %v1365 = vld [vmem:[%s5 + $0x90] sm:$0xff]
      %v1366 = vld [vmem:[%s5 + $0x98] sm:$0xff]
      %v1367 = vld [vmem:[%s5 + $0xa0] sm:$0xff]
      %v1368 = vld [vmem:[%s5 + $0xa8] sm:$0xff]
      %v1369 = vld [vmem:[%s5 + $0xb0] sm:$0xff]
      %v1370 = vld [vmem:[%s5 + $0xb8] sm:$0xff]
      %v1371 = vld [vmem:[%s5 + $0xc0] sm:$0xff]
      %v1372 = vld [vmem:[%s5 + $0xc8] sm:$0xff]
      %v1373 = vld [vmem:[%s5 + $0xd0] sm:$0xff]
      %v1374 = vld [vmem:[%s5 + $0xd8] sm:$0xff]
      %v1375 = vld [vmem:[%s5 + $0xe0] sm:$0xff]
      %v1376 = vld [vmem:[%s5 + $0xe8] sm:$0xff]
      %v1377 = vld [vmem:[%s5 + $0xf0] sm:$0xff]
      %v1378 = vld [vmem:[%s5 + $0xf8] sm:$0xff]
      %v1379 = vld [vmem:[%s5 + $0x100] sm:$0xff]
      %v1380 = vld [vmem:[%s5 + $0x108] sm:$0xff]
      %v1381 = vld [vmem:[%s5 + $0x110] sm:$0xff]
      %v1382 = vld [vmem:[%s5 + $0x118] sm:$0xff]
      %v1383 = vld [vmem:[%s5 + $0x120] sm:$0xff]
      %v1384 = vld [vmem:[%s5 + $0x128] sm:$0xff]
      %v1385 = vld [vmem:[%s5 + $0x130] sm:$0xff]
      %v1386 = vld [vmem:[%s5 + $0x138] sm:$0xff]
      %v1387 = vld [vmem:[%s5 + $0x140] sm:$0xff]
      %v1388 = vld [vmem:[%s5 + $0x148] sm:$0xff]
      %v1389 = vld [vmem:[%s5 + $0x150] sm:$0xff]
      %v1390 = vld [vmem:[%s5 + $0x158] sm:$0xff]
      %v1391 = vld [vmem:[%s5 + $0x160] sm:$0xff]
      %v1392 = vld [vmem:[%s5 + $0x168] sm:$0xff]
      %v1393 = vld [vmem:[%s5 + $0x170] sm:$0xff]
      %v1394 = vld [vmem:[%s5 + $0x178] sm:$0xff]
      %v1395 = vld [vmem:[%s5 + $0x180] sm:$0xff]
      %v1396 = vld [vmem:[%s5 + $0x188] sm:$0xff]
      %v1397 = vld [vmem:[%s5 + $0x190] sm:$0xff]
      %v1398 = vld [vmem:[%s5 + $0x198] sm:$0xff]
      %v1399 = vld [vmem:[%s5 + $0x1a0] sm:$0xff]
      %v1400 = vld [vmem:[%s5 + $0x1a8] sm:$0xff]
      %v1401 = vld [vmem:[%s5 + $0x1b0] sm:$0xff]
      %v1402 = vld [vmem:[%s5 + $0x1b8] sm:$0xff]
      %v1403 = vld [vmem:[%s5 + $0x1c0] sm:$0xff]
      %v1404 = vld [vmem:[%s5 + $0x1c8] sm:$0xff]
      %v1405 = vld [vmem:[%s5 + $0x1d0] sm:$0xff]
      %v1406 = vld [vmem:[%s5 + $0x1d8] sm:$0xff]
      %v1407 = vld [vmem:[%s5 + $0x1e0] sm:$0xff]
      %v1408 = vld [vmem:[%s5 + $0x1e8] sm:$0xff]
      %v1409 = vld [vmem:[%s5 + $0x1f0] sm:$0xff]
      %v1410 = vld [vmem:[%s5 + $0x1f8] sm:$0xff]
      %v1411 = vld [vmem:[%s6] sm:$0x3]
      %v1413 = vperm.slane %v1411, 0
      %v1414 = vperm.slane %v1411, 1
      %1417 = vmatpush.msra.mxu0 %v1377
      %1418 = vmatpush.msra.mxu0 %v1375
      %1419 = vmatpush.msra.mxu0 %v1373
      %1420 = vmatpush.msra.mxu0 %v1371
      %1421 = vmatpush.msra.mxu0 %v1369
      %1422 = vmatpush.msra.mxu0 %v1367
      %1423 = vmatpush.msra.mxu0 %v1365
      %1424 = vmatpush.msra.mxu0 %v1363
      %1425 = vmatpush.msra.mxu0 %v1361
      %1426 = vmatpush.msra.mxu0 %v1359
      %1427 = vmatpush.msra.mxu0 %v1357
      %1428 = vmatpush.msra.mxu0 %v1355
      %1429 = vmatpush.msra.mxu0 %v1353
      %1430 = vmatpush.msra.mxu0 %v1351
      %1431 = vmatpush.msra.mxu0 %v1349
      %1432 = vmatpush.msra.mxu0 %v1347
      %1433 = vmatmul.f32.gmra.mxu0 %v1170
      %v1434 = vpop.f32.mrf.mxu0
      %v1435 = vadd.f32 %v1413, %v1434
      %1436 = vmatmul.f32.gmra.mxu0 %v1173
      %v1437 = vpop.f32.mrf.mxu0
      %v1438 = vadd.f32 %v1413, %v1437
      %1439 = vmatmul.f32.gmra.mxu0 %v1176
      %v1440 = vpop.f32.mrf.mxu0
      %v1441 = vadd.f32 %v1413, %v1440
      %1442 = vmatmul.f32.gmra.mxu0 %v1179
      %v1443 = vpop.f32.mrf.mxu0
      %v1444 = vadd.f32 %v1413, %v1443
      %1445 = vmatmul.f32.gmra.mxu0 %v1182
      %v1446 = vpop.f32.mrf.mxu0
      %v1447 = vadd.f32 %v1413, %v1446
      %1448 = vmatmul.f32.gmra.mxu0 %v1185
      %v1449 = vpop.f32.mrf.mxu0
      %v1450 = vadd.f32 %v1413, %v1449
      %1451 = vmatmul.f32.gmra.mxu0 %v1188
      %v1452 = vpop.f32.mrf.mxu0
      %v1453 = vadd.f32 %v1413, %v1452
      %1454 = vmatmul.f32.gmra.mxu0 %v1191
      %v1455 = vpop.f32.mrf.mxu0
      %v1456 = vadd.f32 %v1413, %v1455
      %1457 = vmatmul.f32.gmra.mxu0 %v1194
      %v1458 = vpop.f32.mrf.mxu0
      %v1459 = vadd.f32 %v1413, %v1458
      %1460 = vmatmul.f32.gmra.mxu0 %v1197
      %v1461 = vpop.f32.mrf.mxu0
      %v1462 = vadd.f32 %v1413, %v1461
      %1463 = vmatmul.f32.gmra.mxu0 %v1200
      %v1464 = vpop.f32.mrf.mxu0
      %v1465 = vadd.f32 %v1413, %v1464
      %1466 = vmatmul.f32.gmra.mxu0 %v1203
      %v1467 = vpop.f32.mrf.mxu0
      %v1468 = vadd.f32 %v1413, %v1467
      %1469 = vmatmul.f32.gmra.mxu0 %v1206
      %v1470 = vpop.f32.mrf.mxu0
      %v1471 = vadd.f32 %v1413, %v1470
      %1472 = vmatmul.f32.gmra.mxu0 %v1209
      %v1473 = vpop.f32.mrf.mxu0
      %v1474 = vadd.f32 %v1413, %v1473
      %1475 = vmatmul.f32.gmra.mxu0 %v1212
      %v1476 = vpop.f32.mrf.mxu0
      %v1477 = vadd.f32 %v1413, %v1476
      %1478 = vmatmul.f32.gmra.mxu0 %v1215
      %v1479 = vpop.f32.mrf.mxu0
      %v1480 = vadd.f32 %v1413, %v1479
      %1481 = vdwg.mxu0
      %1482 = vmatpush.msra.mxu0 %v1409
      %1483 = vmatpush.msra.mxu0 %v1407
      %1484 = vmatpush.msra.mxu0 %v1405
      %1485 = vmatpush.msra.mxu0 %v1403
      %1486 = vmatpush.msra.mxu0 %v1401
      %1487 = vmatpush.msra.mxu0 %v1399
      %1488 = vmatpush.msra.mxu0 %v1397
      %1489 = vmatpush.msra.mxu0 %v1395
      %1490 = vmatpush.msra.mxu0 %v1393
      %1491 = vmatpush.msra.mxu0 %v1391
      %1492 = vmatpush.msra.mxu0 %v1389
      %1493 = vmatpush.msra.mxu0 %v1387
      %1494 = vmatpush.msra.mxu0 %v1385
      %1495 = vmatpush.msra.mxu0 %v1383
      %1496 = vmatpush.msra.mxu0 %v1381
      %1497 = vmatpush.msra.mxu0 %v1379
      %1498 = vmatmul.f32.gmra.mxu0 %v1300
      %v1499 = vpop.f32.mrf.mxu0
      %v1500 = vadd.f32 %v1435, %v1499
      %1501 = vmatmul.f32.gmra.mxu0 %v1303
      %v1502 = vpop.f32.mrf.mxu0
      %v1503 = vadd.f32 %v1438, %v1502
      %1504 = vmatmul.f32.gmra.mxu0 %v1306
      %v1505 = vpop.f32.mrf.mxu0
      %v1506 = vadd.f32 %v1441, %v1505
      %1507 = vmatmul.f32.gmra.mxu0 %v1309
      %v1508 = vpop.f32.mrf.mxu0
      %v1509 = vadd.f32 %v1444, %v1508
      %1510 = vmatmul.f32.gmra.mxu0 %v1312
      %v1511 = vpop.f32.mrf.mxu0
      %v1512 = vadd.f32 %v1447, %v1511
      %1513 = vmatmul.f32.gmra.mxu0 %v1315
      %v1514 = vpop.f32.mrf.mxu0
      %v1515 = vadd.f32 %v1450, %v1514
      %1516 = vmatmul.f32.gmra.mxu0 %v1318
      %v1517 = vpop.f32.mrf.mxu0
      %v1518 = vadd.f32 %v1453, %v1517
      %1519 = vmatmul.f32.gmra.mxu0 %v1321
      %v1520 = vpop.f32.mrf.mxu0
      %v1521 = vadd.f32 %v1456, %v1520
      %1522 = vmatmul.f32.gmra.mxu0 %v1324
      %v1523 = vpop.f32.mrf.mxu0
      %v1524 = vadd.f32 %v1459, %v1523
      %1525 = vmatmul.f32.gmra.mxu0 %v1327
      %v1526 = vpop.f32.mrf.mxu0
      %v1527 = vadd.f32 %v1462, %v1526
      %1528 = vmatmul.f32.gmra.mxu0 %v1330
      %v1529 = vpop.f32.mrf.mxu0
      %v1530 = vadd.f32 %v1465, %v1529
      %1531 = vmatmul.f32.gmra.mxu0 %v1333
      %v1532 = vpop.f32.mrf.mxu0
      %v1533 = vadd.f32 %v1468, %v1532
      %1534 = vmatmul.f32.gmra.mxu0 %v1336
      %v1535 = vpop.f32.mrf.mxu0
      %v1536 = vadd.f32 %v1471, %v1535
      %1537 = vmatmul.f32.gmra.mxu0 %v1339
      %v1538 = vpop.f32.mrf.mxu0
      %v1539 = vadd.f32 %v1474, %v1538
      %1540 = vmatmul.f32.gmra.mxu0 %v1342
      %v1541 = vpop.f32.mrf.mxu0
      %v1542 = vadd.f32 %v1477, %v1541
      %1543 = vmatmul.f32.gmra.mxu0 %v1345
      %v1544 = vpop.f32.mrf.mxu0
      %v1545 = vadd.f32 %v1480, %v1544
      %1546 = vdwg.mxu0
      %1547 = vmatpush.msra.mxu0 %v1378
      %1548 = vmatpush.msra.mxu0 %v1376
      %1549 = vmatpush.msra.mxu0 %v1374
      %1550 = vmatpush.msra.mxu0 %v1372
      %1551 = vmatpush.msra.mxu0 %v1370
      %1552 = vmatpush.msra.mxu0 %v1368
      %1553 = vmatpush.msra.mxu0 %v1366
      %1554 = vmatpush.msra.mxu0 %v1364
      %1555 = vmatpush.msra.mxu0 %v1362
      %1556 = vmatpush.msra.mxu0 %v1360
      %1557 = vmatpush.msra.mxu0 %v1358
      %1558 = vmatpush.msra.mxu0 %v1356
      %1559 = vmatpush.msra.mxu0 %v1354
      %1560 = vmatpush.msra.mxu0 %v1352
      %1561 = vmatpush.msra.mxu0 %v1350
      %1562 = vmatpush.msra.mxu0 %v1348
      %1563 = vmatmul.f32.gmra.mxu0 %v1170
      %v1564 = vpop.f32.mrf.mxu0
      %v1565 = vadd.f32 %v1414, %v1564
      %1566 = vmatmul.f32.gmra.mxu0 %v1173
      %v1567 = vpop.f32.mrf.mxu0
      %v1568 = vadd.f32 %v1414, %v1567
      %1569 = vmatmul.f32.gmra.mxu0 %v1176
      %v1570 = vpop.f32.mrf.mxu0
      %v1571 = vadd.f32 %v1414, %v1570
      %1572 = vmatmul.f32.gmra.mxu0 %v1179
      %v1573 = vpop.f32.mrf.mxu0
      %v1574 = vadd.f32 %v1414, %v1573
      %1575 = vmatmul.f32.gmra.mxu0 %v1182
      %v1576 = vpop.f32.mrf.mxu0
      %v1577 = vadd.f32 %v1414, %v1576
      %1578 = vmatmul.f32.gmra.mxu0 %v1185
      %v1579 = vpop.f32.mrf.mxu0
      %v1580 = vadd.f32 %v1414, %v1579
      %1581 = vmatmul.f32.gmra.mxu0 %v1188
      %v1582 = vpop.f32.mrf.mxu0
      %v1583 = vadd.f32 %v1414, %v1582
      %1584 = vmatmul.f32.gmra.mxu0 %v1191
      %v1585 = vpop.f32.mrf.mxu0
      %v1586 = vadd.f32 %v1414, %v1585
      %1587 = vmatmul.f32.gmra.mxu0 %v1194
      %v1588 = vpop.f32.mrf.mxu0
      %v1589 = vadd.f32 %v1414, %v1588
      %1590 = vmatmul.f32.gmra.mxu0 %v1197
      %v1591 = vpop.f32.mrf.mxu0
      %v1592 = vadd.f32 %v1414, %v1591
      %1593 = vmatmul.f32.gmra.mxu0 %v1200
      %v1594 = vpop.f32.mrf.mxu0
      %v1595 = vadd.f32 %v1414, %v1594
      %1596 = vmatmul.f32.gmra.mxu0 %v1203
      %v1597 = vpop.f32.mrf.mxu0
      %v1598 = vadd.f32 %v1414, %v1597
      %1599 = vmatmul.f32.gmra.mxu0 %v1206
      %v1600 = vpop.f32.mrf.mxu0
      %v1601 = vadd.f32 %v1414, %v1600
      %1602 = vmatmul.f32.gmra.mxu0 %v1209
      %v1603 = vpop.f32.mrf.mxu0
      %v1604 = vadd.f32 %v1414, %v1603
      %1605 = vmatmul.f32.gmra.mxu0 %v1212
      %v1606 = vpop.f32.mrf.mxu0
      %v1607 = vadd.f32 %v1414, %v1606
      %1608 = vmatmul.f32.gmra.mxu0 %v1215
      %v1609 = vpop.f32.mrf.mxu0
      %v1610 = vadd.f32 %v1414, %v1609
      %1611 = vdwg.mxu0
      %1612 = vmatpush.msra.mxu0 %v1410
      %1613 = vmatpush.msra.mxu0 %v1408
      %1614 = vmatpush.msra.mxu0 %v1406
      %1615 = vmatpush.msra.mxu0 %v1404
      %1616 = vmatpush.msra.mxu0 %v1402
      %1617 = vmatpush.msra.mxu0 %v1400
      %1618 = vmatpush.msra.mxu0 %v1398
      %1619 = vmatpush.msra.mxu0 %v1396
      %1620 = vmatpush.msra.mxu0 %v1394
      %1621 = vmatpush.msra.mxu0 %v1392
      %1622 = vmatpush.msra.mxu0 %v1390
      %1623 = vmatpush.msra.mxu0 %v1388
      %1624 = vmatpush.msra.mxu0 %v1386
      %1625 = vmatpush.msra.mxu0 %v1384
      %1626 = vmatpush.msra.mxu0 %v1382
      %1627 = vmatpush.msra.mxu0 %v1380
      %1628 = vmatmul.f32.gmra.mxu0 %v1300
      %v1629 = vpop.f32.mrf.mxu0
      %v1630 = vadd.f32 %v1565, %v1629
      %1631 = vmatmul.f32.gmra.mxu0 %v1303
      %v1632 = vpop.f32.mrf.mxu0
      %v1633 = vadd.f32 %v1568, %v1632
      %1634 = vmatmul.f32.gmra.mxu0 %v1306
      %v1635 = vpop.f32.mrf.mxu0
      %v1636 = vadd.f32 %v1571, %v1635
      %1637 = vmatmul.f32.gmra.mxu0 %v1309
      %v1638 = vpop.f32.mrf.mxu0
      %v1639 = vadd.f32 %v1574, %v1638
      %1640 = vmatmul.f32.gmra.mxu0 %v1312
      %v1641 = vpop.f32.mrf.mxu0
      %v1642 = vadd.f32 %v1577, %v1641
      %1643 = vmatmul.f32.gmra.mxu0 %v1315
      %v1644 = vpop.f32.mrf.mxu0
      %v1645 = vadd.f32 %v1580, %v1644
      %1646 = vmatmul.f32.gmra.mxu0 %v1318
      %v1647 = vpop.f32.mrf.mxu0
      %v1648 = vadd.f32 %v1583, %v1647
      %1649 = vmatmul.f32.gmra.mxu0 %v1321
      %v1650 = vpop.f32.mrf.mxu0
      %v1651 = vadd.f32 %v1586, %v1650
      %1652 = vmatmul.f32.gmra.mxu0 %v1324
      %v1653 = vpop.f32.mrf.mxu0
      %v1654 = vadd.f32 %v1589, %v1653
      %1655 = vmatmul.f32.gmra.mxu0 %v1327
      %v1656 = vpop.f32.mrf.mxu0
      %v1657 = vadd.f32 %v1592, %v1656
      %1658 = vmatmul.f32.gmra.mxu0 %v1330
      %v1659 = vpop.f32.mrf.mxu0
      %v1660 = vadd.f32 %v1595, %v1659
      %1661 = vmatmul.f32.gmra.mxu0 %v1333
      %v1662 = vpop.f32.mrf.mxu0
      %v1663 = vadd.f32 %v1598, %v1662
      %1664 = vmatmul.f32.gmra.mxu0 %v1336
      %v1665 = vpop.f32.mrf.mxu0
      %v1666 = vadd.f32 %v1601, %v1665
      %1667 = vmatmul.f32.gmra.mxu0 %v1339
      %v1668 = vpop.f32.mrf.mxu0
      %v1669 = vadd.f32 %v1604, %v1668
      %1670 = vmatmul.f32.gmra.mxu0 %v1342
      %v1671 = vpop.f32.mrf.mxu0
      %v1672 = vadd.f32 %v1607, %v1671
      %1673 = vmatmul.f32.gmra.mxu0 %v1345
      %v1674 = vpop.f32.mrf.mxu0
      %v1675 = vadd.f32 %v1610, %v1674
      %1676 = vdwg.mxu0
      %1677 = vst [vmem:[#allocation2] sm:$0xff] %v1500
      %1678 = vst [vmem:[#allocation2 + $0x8] sm:$0xff] %v1630
      %1679 = vst [vmem:[#allocation2 + $0x10] sm:$0xff] %v1503
      %1680 = vst [vmem:[#allocation2 + $0x18] sm:$0xff] %v1633
      %1681 = vst [vmem:[#allocation2 + $0x20] sm:$0xff] %v1506
      %1682 = vst [vmem:[#allocation2 + $0x28] sm:$0xff] %v1636
      %1683 = vst [vmem:[#allocation2 + $0x30] sm:$0xff] %v1509
      %1684 = vst [vmem:[#allocation2 + $0x38] sm:$0xff] %v1639
      %1685 = vst [vmem:[#allocation2 + $0x40] sm:$0xff] %v1512
      %1686 = vst [vmem:[#allocation2 + $0x48] sm:$0xff] %v1642
      %1687 = vst [vmem:[#allocation2 + $0x50] sm:$0xff] %v1515
      %1688 = vst [vmem:[#allocation2 + $0x58] sm:$0xff] %v1645
      %1689 = vst [vmem:[#allocation2 + $0x60] sm:$0xff] %v1518
      %1690 = vst [vmem:[#allocation2 + $0x68] sm:$0xff] %v1648
      %1691 = vst [vmem:[#allocation2 + $0x70] sm:$0xff] %v1521
      %1692 = vst [vmem:[#allocation2 + $0x78] sm:$0xff] %v1651
      %1693 = vst [vmem:[#allocation2 + $0x80] sm:$0xff] %v1524
      %1694 = vst [vmem:[#allocation2 + $0x88] sm:$0xff] %v1654
      %1695 = vst [vmem:[#allocation2 + $0x90] sm:$0xff] %v1527
      %1696 = vst [vmem:[#allocation2 + $0x98] sm:$0xff] %v1657
      %1697 = vst [vmem:[#allocation2 + $0xa0] sm:$0xff] %v1530
      %1698 = vst [vmem:[#allocation2 + $0xa8] sm:$0xff] %v1660
      %1699 = vst [vmem:[#allocation2 + $0xb0] sm:$0xff] %v1533
      %1700 = vst [vmem:[#allocation2 + $0xb8] sm:$0xff] %v1663
      %1701 = vst [vmem:[#allocation2 + $0xc0] sm:$0xff] %v1536
      %1702 = vst [vmem:[#allocation2 + $0xc8] sm:$0xff] %v1666
      %1703 = vst [vmem:[#allocation2 + $0xd0] sm:$0xff] %v1539
      %1704 = vst [vmem:[#allocation2 + $0xd8] sm:$0xff] %v1669
      %1705 = vst [vmem:[#allocation2 + $0xe0] sm:$0xff] %v1542
      %1706 = vst [vmem:[#allocation2 + $0xe8] sm:$0xff] %v1672
      %1707 = vst [vmem:[#allocation2 + $0xf0] sm:$0xff] %v1545
      %1708 = vst [vmem:[#allocation2 + $0xf8] sm:$0xff] %v1675
      %v1709 = vld [vmem:[%s7] sm:$0xff]
      %v1710 = vld [vmem:[%s7 + $0x8] sm:$0xff]
      %v1711 = vld [vmem:[%s7 + $0x10] sm:$0xff]
      %v1712 = vld [vmem:[%s7 + $0x18] sm:$0xff]
      %v1713 = vld [vmem:[%s7 + $0x20] sm:$0xff]
      %v1714 = vld [vmem:[%s7 + $0x28] sm:$0xff]
      %v1715 = vld [vmem:[%s7 + $0x30] sm:$0xff]
      %v1716 = vld [vmem:[%s7 + $0x38] sm:$0xff]
      %v1717 = vld [vmem:[%s7 + $0x40] sm:$0xff]
      %v1718 = vld [vmem:[%s7 + $0x48] sm:$0xff]
      %v1719 = vld [vmem:[%s7 + $0x50] sm:$0xff]
      %v1720 = vld [vmem:[%s7 + $0x58] sm:$0xff]
      %v1721 = vld [vmem:[%s7 + $0x60] sm:$0xff]
      %v1722 = vld [vmem:[%s7 + $0x68] sm:$0xff]
      %v1723 = vld [vmem:[%s7 + $0x70] sm:$0xff]
      %v1724 = vld [vmem:[%s7 + $0x78] sm:$0xff]
      %v1725 = vld [vmem:[%s7 + $0x80] sm:$0xff]
      %v1726 = vld [vmem:[%s7 + $0x88] sm:$0xff]
      %v1727 = vld [vmem:[%s7 + $0x90] sm:$0xff]
      %v1728 = vld [vmem:[%s7 + $0x98] sm:$0xff]
      %v1729 = vld [vmem:[%s7 + $0xa0] sm:$0xff]
      %v1730 = vld [vmem:[%s7 + $0xa8] sm:$0xff]
      %v1731 = vld [vmem:[%s7 + $0xb0] sm:$0xff]
      %v1732 = vld [vmem:[%s7 + $0xb8] sm:$0xff]
      %v1733 = vld [vmem:[%s7 + $0xc0] sm:$0xff]
      %v1734 = vld [vmem:[%s7 + $0xc8] sm:$0xff]
      %v1735 = vld [vmem:[%s7 + $0xd0] sm:$0xff]
      %v1736 = vld [vmem:[%s7 + $0xd8] sm:$0xff]
      %v1737 = vld [vmem:[%s7 + $0xe0] sm:$0xff]
      %v1738 = vld [vmem:[%s7 + $0xe8] sm:$0xff]
      %v1739 = vld [vmem:[%s7 + $0xf0] sm:$0xff]
      %v1740 = vld [vmem:[%s7 + $0xf8] sm:$0xff]
      %v1741 = vld [vmem:[%s7 + $0x100] sm:$0xff]
      %v1742 = vld [vmem:[%s7 + $0x108] sm:$0xff]
      %v1743 = vld [vmem:[%s7 + $0x110] sm:$0xff]
      %v1744 = vld [vmem:[%s7 + $0x118] sm:$0xff]
      %v1745 = vld [vmem:[%s7 + $0x120] sm:$0xff]
      %v1746 = vld [vmem:[%s7 + $0x128] sm:$0xff]
      %v1747 = vld [vmem:[%s7 + $0x130] sm:$0xff]
      %v1748 = vld [vmem:[%s7 + $0x138] sm:$0xff]
      %v1749 = vld [vmem:[%s7 + $0x140] sm:$0xff]
      %v1750 = vld [vmem:[%s7 + $0x148] sm:$0xff]
      %v1751 = vld [vmem:[%s7 + $0x150] sm:$0xff]
      %v1752 = vld [vmem:[%s7 + $0x158] sm:$0xff]
      %v1753 = vld [vmem:[%s7 + $0x160] sm:$0xff]
      %v1754 = vld [vmem:[%s7 + $0x168] sm:$0xff]
      %v1755 = vld [vmem:[%s7 + $0x170] sm:$0xff]
      %v1756 = vld [vmem:[%s7 + $0x178] sm:$0xff]
      %v1757 = vld [vmem:[%s7 + $0x180] sm:$0xff]
      %v1758 = vld [vmem:[%s7 + $0x188] sm:$0xff]
      %v1759 = vld [vmem:[%s7 + $0x190] sm:$0xff]
      %v1760 = vld [vmem:[%s7 + $0x198] sm:$0xff]
      %v1761 = vld [vmem:[%s7 + $0x1a0] sm:$0xff]
      %v1762 = vld [vmem:[%s7 + $0x1a8] sm:$0xff]
      %v1763 = vld [vmem:[%s7 + $0x1b0] sm:$0xff]
      %v1764 = vld [vmem:[%s7 + $0x1b8] sm:$0xff]
      %v1765 = vld [vmem:[%s7 + $0x1c0] sm:$0xff]
      %v1766 = vld [vmem:[%s7 + $0x1c8] sm:$0xff]
      %v1767 = vld [vmem:[%s7 + $0x1d0] sm:$0xff]
      %v1768 = vld [vmem:[%s7 + $0x1d8] sm:$0xff]
      %v1769 = vld [vmem:[%s7 + $0x1e0] sm:$0xff]
      %v1770 = vld [vmem:[%s7 + $0x1e8] sm:$0xff]
      %v1771 = vld [vmem:[%s7 + $0x1f0] sm:$0xff]
      %v1772 = vld [vmem:[%s7 + $0x1f8] sm:$0xff]
      %1773 = vmatpush.msra.mxu0 %v1739
      %1774 = vmatpush.msra.mxu0 %v1737
      %1775 = vmatpush.msra.mxu0 %v1735
      %1776 = vmatpush.msra.mxu0 %v1733
      %1777 = vmatpush.msra.mxu0 %v1731
      %1778 = vmatpush.msra.mxu0 %v1729
      %1779 = vmatpush.msra.mxu0 %v1727
      %1780 = vmatpush.msra.mxu0 %v1725
      %1781 = vmatpush.msra.mxu0 %v1723
      %1782 = vmatpush.msra.mxu0 %v1721
      %1783 = vmatpush.msra.mxu0 %v1719
      %1784 = vmatpush.msra.mxu0 %v1717
      %1785 = vmatpush.msra.mxu0 %v1715
      %1786 = vmatpush.msra.mxu0 %v1713
      %1787 = vmatpush.msra.mxu0 %v1711
      %1788 = vmatpush.msra.mxu0 %v1709
      %1789 = vmatmul.f32.gmra.mxu0 %v1170
      %v1790 = vpop.f32.mrf.mxu0
      %v1791 = vadd.f32 0.0, %v1790
      %1792 = vmatmul.f32.gmra.mxu0 %v1173
      %v1793 = vpop.f32.mrf.mxu0
      %v1794 = vadd.f32 0.0, %v1793
      %1795 = vdwg.mxu0
      %1796 = vmatpush.msra.mxu0 %v1771
      %1797 = vmatpush.msra.mxu0 %v1769
      %1798 = vmatpush.msra.mxu0 %v1767
      %1799 = vmatpush.msra.mxu0 %v1765
      %1800 = vmatpush.msra.mxu0 %v1763
      %1801 = vmatpush.msra.mxu0 %v1761
      %1802 = vmatpush.msra.mxu0 %v1759
      %1803 = vmatpush.msra.mxu0 %v1757
      %1804 = vmatpush.msra.mxu0 %v1755
      %1805 = vmatpush.msra.mxu0 %v1753
      %1806 = vmatpush.msra.mxu0 %v1751
      %1807 = vmatpush.msra.mxu0 %v1749
      %1808 = vmatpush.msra.mxu0 %v1747
      %1809 = vmatpush.msra.mxu0 %v1745
      %1810 = vmatpush.msra.mxu0 %v1743
      %1811 = vmatpush.msra.mxu0 %v1741
      %1812 = vmatmul.f32.gmra.mxu0 %v1300
      %v1813 = vpop.f32.mrf.mxu0
      %v1814 = vadd.f32 %v1791, %v1813
      %1815 = vmatmul.f32.gmra.mxu0 %v1303
      %v1816 = vpop.f32.mrf.mxu0
      %v1817 = vadd.f32 %v1794, %v1816
      %1818 = vdwg.mxu0
      %1819 = vmatpush.msra.mxu0 %v1740
      %1820 = vmatpush.msra.mxu0 %v1738
      %1821 = vmatpush.msra.mxu0 %v1736
      %1822 = vmatpush.msra.mxu0 %v1734
      %1823 = vmatpush.msra.mxu0 %v1732
      %1824 = vmatpush.msra.mxu0 %v1730
      %1825 = vmatpush.msra.mxu0 %v1728
      %1826 = vmatpush.msra.mxu0 %v1726
      %1827 = vmatpush.msra.mxu0 %v1724
      %1828 = vmatpush.msra.mxu0 %v1722
      %1829 = vmatpush.msra.mxu0 %v1720
      %1830 = vmatpush.msra.mxu0 %v1718
      %1831 = vmatpush.msra.mxu0 %v1716
      %1832 = vmatpush.msra.mxu0 %v1714
      %1833 = vmatpush.msra.mxu0 %v1712
      %1834 = vmatpush.msra.mxu0 %v1710
      %1835 = vmatmul.f32.gmra.mxu0 %v1170
      %v1836 = vpop.f32.mrf.mxu0
      %v1837 = vadd.f32 0.0, %v1836
      %1838 = vmatmul.f32.gmra.mxu0 %v1173
      %v1839 = vpop.f32.mrf.mxu0
      %v1840 = vadd.f32 0.0, %v1839
      %1841 = vdwg.mxu0
      %1842 = vmatpush.msra.mxu0 %v1772
      %1843 = vmatpush.msra.mxu0 %v1770
      %1844 = vmatpush.msra.mxu0 %v1768
      %1845 = vmatpush.msra.mxu0 %v1766
      %1846 = vmatpush.msra.mxu0 %v1764
      %1847 = vmatpush.msra.mxu0 %v1762
      %1848 = vmatpush.msra.mxu0 %v1760
      %1849 = vmatpush.msra.mxu0 %v1758
      %1850 = vmatpush.msra.mxu0 %v1756
      %1851 = vmatpush.msra.mxu0 %v1754
      %1852 = vmatpush.msra.mxu0 %v1752
      %1853 = vmatpush.msra.mxu0 %v1750
      %1854 = vmatpush.msra.mxu0 %v1748
      %1855 = vmatpush.msra.mxu0 %v1746
      %1856 = vmatpush.msra.mxu0 %v1744
      %1857 = vmatpush.msra.mxu0 %v1742
      %1858 = vmatmul.f32.gmra.mxu0 %v1300
      %v1859 = vpop.f32.mrf.mxu0
      %v1860 = vadd.f32 %v1837, %v1859
      %1861 = vmatmul.f32.gmra.mxu0 %v1303
      %v1862 = vpop.f32.mrf.mxu0
      %v1863 = vadd.f32 %v1840, %v1862
      %1864 = vdwg.mxu0
      %1865 = vst [vmem:[#allocation3] sm:$0xff] %v1814
      %1866 = vst [vmem:[#allocation3 + $0x8] sm:$0xff] %v1860
      %1867 = vst [vmem:[#allocation3 + $0x10] sm:$0xff] %v1817
      %1868 = vst [vmem:[#allocation3 + $0x18] sm:$0xff] %v1863
      %v1869 = vld [vmem:[%s8] sm:$0xff]
      %v1870 = vld [vmem:[%s8 + $0x8] sm:$0xff]
      %v1871 = vld [vmem:[%s8 + $0x10] sm:$0xff]
      %v1872 = vld [vmem:[%s8 + $0x18] sm:$0xff]
      %v1873 = vld [vmem:[%s8 + $0x20] sm:$0xff]
      %v1874 = vld [vmem:[%s8 + $0x28] sm:$0xff]
      %v1875 = vld [vmem:[%s8 + $0x30] sm:$0xff]
      %v1876 = vld [vmem:[%s8 + $0x38] sm:$0xff]
      %v1877 = vld [vmem:[%s8 + $0x40] sm:$0xff]
      %v1878 = vld [vmem:[%s8 + $0x48] sm:$0xff]
      %v1879 = vld [vmem:[%s8 + $0x50] sm:$0xff]
      %v1880 = vld [vmem:[%s8 + $0x58] sm:$0xff]
      %v1881 = vld [vmem:[%s8 + $0x60] sm:$0xff]
      %v1882 = vld [vmem:[%s8 + $0x68] sm:$0xff]
      %v1883 = vld [vmem:[%s8 + $0x70] sm:$0xff]
      %v1884 = vld [vmem:[%s8 + $0x78] sm:$0xff]
      %v1885 = vld [vmem:[%s8 + $0x80] sm:$0xff]
      %v1886 = vld [vmem:[%s8 + $0x88] sm:$0xff]
      %v1887 = vld [vmem:[%s8 + $0x90] sm:$0xff]
      %v1888 = vld [vmem:[%s8 + $0x98] sm:$0xff]
      %v1889 = vld [vmem:[%s8 + $0xa0] sm:$0xff]
      %v1890 = vld [vmem:[%s8 + $0xa8] sm:$0xff]
      %v1891 = vld [vmem:[%s8 + $0xb0] sm:$0xff]
      %v1892 = vld [vmem:[%s8 + $0xb8] sm:$0xff]
      %v1893 = vld [vmem:[%s8 + $0xc0] sm:$0xff]
      %v1894 = vld [vmem:[%s8 + $0xc8] sm:$0xff]
      %v1895 = vld [vmem:[%s8 + $0xd0] sm:$0xff]
      %v1896 = vld [vmem:[%s8 + $0xd8] sm:$0xff]
      %v1897 = vld [vmem:[%s8 + $0xe0] sm:$0xff]
      %v1898 = vld [vmem:[%s8 + $0xe8] sm:$0xff]
      %v1899 = vld [vmem:[%s8 + $0xf0] sm:$0xff]
      %v1900 = vld [vmem:[%s8 + $0xf8] sm:$0xff]
      %v1901 = vld [vmem:[%s8 + $0x100] sm:$0xff]
      %v1902 = vld [vmem:[%s8 + $0x108] sm:$0xff]
      %v1903 = vld [vmem:[%s8 + $0x110] sm:$0xff]
      %v1904 = vld [vmem:[%s8 + $0x118] sm:$0xff]
      %v1905 = vld [vmem:[%s8 + $0x120] sm:$0xff]
      %v1906 = vld [vmem:[%s8 + $0x128] sm:$0xff]
      %v1907 = vld [vmem:[%s8 + $0x130] sm:$0xff]
      %v1908 = vld [vmem:[%s8 + $0x138] sm:$0xff]
      %v1909 = vld [vmem:[%s8 + $0x140] sm:$0xff]
      %v1910 = vld [vmem:[%s8 + $0x148] sm:$0xff]
      %v1911 = vld [vmem:[%s8 + $0x150] sm:$0xff]
      %v1912 = vld [vmem:[%s8 + $0x158] sm:$0xff]
      %v1913 = vld [vmem:[%s8 + $0x160] sm:$0xff]
      %v1914 = vld [vmem:[%s8 + $0x168] sm:$0xff]
      %v1915 = vld [vmem:[%s8 + $0x170] sm:$0xff]
      %v1916 = vld [vmem:[%s8 + $0x178] sm:$0xff]
      %v1917 = vld [vmem:[%s8 + $0x180] sm:$0xff]
      %v1918 = vld [vmem:[%s8 + $0x188] sm:$0xff]
      %v1919 = vld [vmem:[%s8 + $0x190] sm:$0xff]
      %v1920 = vld [vmem:[%s8 + $0x198] sm:$0xff]
      %v1921 = vld [vmem:[%s8 + $0x1a0] sm:$0xff]
      %v1922 = vld [vmem:[%s8 + $0x1a8] sm:$0xff]
      %v1923 = vld [vmem:[%s8 + $0x1b0] sm:$0xff]
      %v1924 = vld [vmem:[%s8 + $0x1b8] sm:$0xff]
      %v1925 = vld [vmem:[%s8 + $0x1c0] sm:$0xff]
      %v1926 = vld [vmem:[%s8 + $0x1c8] sm:$0xff]
      %v1927 = vld [vmem:[%s8 + $0x1d0] sm:$0xff]
      %v1928 = vld [vmem:[%s8 + $0x1d8] sm:$0xff]
      %v1929 = vld [vmem:[%s8 + $0x1e0] sm:$0xff]
      %v1930 = vld [vmem:[%s8 + $0x1e8] sm:$0xff]
      %v1931 = vld [vmem:[%s8 + $0x1f0] sm:$0xff]
      %v1932 = vld [vmem:[%s8 + $0x1f8] sm:$0xff]
      %v1933 = vld [vmem:[%s9] sm:$0x3]
      %v1935 = vperm.slane %v1933, 0
      %v1936 = vperm.slane %v1933, 1
      %1939 = vmatpush.msra.mxu0 %v1899
      %1940 = vmatpush.msra.mxu0 %v1897
      %1941 = vmatpush.msra.mxu0 %v1895
      %1942 = vmatpush.msra.mxu0 %v1893
      %1943 = vmatpush.msra.mxu0 %v1891
      %1944 = vmatpush.msra.mxu0 %v1889
      %1945 = vmatpush.msra.mxu0 %v1887
      %1946 = vmatpush.msra.mxu0 %v1885
      %1947 = vmatpush.msra.mxu0 %v1883
      %1948 = vmatpush.msra.mxu0 %v1881
      %1949 = vmatpush.msra.mxu0 %v1879
      %1950 = vmatpush.msra.mxu0 %v1877
      %1951 = vmatpush.msra.mxu0 %v1875
      %1952 = vmatpush.msra.mxu0 %v1873
      %1953 = vmatpush.msra.mxu0 %v1871
      %1954 = vmatpush.msra.mxu0 %v1869
      %1955 = vmatmul.f32.gmra.mxu0 %v1814
      %v1956 = vpop.f32.mrf.mxu0
      %v1957 = vadd.f32 %v1935, %v1956
      %1958 = vmatmul.f32.gmra.mxu0 %v1817
      %v1959 = vpop.f32.mrf.mxu0
      %v1960 = vadd.f32 %v1935, %v1959
      %1961 = vdwg.mxu0
      %1962 = vmatpush.msra.mxu0 %v1931
      %1963 = vmatpush.msra.mxu0 %v1929
      %1964 = vmatpush.msra.mxu0 %v1927
      %1965 = vmatpush.msra.mxu0 %v1925
      %1966 = vmatpush.msra.mxu0 %v1923
      %1967 = vmatpush.msra.mxu0 %v1921
      %1968 = vmatpush.msra.mxu0 %v1919
      %1969 = vmatpush.msra.mxu0 %v1917
      %1970 = vmatpush.msra.mxu0 %v1915
      %1971 = vmatpush.msra.mxu0 %v1913
      %1972 = vmatpush.msra.mxu0 %v1911
      %1973 = vmatpush.msra.mxu0 %v1909
      %1974 = vmatpush.msra.mxu0 %v1907
      %1975 = vmatpush.msra.mxu0 %v1905
      %1976 = vmatpush.msra.mxu0 %v1903
      %1977 = vmatpush.msra.mxu0 %v1901
      %1978 = vmatmul.f32.gmra.mxu0 %v1860
      %v1979 = vpop.f32.mrf.mxu0
      %v1980 = vadd.f32 %v1957, %v1979
      %1981 = vmatmul.f32.gmra.mxu0 %v1863
      %v1982 = vpop.f32.mrf.mxu0
      %v1983 = vadd.f32 %v1960, %v1982
      %1984 = vdwg.mxu0
      %1985 = vmatpush.msra.mxu0 %v1900
      %1986 = vmatpush.msra.mxu0 %v1898
      %1987 = vmatpush.msra.mxu0 %v1896
      %1988 = vmatpush.msra.mxu0 %v1894
      %1989 = vmatpush.msra.mxu0 %v1892
      %1990 = vmatpush.msra.mxu0 %v1890
      %1991 = vmatpush.msra.mxu0 %v1888
      %1992 = vmatpush.msra.mxu0 %v1886
      %1993 = vmatpush.msra.mxu0 %v1884
      %1994 = vmatpush.msra.mxu0 %v1882
      %1995 = vmatpush.msra.mxu0 %v1880
      %1996 = vmatpush.msra.mxu0 %v1878
      %1997 = vmatpush.msra.mxu0 %v1876
      %1998 = vmatpush.msra.mxu0 %v1874
      %1999 = vmatpush.msra.mxu0 %v1872
      %2000 = vmatpush.msra.mxu0 %v1870
      %2001 = vmatmul.f32.gmra.mxu0 %v1814
      %v2002 = vpop.f32.mrf.mxu0
      %v2003 = vadd.f32 %v1936, %v2002
      %2004 = vmatmul.f32.gmra.mxu0 %v1817
      %v2005 = vpop.f32.mrf.mxu0
      %v2006 = vadd.f32 %v1936, %v2005
      %2007 = vdwg.mxu0
      %2008 = vmatpush.msra.mxu0 %v1932
      %2009 = vmatpush.msra.mxu0 %v1930
      %2010 = vmatpush.msra.mxu0 %v1928
      %2011 = vmatpush.msra.mxu0 %v1926
      %2012 = vmatpush.msra.mxu0 %v1924
      %2013 = vmatpush.msra.mxu0 %v1922
      %2014 = vmatpush.msra.mxu0 %v1920
      %2015 = vmatpush.msra.mxu0 %v1918
      %2016 = vmatpush.msra.mxu0 %v1916
      %2017 = vmatpush.msra.mxu0 %v1914
      %2018 = vmatpush.msra.mxu0 %v1912
      %2019 = vmatpush.msra.mxu0 %v1910
      %2020 = vmatpush.msra.mxu0 %v1908
      %2021 = vmatpush.msra.mxu0 %v1906
      %2022 = vmatpush.msra.mxu0 %v1904
      %2023 = vmatpush.msra.mxu0 %v1902
      %2024 = vmatmul.f32.gmra.mxu0 %v1860
      %v2025 = vpop.f32.mrf.mxu0
      %v2026 = vadd.f32 %v2003, %v2025
      %2027 = vmatmul.f32.gmra.mxu0 %v1863
      %v2028 = vpop.f32.mrf.mxu0
      %v2029 = vadd.f32 %v2006, %v2028
      %2030 = vdwg.mxu0
      %v2031 = vtanh.pop %v1980
      %v2032 = vtanh.pop %v2026
      %v2033 = vtanh.pop %v1983
      %v2034 = vtanh.pop %v2029
      %v2035 = vadd.f32 %v1814, %v2031
      %v2036 = vadd.f32 %v1860, %v2032
      %v2037 = vadd.f32 %v1817, %v2033
      %v2038 = vadd.f32 %v1863, %v2034
      %v2039 = vld [vmem:[#allocation2 + $0x20] sm:$0xff]
      %v2040 = vld [vmem:[#allocation2 + $0x28] sm:$0xff]
      %v2041 = vld [vmem:[#allocation2 + $0x30] sm:$0xff]
      %v2042 = vld [vmem:[#allocation2 + $0x38] sm:$0xff]
      %v2043 = vld [vmem:[%s10] sm:$0xff]
      %v2044 = vld [vmem:[%s10 + $0x8] sm:$0xff]
      %v2045 = vld [vmem:[%s10 + $0x10] sm:$0xff]
      %v2046 = vld [vmem:[%s10 + $0x18] sm:$0xff]
      %v2047 = vld [vmem:[%s10 + $0x20] sm:$0xff]
      %v2048 = vld [vmem:[%s10 + $0x28] sm:$0xff]
      %v2049 = vld [vmem:[%s10 + $0x30] sm:$0xff]
      %v2050 = vld [vmem:[%s10 + $0x38] sm:$0xff]
      %v2051 = vld [vmem:[%s10 + $0x40] sm:$0xff]
      %v2052 = vld [vmem:[%s10 + $0x48] sm:$0xff]
      %v2053 = vld [vmem:[%s10 + $0x50] sm:$0xff]
      %v2054 = vld [vmem:[%s10 + $0x58] sm:$0xff]
      %v2055 = vld [vmem:[%s10 + $0x60] sm:$0xff]
      %v2056 = vld [vmem:[%s10 + $0x68] sm:$0xff]
      %v2057 = vld [vmem:[%s10 + $0x70] sm:$0xff]
      %v2058 = vld [vmem:[%s10 + $0x78] sm:$0xff]
      %v2059 = vld [vmem:[%s10 + $0x80] sm:$0xff]
      %v2060 = vld [vmem:[%s10 + $0x88] sm:$0xff]
      %v2061 = vld [vmem:[%s10 + $0x90] sm:$0xff]
      %v2062 = vld [vmem:[%s10 + $0x98] sm:$0xff]
      %v2063 = vld [vmem:[%s10 + $0xa0] sm:$0xff]
      %v2064 = vld [vmem:[%s10 + $0xa8] sm:$0xff]
      %v2065 = vld [vmem:[%s10 + $0xb0] sm:$0xff]
      %v2066 = vld [vmem:[%s10 + $0xb8] sm:$0xff]
      %v2067 = vld [vmem:[%s10 + $0xc0] sm:$0xff]
      %v2068 = vld [vmem:[%s10 + $0xc8] sm:$0xff]
      %v2069 = vld [vmem:[%s10 + $0xd0] sm:$0xff]
      %v2070 = vld [vmem:[%s10 + $0xd8] sm:$0xff]
      %v2071 = vld [vmem:[%s10 + $0xe0] sm:$0xff]
      %v2072 = vld [vmem:[%s10 + $0xe8] sm:$0xff]
      %v2073 = vld [vmem:[%s10 + $0xf0] sm:$0xff]
      %v2074 = vld [vmem:[%s10 + $0xf8] sm:$0xff]
      %v2075 = vld [vmem:[%s10 + $0x100] sm:$0xff]
      %v2076 = vld [vmem:[%s10 + $0x108] sm:$0xff]
      %v2077 = vld [vmem:[%s10 + $0x110] sm:$0xff]
      %v2078 = vld [vmem:[%s10 + $0x118] sm:$0xff]
      %v2079 = vld [vmem:[%s10 + $0x120] sm:$0xff]
      %v2080 = vld [vmem:[%s10 + $0x128] sm:$0xff]
      %v2081 = vld [vmem:[%s10 + $0x130] sm:$0xff]
      %v2082 = vld [vmem:[%s10 + $0x138] sm:$0xff]
      %v2083 = vld [vmem:[%s10 + $0x140] sm:$0xff]
      %v2084 = vld [vmem:[%s10 + $0x148] sm:$0xff]
      %v2085 = vld [vmem:[%s10 + $0x150] sm:$0xff]
      %v2086 = vld [vmem:[%s10 + $0x158] sm:$0xff]
      %v2087 = vld [vmem:[%s10 + $0x160] sm:$0xff]
      %v2088 = vld [vmem:[%s10 + $0x168] sm:$0xff]
      %v2089 = vld [vmem:[%s10 + $0x170] sm:$0xff]
      %v2090 = vld [vmem:[%s10 + $0x178] sm:$0xff]
      %v2091 = vld [vmem:[%s10 + $0x180] sm:$0xff]
      %v2092 = vld [vmem:[%s10 + $0x188] sm:$0xff]
      %v2093 = vld [vmem:[%s10 + $0x190] sm:$0xff]
      %v2094 = vld [vmem:[%s10 + $0x198] sm:$0xff]
      %v2095 = vld [vmem:[%s10 + $0x1a0] sm:$0xff]
      %v2096 = vld [vmem:[%s10 + $0x1a8] sm:$0xff]
      %v2097 = vld [vmem:[%s10 + $0x1b0] sm:$0xff]
      %v2098 = vld [vmem:[%s10 + $0x1b8] sm:$0xff]
      %v2099 = vld [vmem:[%s10 + $0x1c0] sm:$0xff]
      %v2100 = vld [vmem:[%s10 + $0x1c8] sm:$0xff]
      %v2101 = vld [vmem:[%s10 + $0x1d0] sm:$0xff]
      %v2102 = vld [vmem:[%s10 + $0x1d8] sm:$0xff]
      %v2103 = vld [vmem:[%s10 + $0x1e0] sm:$0xff]
      %v2104 = vld [vmem:[%s10 + $0x1e8] sm:$0xff]
      %v2105 = vld [vmem:[%s10 + $0x1f0] sm:$0xff]
      %v2106 = vld [vmem:[%s10 + $0x1f8] sm:$0xff]
      %2107 = vmatpush.msra.mxu0 %v2073
      %2108 = vmatpush.msra.mxu0 %v2071
      %2109 = vmatpush.msra.mxu0 %v2069
      %2110 = vmatpush.msra.mxu0 %v2067
      %2111 = vmatpush.msra.mxu0 %v2065
      %2112 = vmatpush.msra.mxu0 %v2063
      %2113 = vmatpush.msra.mxu0 %v2061
      %2114 = vmatpush.msra.mxu0 %v2059
      %2115 = vmatpush.msra.mxu0 %v2057
      %2116 = vmatpush.msra.mxu0 %v2055
      %2117 = vmatpush.msra.mxu0 %v2053
      %2118 = vmatpush.msra.mxu0 %v2051
      %2119 = vmatpush.msra.mxu0 %v2049
      %2120 = vmatpush.msra.mxu0 %v2047
      %2121 = vmatpush.msra.mxu0 %v2045
      %2122 = vmatpush.msra.mxu0 %v2043
      %2123 = vmatmul.f32.gmra.mxu0 %v2035
      %v2124 = vpop.f32.mrf.mxu0
      %v2125 = vadd.f32 0.0, %v2124
      %2126 = vmatmul.f32.gmra.mxu0 %v2037
      %v2127 = vpop.f32.mrf.mxu0
      %v2128 = vadd.f32 0.0, %v2127
      %2129 = vdwg.mxu0
      %2130 = vmatpush.msra.mxu0 %v2105
      %2131 = vmatpush.msra.mxu0 %v2103
      %2132 = vmatpush.msra.mxu0 %v2101
      %2133 = vmatpush.msra.mxu0 %v2099
      %2134 = vmatpush.msra.mxu0 %v2097
      %2135 = vmatpush.msra.mxu0 %v2095
      %2136 = vmatpush.msra.mxu0 %v2093
      %2137 = vmatpush.msra.mxu0 %v2091
      %2138 = vmatpush.msra.mxu0 %v2089
      %2139 = vmatpush.msra.mxu0 %v2087
      %2140 = vmatpush.msra.mxu0 %v2085
      %2141 = vmatpush.msra.mxu0 %v2083
      %2142 = vmatpush.msra.mxu0 %v2081
      %2143 = vmatpush.msra.mxu0 %v2079
      %2144 = vmatpush.msra.mxu0 %v2077
      %2145 = vmatpush.msra.mxu0 %v2075
      %2146 = vmatmul.f32.gmra.mxu0 %v2036
      %v2147 = vpop.f32.mrf.mxu0
      %v2148 = vadd.f32 %v2125, %v2147
      %2149 = vmatmul.f32.gmra.mxu0 %v2038
      %v2150 = vpop.f32.mrf.mxu0
      %v2151 = vadd.f32 %v2128, %v2150
      %2152 = vdwg.mxu0
      %2153 = vmatpush.msra.mxu0 %v2074
      %2154 = vmatpush.msra.mxu0 %v2072
      %2155 = vmatpush.msra.mxu0 %v2070
      %2156 = vmatpush.msra.mxu0 %v2068
      %2157 = vmatpush.msra.mxu0 %v2066
      %2158 = vmatpush.msra.mxu0 %v2064
      %2159 = vmatpush.msra.mxu0 %v2062
      %2160 = vmatpush.msra.mxu0 %v2060
      %2161 = vmatpush.msra.mxu0 %v2058
      %2162 = vmatpush.msra.mxu0 %v2056
      %2163 = vmatpush.msra.mxu0 %v2054
      %2164 = vmatpush.msra.mxu0 %v2052
      %2165 = vmatpush.msra.mxu0 %v2050
      %2166 = vmatpush.msra.mxu0 %v2048
      %2167 = vmatpush.msra.mxu0 %v2046
      %2168 = vmatpush.msra.mxu0 %v2044
      %2169 = vmatmul.f32.gmra.mxu0 %v2035
      %v2170 = vpop.f32.mrf.mxu0
      %v2171 = vadd.f32 0.0, %v2170
      %2172 = vmatmul.f32.gmra.mxu0 %v2037
      %v2173 = vpop.f32.mrf.mxu0
      %v2174 = vadd.f32 0.0, %v2173
      %2175 = vdwg.mxu0
      %2176 = vmatpush.msra.mxu0 %v2106
      %2177 = vmatpush.msra.mxu0 %v2104
      %2178 = vmatpush.msra.mxu0 %v2102
      %2179 = vmatpush.msra.mxu0 %v2100
      %2180 = vmatpush.msra.mxu0 %v2098
      %2181 = vmatpush.msra.mxu0 %v2096
      %2182 = vmatpush.msra.mxu0 %v2094
      %2183 = vmatpush.msra.mxu0 %v2092
      %2184 = vmatpush.msra.mxu0 %v2090
      %2185 = vmatpush.msra.mxu0 %v2088
      %2186 = vmatpush.msra.mxu0 %v2086
      %2187 = vmatpush.msra.mxu0 %v2084
      %2188 = vmatpush.msra.mxu0 %v2082
      %2189 = vmatpush.msra.mxu0 %v2080
      %2190 = vmatpush.msra.mxu0 %v2078
      %2191 = vmatpush.msra.mxu0 %v2076
      %2192 = vmatmul.f32.gmra.mxu0 %v2036
      %v2193 = vpop.f32.mrf.mxu0
      %v2194 = vadd.f32 %v2171, %v2193
      %2195 = vmatmul.f32.gmra.mxu0 %v2038
      %v2196 = vpop.f32.mrf.mxu0
      %v2197 = vadd.f32 %v2174, %v2196
      %2198 = vdwg.mxu0
      %v2199 = vadd.f32 %v2039, %v2148
      %v2200 = vadd.f32 %v2040, %v2194
      %v2201 = vadd.f32 %v2041, %v2151
      %v2202 = vadd.f32 %v2042, %v2197
      %v2203 = vtanh.pop %v2199
      %v2204 = vtanh.pop %v2200
      %v2205 = vtanh.pop %v2201
      %v2206 = vtanh.pop %v2202
      %2207 = vst [vmem:[#allocation3 + $0x20] sm:$0xff] %v2203
      %2208 = vst [vmem:[#allocation3 + $0x28] sm:$0xff] %v2204
      %2209 = vst [vmem:[#allocation3 + $0x30] sm:$0xff] %v2205
      %2210 = vst [vmem:[#allocation3 + $0x38] sm:$0xff] %v2206
      %v2211 = vld [vmem:[%s8] sm:$0xff]
      %v2212 = vld [vmem:[%s8 + $0x8] sm:$0xff]
      %v2213 = vld [vmem:[%s8 + $0x10] sm:$0xff]
      %v2214 = vld [vmem:[%s8 + $0x18] sm:$0xff]
      %v2215 = vld [vmem:[%s8 + $0x20] sm:$0xff]
      %v2216 = vld [vmem:[%s8 + $0x28] sm:$0xff]
      %v2217 = vld [vmem:[%s8 + $0x30] sm:$0xff]
      %v2218 = vld [vmem:[%s8 + $0x38] sm:$0xff]
      %v2219 = vld [vmem:[%s8 + $0x40] sm:$0xff]
      %v2220 = vld [vmem:[%s8 + $0x48] sm:$0xff]
      %v2221 = vld [vmem:[%s8 + $0x50] sm:$0xff]
      %v2222 = vld [vmem:[%s8 + $0x58] sm:$0xff]
      %v2223 = vld [vmem:[%s8 + $0x60] sm:$0xff]
      %v2224 = vld [vmem:[%s8 + $0x68] sm:$0xff]
      %v2225 = vld [vmem:[%s8 + $0x70] sm:$0xff]
      %v2226 = vld [vmem:[%s8 + $0x78] sm:$0xff]
      %v2227 = vld [vmem:[%s8 + $0x80] sm:$0xff]
      %v2228 = vld [vmem:[%s8 + $0x88] sm:$0xff]
      %v2229 = vld [vmem:[%s8 + $0x90] sm:$0xff]
      %v2230 = vld [vmem:[%s8 + $0x98] sm:$0xff]
      %v2231 = vld [vmem:[%s8 + $0xa0] sm:$0xff]
      %v2232 = vld [vmem:[%s8 + $0xa8] sm:$0xff]
      %v2233 = vld [vmem:[%s8 + $0xb0] sm:$0xff]
      %v2234 = vld [vmem:[%s8 + $0xb8] sm:$0xff]
      %v2235 = vld [vmem:[%s8 + $0xc0] sm:$0xff]
      %v2236 = vld [vmem:[%s8 + $0xc8] sm:$0xff]
      %v2237 = vld [vmem:[%s8 + $0xd0] sm:$0xff]
      %v2238 = vld [vmem:[%s8 + $0xd8] sm:$0xff]
      %v2239 = vld [vmem:[%s8 + $0xe0] sm:$0xff]
      %v2240 = vld [vmem:[%s8 + $0xe8] sm:$0xff]
      %v2241 = vld [vmem:[%s8 + $0xf0] sm:$0xff]
      %v2242 = vld [vmem:[%s8 + $0xf8] sm:$0xff]
      %v2243 = vld [vmem:[%s8 + $0x100] sm:$0xff]
      %v2244 = vld [vmem:[%s8 + $0x108] sm:$0xff]
      %v2245 = vld [vmem:[%s8 + $0x110] sm:$0xff]
      %v2246 = vld [vmem:[%s8 + $0x118] sm:$0xff]
      %v2247 = vld [vmem:[%s8 + $0x120] sm:$0xff]
      %v2248 = vld [vmem:[%s8 + $0x128] sm:$0xff]
      %v2249 = vld [vmem:[%s8 + $0x130] sm:$0xff]
      %v2250 = vld [vmem:[%s8 + $0x138] sm:$0xff]
      %v2251 = vld [vmem:[%s8 + $0x140] sm:$0xff]
      %v2252 = vld [vmem:[%s8 + $0x148] sm:$0xff]
      %v2253 = vld [vmem:[%s8 + $0x150] sm:$0xff]
      %v2254 = vld [vmem:[%s8 + $0x158] sm:$0xff]
      %v2255 = vld [vmem:[%s8 + $0x160] sm:$0xff]
      %v2256 = vld [vmem:[%s8 + $0x168] sm:$0xff]
      %v2257 = vld [vmem:[%s8 + $0x170] sm:$0xff]
      %v2258 = vld [vmem:[%s8 + $0x178] sm:$0xff]
      %v2259 = vld [vmem:[%s8 + $0x180] sm:$0xff]
      %v2260 = vld [vmem:[%s8 + $0x188] sm:$0xff]
      %v2261 = vld [vmem:[%s8 + $0x190] sm:$0xff]
      %v2262 = vld [vmem:[%s8 + $0x198] sm:$0xff]
      %v2263 = vld [vmem:[%s8 + $0x1a0] sm:$0xff]
      %v2264 = vld [vmem:[%s8 + $0x1a8] sm:$0xff]
      %v2265 = vld [vmem:[%s8 + $0x1b0] sm:$0xff]
      %v2266 = vld [vmem:[%s8 + $0x1b8] sm:$0xff]
      %v2267 = vld [vmem:[%s8 + $0x1c0] sm:$0xff]
      %v2268 = vld [vmem:[%s8 + $0x1c8] sm:$0xff]
      %v2269 = vld [vmem:[%s8 + $0x1d0] sm:$0xff]
      %v2270 = vld [vmem:[%s8 + $0x1d8] sm:$0xff]
      %v2271 = vld [vmem:[%s8 + $0x1e0] sm:$0xff]
      %v2272 = vld [vmem:[%s8 + $0x1e8] sm:$0xff]
      %v2273 = vld [vmem:[%s8 + $0x1f0] sm:$0xff]
      %v2274 = vld [vmem:[%s8 + $0x1f8] sm:$0xff]
      %v2275 = vld [vmem:[%s9] sm:$0x3]
      %v2277 = vperm.slane %v2275, 0
      %v2278 = vperm.slane %v2275, 1
      %2281 = vmatpush.msra.mxu0 %v2241
      %2282 = vmatpush.msra.mxu0 %v2239
      %2283 = vmatpush.msra.mxu0 %v2237
      %2284 = vmatpush.msra.mxu0 %v2235
      %2285 = vmatpush.msra.mxu0 %v2233
      %2286 = vmatpush.msra.mxu0 %v2231
      %2287 = vmatpush.msra.mxu0 %v2229
      %2288 = vmatpush.msra.mxu0 %v2227
      %2289 = vmatpush.msra.mxu0 %v2225
      %2290 = vmatpush.msra.mxu0 %v2223
      %2291 = vmatpush.msra.mxu0 %v2221
      %2292 = vmatpush.msra.mxu0 %v2219
      %2293 = vmatpush.msra.mxu0 %v2217
      %2294 = vmatpush.msra.mxu0 %v2215
      %2295 = vmatpush.msra.mxu0 %v2213
      %2296 = vmatpush.msra.mxu0 %v2211
      %2297 = vmatmul.f32.gmra.mxu0 %v2203
      %v2298 = vpop.f32.mrf.mxu0
      %v2299 = vadd.f32 %v2277, %v2298
      %2300 = vmatmul.f32.gmra.mxu0 %v2205
      %v2301 = vpop.f32.mrf.mxu0
      %v2302 = vadd.f32 %v2277, %v2301
      %2303 = vdwg.mxu0
      %2304 = vmatpush.msra.mxu0 %v2273
      %2305 = vmatpush.msra.mxu0 %v2271
      %2306 = vmatpush.msra.mxu0 %v2269
      %2307 = vmatpush.msra.mxu0 %v2267
      %2308 = vmatpush.msra.mxu0 %v2265
      %2309 = vmatpush.msra.mxu0 %v2263
      %2310 = vmatpush.msra.mxu0 %v2261
      %2311 = vmatpush.msra.mxu0 %v2259
      %2312 = vmatpush.msra.mxu0 %v2257
      %2313 = vmatpush.msra.mxu0 %v2255
      %2314 = vmatpush.msra.mxu0 %v2253
      %2315 = vmatpush.msra.mxu0 %v2251
      %2316 = vmatpush.msra.mxu0 %v2249
      %2317 = vmatpush.msra.mxu0 %v2247
      %2318 = vmatpush.msra.mxu0 %v2245
      %2319 = vmatpush.msra.mxu0 %v2243
      %2320 = vmatmul.f32.gmra.mxu0 %v2204
      %v2321 = vpop.f32.mrf.mxu0
      %v2322 = vadd.f32 %v2299, %v2321
      %2323 = vmatmul.f32.gmra.mxu0 %v2206
      %v2324 = vpop.f32.mrf.mxu0
      %v2325 = vadd.f32 %v2302, %v2324
      %2326 = vdwg.mxu0
      %2327 = vmatpush.msra.mxu0 %v2242
      %2328 = vmatpush.msra.mxu0 %v2240
      %2329 = vmatpush.msra.mxu0 %v2238
      %2330 = vmatpush.msra.mxu0 %v2236
      %2331 = vmatpush.msra.mxu0 %v2234
      %2332 = vmatpush.msra.mxu0 %v2232
      %2333 = vmatpush.msra.mxu0 %v2230
      %2334 = vmatpush.msra.mxu0 %v2228
      %2335 = vmatpush.msra.mxu0 %v2226
      %2336 = vmatpush.msra.mxu0 %v2224
      %2337 = vmatpush.msra.mxu0 %v2222
      %2338 = vmatpush.msra.mxu0 %v2220
      %2339 = vmatpush.msra.mxu0 %v2218
      %2340 = vmatpush.msra.mxu0 %v2216
      %2341 = vmatpush.msra.mxu0 %v2214
      %2342 = vmatpush.msra.mxu0 %v2212
      %2343 = vmatmul.f32.gmra.mxu0 %v2203
      %v2344 = vpop.f32.mrf.mxu0
      %v2345 = vadd.f32 %v2278, %v2344
      %2346 = vmatmul.f32.gmra.mxu0 %v2205
      %v2347 = vpop.f32.mrf.mxu0
      %v2348 = vadd.f32 %v2278, %v2347
      %2349 = vdwg.mxu0
      %2350 = vmatpush.msra.mxu0 %v2274
      %2351 = vmatpush.msra.mxu0 %v2272
      %2352 = vmatpush.msra.mxu0 %v2270
      %2353 = vmatpush.msra.mxu0 %v2268
      %2354 = vmatpush.msra.mxu0 %v2266
      %2355 = vmatpush.msra.mxu0 %v2264
      %2356 = vmatpush.msra.mxu0 %v2262
      %2357 = vmatpush.msra.mxu0 %v2260
      %2358 = vmatpush.msra.mxu0 %v2258
      %2359 = vmatpush.msra.mxu0 %v2256
      %2360 = vmatpush.msra.mxu0 %v2254
      %2361 = vmatpush.msra.mxu0 %v2252
      %2362 = vmatpush.msra.mxu0 %v2250
      %2363 = vmatpush.msra.mxu0 %v2248
      %2364 = vmatpush.msra.mxu0 %v2246
      %2365 = vmatpush.msra.mxu0 %v2244
      %2366 = vmatmul.f32.gmra.mxu0 %v2204
      %v2367 = vpop.f32.mrf.mxu0
      %v2368 = vadd.f32 %v2345, %v2367
      %2369 = vmatmul.f32.gmra.mxu0 %v2206
      %v2370 = vpop.f32.mrf.mxu0
      %v2371 = vadd.f32 %v2348, %v2370
      %2372 = vdwg.mxu0
      %v2373 = vtanh.pop %v2322
      %v2374 = vtanh.pop %v2368
      %v2375 = vtanh.pop %v2325
      %v2376 = vtanh.pop %v2371
      %v2377 = vadd.f32 %v2203, %v2373
      %v2378 = vadd.f32 %v2204, %v2374
      %v2379 = vadd.f32 %v2205, %v2375
      %v2380 = vadd.f32 %v2206, %v2376
      %v2381 = vld [vmem:[#allocation2 + $0x40] sm:$0xff]
      %v2382 = vld [vmem:[#allocation2 + $0x48] sm:$0xff]
      %v2383 = vld [vmem:[#allocation2 + $0x50] sm:$0xff]
      %v2384 = vld [vmem:[#allocation2 + $0x58] sm:$0xff]
      %v2385 = vld [vmem:[%s10] sm:$0xff]
      %v2386 = vld [vmem:[%s10 + $0x8] sm:$0xff]
      %v2387 = vld [vmem:[%s10 + $0x10] sm:$0xff]
      %v2388 = vld [vmem:[%s10 + $0x18] sm:$0xff]
      %v2389 = vld [vmem:[%s10 + $0x20] sm:$0xff]
      %v2390 = vld [vmem:[%s10 + $0x28] sm:$0xff]
      %v2391 = vld [vmem:[%s10 + $0x30] sm:$0xff]
      %v2392 = vld [vmem:[%s10 + $0x38] sm:$0xff]
      %v2393 = vld [vmem:[%s10 + $0x40] sm:$0xff]
      %v2394 = vld [vmem:[%s10 + $0x48] sm:$0xff]
      %v2395 = vld [vmem:[%s10 + $0x50] sm:$0xff]
      %v2396 = vld [vmem:[%s10 + $0x58] sm:$0xff]
      %v2397 = vld [vmem:[%s10 + $0x60] sm:$0xff]
      %v2398 = vld [vmem:[%s10 + $0x68] sm:$0xff]
      %v2399 = vld [vmem:[%s10 + $0x70] sm:$0xff]
      %v2400 = vld [vmem:[%s10 + $0x78] sm:$0xff]
      %v2401 = vld [vmem:[%s10 + $0x80] sm:$0xff]
      %v2402 = vld [vmem:[%s10 + $0x88] sm:$0xff]
      %v2403 = vld [vmem:[%s10 + $0x90] sm:$0xff]
      %v2404 = vld [vmem:[%s10 + $0x98] sm:$0xff]
      %v2405 = vld [vmem:[%s10 + $0xa0] sm:$0xff]
      %v2406 = vld [vmem:[%s10 + $0xa8] sm:$0xff]
      %v2407 = vld [vmem:[%s10 + $0xb0] sm:$0xff]
      %v2408 = vld [vmem:[%s10 + $0xb8] sm:$0xff]
      %v2409 = vld [vmem:[%s10 + $0xc0] sm:$0xff]
      %v2410 = vld [vmem:[%s10 + $0xc8] sm:$0xff]
      %v2411 = vld [vmem:[%s10 + $0xd0] sm:$0xff]
      %v2412 = vld [vmem:[%s10 + $0xd8] sm:$0xff]
      %v2413 = vld [vmem:[%s10 + $0xe0] sm:$0xff]
      %v2414 = vld [vmem:[%s10 + $0xe8] sm:$0xff]
      %v2415 = vld [vmem:[%s10 + $0xf0] sm:$0xff]
      %v2416 = vld [vmem:[%s10 + $0xf8] sm:$0xff]
      %v2417 = vld [vmem:[%s10 + $0x100] sm:$0xff]
      %v2418 = vld [vmem:[%s10 + $0x108] sm:$0xff]
      %v2419 = vld [vmem:[%s10 + $0x110] sm:$0xff]
      %v2420 = vld [vmem:[%s10 + $0x118] sm:$0xff]
      %v2421 = vld [vmem:[%s10 + $0x120] sm:$0xff]
      %v2422 = vld [vmem:[%s10 + $0x128] sm:$0xff]
      %v2423 = vld [vmem:[%s10 + $0x130] sm:$0xff]
      %v2424 = vld [vmem:[%s10 + $0x138] sm:$0xff]
      %v2425 = vld [vmem:[%s10 + $0x140] sm:$0xff]
      %v2426 = vld [vmem:[%s10 + $0x148] sm:$0xff]
      %v2427 = vld [vmem:[%s10 + $0x150] sm:$0xff]
      %v2428 = vld [vmem:[%s10 + $0x158] sm:$0xff]
      %v2429 = vld [vmem:[%s10 + $0x160] sm:$0xff]
      %v2430 = vld [vmem:[%s10 + $0x168] sm:$0xff]
      %v2431 = vld [vmem:[%s10 + $0x170] sm:$0xff]
      %v2432 = vld [vmem:[%s10 + $0x178] sm:$0xff]
      %v2433 = vld [vmem:[%s10 + $0x180] sm:$0xff]
      %v2434 = vld [vmem:[%s10 + $0x188] sm:$0xff]
      %v2435 = vld [vmem:[%s10 + $0x190] sm:$0xff]
      %v2436 = vld [vmem:[%s10 + $0x198] sm:$0xff]
      %v2437 = vld [vmem:[%s10 + $0x1a0] sm:$0xff]
      %v2438 = vld [vmem:[%s10 + $0x1a8] sm:$0xff]
      %v2439 = vld [vmem:[%s10 + $0x1b0] sm:$0xff]
      %v2440 = vld [vmem:[%s10 + $0x1b8] sm:$0xff]
      %v2441 = vld [vmem:[%s10 + $0x1c0] sm:$0xff]
      %v2442 = vld [vmem:[%s10 + $0x1c8] sm:$0xff]
      %v2443 = vld [vmem:[%s10 + $0x1d0] sm:$0xff]
      %v2444 = vld [vmem:[%s10 + $0x1d8] sm:$0xff]
      %v2445 = vld [vmem:[%s10 + $0x1e0] sm:$0xff]
      %v2446 = vld [vmem:[%s10 + $0x1e8] sm:$0xff]
      %v2447 = vld [vmem:[%s10 + $0x1f0] sm:$0xff]
      %v2448 = vld [vmem:[%s10 + $0x1f8] sm:$0xff]
      %2449 = vmatpush.msra.mxu0 %v2415
      %2450 = vmatpush.msra.mxu0 %v2413
      %2451 = vmatpush.msra.mxu0 %v2411
      %2452 = vmatpush.msra.mxu0 %v2409
      %2453 = vmatpush.msra.mxu0 %v2407
      %2454 = vmatpush.msra.mxu0 %v2405
      %2455 = vmatpush.msra.mxu0 %v2403
      %2456 = vmatpush.msra.mxu0 %v2401
      %2457 = vmatpush.msra.mxu0 %v2399
      %2458 = vmatpush.msra.mxu0 %v2397
      %2459 = vmatpush.msra.mxu0 %v2395
      %2460 = vmatpush.msra.mxu0 %v2393
      %2461 = vmatpush.msra.mxu0 %v2391
      %2462 = vmatpush.msra.mxu0 %v2389
      %2463 = vmatpush.msra.mxu0 %v2387
      %2464 = vmatpush.msra.mxu0 %v2385
      %2465 = vmatmul.f32.gmra.mxu0 %v2377
      %v2466 = vpop.f32.mrf.mxu0
      %v2467 = vadd.f32 0.0, %v2466
      %2468 = vmatmul.f32.gmra.mxu0 %v2379
      %v2469 = vpop.f32.mrf.mxu0
      %v2470 = vadd.f32 0.0, %v2469
      %2471 = vdwg.mxu0
      %2472 = vmatpush.msra.mxu0 %v2447
      %2473 = vmatpush.msra.mxu0 %v2445
      %2474 = vmatpush.msra.mxu0 %v2443
      %2475 = vmatpush.msra.mxu0 %v2441
      %2476 = vmatpush.msra.mxu0 %v2439
      %2477 = vmatpush.msra.mxu0 %v2437
      %2478 = vmatpush.msra.mxu0 %v2435
      %2479 = vmatpush.msra.mxu0 %v2433
      %2480 = vmatpush.msra.mxu0 %v2431
      %2481 = vmatpush.msra.mxu0 %v2429
      %2482 = vmatpush.msra.mxu0 %v2427
      %2483 = vmatpush.msra.mxu0 %v2425
      %2484 = vmatpush.msra.mxu0 %v2423
      %2485 = vmatpush.msra.mxu0 %v2421
      %2486 = vmatpush.msra.mxu0 %v2419
      %2487 = vmatpush.msra.mxu0 %v2417
      %2488 = vmatmul.f32.gmra.mxu0 %v2378
      %v2489 = vpop.f32.mrf.mxu0
      %v2490 = vadd.f32 %v2467, %v2489
      %2491 = vmatmul.f32.gmra.mxu0 %v2380
      %v2492 = vpop.f32.mrf.mxu0
      %v2493 = vadd.f32 %v2470, %v2492
      %2494 = vdwg.mxu0
      %2495 = vmatpush.msra.mxu0 %v2416
      %2496 = vmatpush.msra.mxu0 %v2414
      %2497 = vmatpush.msra.mxu0 %v2412
      %2498 = vmatpush.msra.mxu0 %v2410
      %2499 = vmatpush.msra.mxu0 %v2408
      %2500 = vmatpush.msra.mxu0 %v2406
      %2501 = vmatpush.msra.mxu0 %v2404
      %2502 = vmatpush.msra.mxu0 %v2402
      %2503 = vmatpush.msra.mxu0 %v2400
      %2504 = vmatpush.msra.mxu0 %v2398
      %2505 = vmatpush.msra.mxu0 %v2396
      %2506 = vmatpush.msra.mxu0 %v2394
      %2507 = vmatpush.msra.mxu0 %v2392
      %2508 = vmatpush.msra.mxu0 %v2390
      %2509 = vmatpush.msra.mxu0 %v2388
      %2510 = vmatpush.msra.mxu0 %v2386
      %2511 = vmatmul.f32.gmra.mxu0 %v2377
      %v2512 = vpop.f32.mrf.mxu0
      %v2513 = vadd.f32 0.0, %v2512
      %2514 = vmatmul.f32.gmra.mxu0 %v2379
      %v2515 = vpop.f32.mrf.mxu0
      %v2516 = vadd.f32 0.0, %v2515
      %2517 = vdwg.mxu0
      %2518 = vmatpush.msra.mxu0 %v2448
      %2519 = vmatpush.msra.mxu0 %v2446
      %2520 = vmatpush.msra.mxu0 %v2444
      %2521 = vmatpush.msra.mxu0 %v2442
      %2522 = vmatpush.msra.mxu0 %v2440
      %2523 = vmatpush.msra.mxu0 %v2438
      %2524 = vmatpush.msra.mxu0 %v2436
      %2525 = vmatpush.msra.mxu0 %v2434
      %2526 = vmatpush.msra.mxu0 %v2432
      %2527 = vmatpush.msra.mxu0 %v2430
      %2528 = vmatpush.msra.mxu0 %v2428
      %2529 = vmatpush.msra.mxu0 %v2426
      %2530 = vmatpush.msra.mxu0 %v2424
      %2531 = vmatpush.msra.mxu0 %v2422
      %2532 = vmatpush.msra.mxu0 %v2420
      %2533 = vmatpush.msra.mxu0 %v2418
      %2534 = vmatmul.f32.gmra.mxu0 %v2378
      %v2535 = vpop.f32.mrf.mxu0
      %v2536 = vadd.f32 %v2513, %v2535
      %2537 = vmatmul.f32.gmra.mxu0 %v2380
      %v2538 = vpop.f32.mrf.mxu0
      %v2539 = vadd.f32 %v2516, %v2538
      %2540 = vdwg.mxu0
      %v2541 = vadd.f32 %v2381, %v2490
      %v2542 = vadd.f32 %v2382, %v2536
      %v2543 = vadd.f32 %v2383, %v2493
      %v2544 = vadd.f32 %v2384, %v2539
      %v2545 = vtanh.pop %v2541
      %v2546 = vtanh.pop %v2542
      %v2547 = vtanh.pop %v2543
      %v2548 = vtanh.pop %v2544
      %2549 = vst [vmem:[#allocation3 + $0x40] sm:$0xff] %v2545
      %2550 = vst [vmem:[#allocation3 + $0x48] sm:$0xff] %v2546
      %2551 = vst [vmem:[#allocation3 + $0x50] sm:$0xff] %v2547
      %2552 = vst [vmem:[#allocation3 + $0x58] sm:$0xff] %v2548
      %v2553 = vld [vmem:[%s8] sm:$0xff]
      %v2554 = vld [vmem:[%s8 + $0x8] sm:$0xff]
      %v2555 = vld [vmem:[%s8 + $0x10] sm:$0xff]
      %v2556 = vld [vmem:[%s8 + $0x18] sm:$0xff]
      %v2557 = vld [vmem:[%s8 + $0x20] sm:$0xff]
      %v2558 = vld [vmem:[%s8 + $0x28] sm:$0xff]
      %v2559 = vld [vmem:[%s8 + $0x30] sm:$0xff]
      %v2560 = vld [vmem:[%s8 + $0x38] sm:$0xff]
      %v2561 = vld [vmem:[%s8 + $0x40] sm:$0xff]
      %v2562 = vld [vmem:[%s8 + $0x48] sm:$0xff]
      %v2563 = vld [vmem:[%s8 + $0x50] sm:$0xff]
      %v2564 = vld [vmem:[%s8 + $0x58] sm:$0xff]
      %v2565 = vld [vmem:[%s8 + $0x60] sm:$0xff]
      %v2566 = vld [vmem:[%s8 + $0x68] sm:$0xff]
      %v2567 = vld [vmem:[%s8 + $0x70] sm:$0xff]
      %v2568 = vld [vmem:[%s8 + $0x78] sm:$0xff]
      %v2569 = vld [vmem:[%s8 + $0x80] sm:$0xff]
      %v2570 = vld [vmem:[%s8 + $0x88] sm:$0xff]
      %v2571 = vld [vmem:[%s8 + $0x90] sm:$0xff]
      %v2572 = vld [vmem:[%s8 + $0x98] sm:$0xff]
      %v2573 = vld [vmem:[%s8 + $0xa0] sm:$0xff]
      %v2574 = vld [vmem:[%s8 + $0xa8] sm:$0xff]
      %v2575 = vld [vmem:[%s8 + $0xb0] sm:$0xff]
      %v2576 = vld [vmem:[%s8 + $0xb8] sm:$0xff]
      %v2577 = vld [vmem:[%s8 + $0xc0] sm:$0xff]
      %v2578 = vld [vmem:[%s8 + $0xc8] sm:$0xff]
      %v2579 = vld [vmem:[%s8 + $0xd0] sm:$0xff]
      %v2580 = vld [vmem:[%s8 + $0xd8] sm:$0xff]
      %v2581 = vld [vmem:[%s8 + $0xe0] sm:$0xff]
      %v2582 = vld [vmem:[%s8 + $0xe8] sm:$0xff]
      %v2583 = vld [vmem:[%s8 + $0xf0] sm:$0xff]
      %v2584 = vld [vmem:[%s8 + $0xf8] sm:$0xff]
      %v2585 = vld [vmem:[%s8 + $0x100] sm:$0xff]
      %v2586 = vld [vmem:[%s8 + $0x108] sm:$0xff]
      %v2587 = vld [vmem:[%s8 + $0x110] sm:$0xff]
      %v2588 = vld [vmem:[%s8 + $0x118] sm:$0xff]
      %v2589 = vld [vmem:[%s8 + $0x120] sm:$0xff]
      %v2590 = vld [vmem:[%s8 + $0x128] sm:$0xff]
      %v2591 = vld [vmem:[%s8 + $0x130] sm:$0xff]
      %v2592 = vld [vmem:[%s8 + $0x138] sm:$0xff]
      %v2593 = vld [vmem:[%s8 + $0x140] sm:$0xff]
      %v2594 = vld [vmem:[%s8 + $0x148] sm:$0xff]
      %v2595 = vld [vmem:[%s8 + $0x150] sm:$0xff]
      %v2596 = vld [vmem:[%s8 + $0x158] sm:$0xff]
      %v2597 = vld [vmem:[%s8 + $0x160] sm:$0xff]
      %v2598 = vld [vmem:[%s8 + $0x168] sm:$0xff]
      %v2599 = vld [vmem:[%s8 + $0x170] sm:$0xff]
      %v2600 = vld [vmem:[%s8 + $0x178] sm:$0xff]
      %v2601 = vld [vmem:[%s8 + $0x180] sm:$0xff]
      %v2602 = vld [vmem:[%s8 + $0x188] sm:$0xff]
      %v2603 = vld [vmem:[%s8 + $0x190] sm:$0xff]
      %v2604 = vld [vmem:[%s8 + $0x198] sm:$0xff]
      %v2605 = vld [vmem:[%s8 + $0x1a0] sm:$0xff]
      %v2606 = vld [vmem:[%s8 + $0x1a8] sm:$0xff]
      %v2607 = vld [vmem:[%s8 + $0x1b0] sm:$0xff]
      %v2608 = vld [vmem:[%s8 + $0x1b8] sm:$0xff]
      %v2609 = vld [vmem:[%s8 + $0x1c0] sm:$0xff]
      %v2610 = vld [vmem:[%s8 + $0x1c8] sm:$0xff]
      %v2611 = vld [vmem:[%s8 + $0x1d0] sm:$0xff]
      %v2612 = vld [vmem:[%s8 + $0x1d8] sm:$0xff]
      %v2613 = vld [vmem:[%s8 + $0x1e0] sm:$0xff]
      %v2614 = vld [vmem:[%s8 + $0x1e8] sm:$0xff]
      %v2615 = vld [vmem:[%s8 + $0x1f0] sm:$0xff]
      %v2616 = vld [vmem:[%s8 + $0x1f8] sm:$0xff]
      %v2617 = vld [vmem:[%s9] sm:$0x3]
      %v2619 = vperm.slane %v2617, 0
      %v2620 = vperm.slane %v2617, 1
      %2623 = vmatpush.msra.mxu0 %v2583
      %2624 = vmatpush.msra.mxu0 %v2581
      %2625 = vmatpush.msra.mxu0 %v2579
      %2626 = vmatpush.msra.mxu0 %v2577
      %2627 = vmatpush.msra.mxu0 %v2575
      %2628 = vmatpush.msra.mxu0 %v2573
      %2629 = vmatpush.msra.mxu0 %v2571
      %2630 = vmatpush.msra.mxu0 %v2569
      %2631 = vmatpush.msra.mxu0 %v2567
      %2632 = vmatpush.msra.mxu0 %v2565
      %2633 = vmatpush.msra.mxu0 %v2563
      %2634 = vmatpush.msra.mxu0 %v2561
      %2635 = vmatpush.msra.mxu0 %v2559
      %2636 = vmatpush.msra.mxu0 %v2557
      %2637 = vmatpush.msra.mxu0 %v2555
      %2638 = vmatpush.msra.mxu0 %v2553
      %2639 = vmatmul.f32.gmra.mxu0 %v2545
      %v2640 = vpop.f32.mrf.mxu0
      %v2641 = vadd.f32 %v2619, %v2640
      %2642 = vmatmul.f32.gmra.mxu0 %v2547
      %v2643 = vpop.f32.mrf.mxu0
      %v2644 = vadd.f32 %v2619, %v2643
      %2645 = vdwg.mxu0
      %2646 = vmatpush.msra.mxu0 %v2615
      %2647 = vmatpush.msra.mxu0 %v2613
      %2648 = vmatpush.msra.mxu0 %v2611
      %2649 = vmatpush.msra.mxu0 %v2609
      %2650 = vmatpush.msra.mxu0 %v2607
      %2651 = vmatpush.msra.mxu0 %v2605
      %2652 = vmatpush.msra.mxu0 %v2603
      %2653 = vmatpush.msra.mxu0 %v2601
      %2654 = vmatpush.msra.mxu0 %v2599
      %2655 = vmatpush.msra.mxu0 %v2597
      %2656 = vmatpush.msra.mxu0 %v2595
      %2657 = vmatpush.msra.mxu0 %v2593
      %2658 = vmatpush.msra.mxu0 %v2591
      %2659 = vmatpush.msra.mxu0 %v2589
      %2660 = vmatpush.msra.mxu0 %v2587
      %2661 = vmatpush.msra.mxu0 %v2585
      %2662 = vmatmul.f32.gmra.mxu0 %v2546
      %v2663 = vpop.f32.mrf.mxu0
      %v2664 = vadd.f32 %v2641, %v2663
      %2665 = vmatmul.f32.gmra.mxu0 %v2548
      %v2666 = vpop.f32.mrf.mxu0
      %v2667 = vadd.f32 %v2644, %v2666
      %2668 = vdwg.mxu0
      %2669 = vmatpush.msra.mxu0 %v2584
      %2670 = vmatpush.msra.mxu0 %v2582
      %2671 = vmatpush.msra.mxu0 %v2580
      %2672 = vmatpush.msra.mxu0 %v2578
      %2673 = vmatpush.msra.mxu0 %v2576
      %2674 = vmatpush.msra.mxu0 %v2574
      %2675 = vmatpush.msra.mxu0 %v2572
      %2676 = vmatpush.msra.mxu0 %v2570
      %2677 = vmatpush.msra.mxu0 %v2568
      %2678 = vmatpush.msra.mxu0 %v2566
      %2679 = vmatpush.msra.mxu0 %v2564
      %2680 = vmatpush.msra.mxu0 %v2562
      %2681 = vmatpush.msra.mxu0 %v2560
      %2682 = vmatpush.msra.mxu0 %v2558
      %2683 = vmatpush.msra.mxu0 %v2556
      %2684 = vmatpush.msra.mxu0 %v2554
      %2685 = vmatmul.f32.gmra.mxu0 %v2545
      %v2686 = vpop.f32.mrf.mxu0
      %v2687 = vadd.f32 %v2620, %v2686
      %2688 = vmatmul.f32.gmra.mxu0 %v2547
      %v2689 = vpop.f32.mrf.mxu0
      %v2690 = vadd.f32 %v2620, %v2689
      %2691 = vdwg.mxu0
      %2692 = vmatpush.msra.mxu0 %v2616
      %2693 = vmatpush.msra.mxu0 %v2614
      %2694 = vmatpush.msra.mxu0 %v2612
      %2695 = vmatpush.msra.mxu0 %v2610
      %2696 = vmatpush.msra.mxu0 %v2608
      %2697 = vmatpush.msra.mxu0 %v2606
      %2698 = vmatpush.msra.mxu0 %v2604
      %2699 = vmatpush.msra.mxu0 %v2602
      %2700 = vmatpush.msra.mxu0 %v2600
      %2701 = vmatpush.msra.mxu0 %v2598
      %2702 = vmatpush.msra.mxu0 %v2596
      %2703 = vmatpush.msra.mxu0 %v2594
      %2704 = vmatpush.msra.mxu0 %v2592
      %2705 = vmatpush.msra.mxu0 %v2590
      %2706 = vmatpush.msra.mxu0 %v2588
      %2707 = vmatpush.msra.mxu0 %v2586
      %2708 = vmatmul.f32.gmra.mxu0 %v2546
      %v2709 = vpop.f32.mrf.mxu0
      %v2710 = vadd.f32 %v2687, %v2709
      %2711 = vmatmul.f32.gmra.mxu0 %v2548
      %v2712 = vpop.f32.mrf.mxu0
      %v2713 = vadd.f32 %v2690, %v2712
      %2714 = vdwg.mxu0
      %v2715 = vtanh.pop %v2664
      %v2716 = vtanh.pop %v2710
      %v2717 = vtanh.pop %v2667
      %v2718 = vtanh.pop %v2713
      %v2719 = vadd.f32 %v2545, %v2715
      %v2720 = vadd.f32 %v2546, %v2716
      %v2721 = vadd.f32 %v2547, %v2717
      %v2722 = vadd.f32 %v2548, %v2718
      %v2723 = vld [vmem:[#allocation2 + $0x60] sm:$0xff]
      %v2724 = vld [vmem:[#allocation2 + $0x68] sm:$0xff]
      %v2725 = vld [vmem:[#allocation2 + $0x70] sm:$0xff]
      %v2726 = vld [vmem:[#allocation2 + $0x78] sm:$0xff]
      %v2727 = vld [vmem:[%s10] sm:$0xff]
      %v2728 = vld [vmem:[%s10 + $0x8] sm:$0xff]
      %v2729 = vld [vmem:[%s10 + $0x10] sm:$0xff]
      %v2730 = vld [vmem:[%s10 + $0x18] sm:$0xff]
      %v2731 = vld [vmem:[%s10 + $0x20] sm:$0xff]
      %v2732 = vld [vmem:[%s10 + $0x28] sm:$0xff]
      %v2733 = vld [vmem:[%s10 + $0x30] sm:$0xff]
      %v2734 = vld [vmem:[%s10 + $0x38] sm:$0xff]
      %v2735 = vld [vmem:[%s10 + $0x40] sm:$0xff]
      %v2736 = vld [vmem:[%s10 + $0x48] sm:$0xff]
      %v2737 = vld [vmem:[%s10 + $0x50] sm:$0xff]
      %v2738 = vld [vmem:[%s10 + $0x58] sm:$0xff]
      %v2739 = vld [vmem:[%s10 + $0x60] sm:$0xff]
      %v2740 = vld [vmem:[%s10 + $0x68] sm:$0xff]
      %v2741 = vld [vmem:[%s10 + $0x70] sm:$0xff]
      %v2742 = vld [vmem:[%s10 + $0x78] sm:$0xff]
      %v2743 = vld [vmem:[%s10 + $0x80] sm:$0xff]
      %v2744 = vld [vmem:[%s10 + $0x88] sm:$0xff]
      %v2745 = vld [vmem:[%s10 + $0x90] sm:$0xff]
      %v2746 = vld [vmem:[%s10 + $0x98] sm:$0xff]
      %v2747 = vld [vmem:[%s10 + $0xa0] sm:$0xff]
      %v2748 = vld [vmem:[%s10 + $0xa8] sm:$0xff]
      %v2749 = vld [vmem:[%s10 + $0xb0] sm:$0xff]
      %v2750 = vld [vmem:[%s10 + $0xb8] sm:$0xff]
      %v2751 = vld [vmem:[%s10 + $0xc0] sm:$0xff]
      %v2752 = vld [vmem:[%s10 + $0xc8] sm:$0xff]
      %v2753 = vld [vmem:[%s10 + $0xd0] sm:$0xff]
      %v2754 = vld [vmem:[%s10 + $0xd8] sm:$0xff]
      %v2755 = vld [vmem:[%s10 + $0xe0] sm:$0xff]
      %v2756 = vld [vmem:[%s10 + $0xe8] sm:$0xff]
      %v2757 = vld [vmem:[%s10 + $0xf0] sm:$0xff]
      %v2758 = vld [vmem:[%s10 + $0xf8] sm:$0xff]
      %v2759 = vld [vmem:[%s10 + $0x100] sm:$0xff]
      %v2760 = vld [vmem:[%s10 + $0x108] sm:$0xff]
      %v2761 = vld [vmem:[%s10 + $0x110] sm:$0xff]
      %v2762 = vld [vmem:[%s10 + $0x118] sm:$0xff]
      %v2763 = vld [vmem:[%s10 + $0x120] sm:$0xff]
      %v2764 = vld [vmem:[%s10 + $0x128] sm:$0xff]
      %v2765 = vld [vmem:[%s10 + $0x130] sm:$0xff]
      %v2766 = vld [vmem:[%s10 + $0x138] sm:$0xff]
      %v2767 = vld [vmem:[%s10 + $0x140] sm:$0xff]
      %v2768 = vld [vmem:[%s10 + $0x148] sm:$0xff]
      %v2769 = vld [vmem:[%s10 + $0x150] sm:$0xff]
      %v2770 = vld [vmem:[%s10 + $0x158] sm:$0xff]
      %v2771 = vld [vmem:[%s10 + $0x160] sm:$0xff]
      %v2772 = vld [vmem:[%s10 + $0x168] sm:$0xff]
      %v2773 = vld [vmem:[%s10 + $0x170] sm:$0xff]
      %v2774 = vld [vmem:[%s10 + $0x178] sm:$0xff]
      %v2775 = vld [vmem:[%s10 + $0x180] sm:$0xff]
      %v2776 = vld [vmem:[%s10 + $0x188] sm:$0xff]
      %v2777 = vld [vmem:[%s10 + $0x190] sm:$0xff]
      %v2778 = vld [vmem:[%s10 + $0x198] sm:$0xff]
      %v2779 = vld [vmem:[%s10 + $0x1a0] sm:$0xff]
      %v2780 = vld [vmem:[%s10 + $0x1a8] sm:$0xff]
      %v2781 = vld [vmem:[%s10 + $0x1b0] sm:$0xff]
      %v2782 = vld [vmem:[%s10 + $0x1b8] sm:$0xff]
      %v2783 = vld [vmem:[%s10 + $0x1c0] sm:$0xff]
      %v2784 = vld [vmem:[%s10 + $0x1c8] sm:$0xff]
      %v2785 = vld [vmem:[%s10 + $0x1d0] sm:$0xff]
      %v2786 = vld [vmem:[%s10 + $0x1d8] sm:$0xff]
      %v2787 = vld [vmem:[%s10 + $0x1e0] sm:$0xff]
      %v2788 = vld [vmem:[%s10 + $0x1e8] sm:$0xff]
      %v2789 = vld [vmem:[%s10 + $0x1f0] sm:$0xff]
      %v2790 = vld [vmem:[%s10 + $0x1f8] sm:$0xff]
      %2791 = vmatpush.msra.mxu0 %v2757
      %2792 = vmatpush.msra.mxu0 %v2755
      %2793 = vmatpush.msra.mxu0 %v2753
      %2794 = vmatpush.msra.mxu0 %v2751
      %2795 = vmatpush.msra.mxu0 %v2749
      %2796 = vmatpush.msra.mxu0 %v2747
      %2797 = vmatpush.msra.mxu0 %v2745
      %2798 = vmatpush.msra.mxu0 %v2743
      %2799 = vmatpush.msra.mxu0 %v2741
      %2800 = vmatpush.msra.mxu0 %v2739
      %2801 = vmatpush.msra.mxu0 %v2737
      %2802 = vmatpush.msra.mxu0 %v2735
      %2803 = vmatpush.msra.mxu0 %v2733
      %2804 = vmatpush.msra.mxu0 %v2731
      %2805 = vmatpush.msra.mxu0 %v2729
      %2806 = vmatpush.msra.mxu0 %v2727
      %2807 = vmatmul.f32.gmra.mxu0 %v2719
      %v2808 = vpop.f32.mrf.mxu0
      %v2809 = vadd.f32 0.0, %v2808
      %2810 = vmatmul.f32.gmra.mxu0 %v2721
      %v2811 = vpop.f32.mrf.mxu0
      %v2812 = vadd.f32 0.0, %v2811
      %2813 = vdwg.mxu0
      %2814 = vmatpush.msra.mxu0 %v2789
      %2815 = vmatpush.msra.mxu0 %v2787
      %2816 = vmatpush.msra.mxu0 %v2785
      %2817 = vmatpush.msra.mxu0 %v2783
      %2818 = vmatpush.msra.mxu0 %v2781
      %2819 = vmatpush.msra.mxu0 %v2779
      %2820 = vmatpush.msra.mxu0 %v2777
      %2821 = vmatpush.msra.mxu0 %v2775
      %2822 = vmatpush.msra.mxu0 %v2773
      %2823 = vmatpush.msra.mxu0 %v2771
      %2824 = vmatpush.msra.mxu0 %v2769
      %2825 = vmatpush.msra.mxu0 %v2767
      %2826 = vmatpush.msra.mxu0 %v2765
      %2827 = vmatpush.msra.mxu0 %v2763
      %2828 = vmatpush.msra.mxu0 %v2761
      %2829 = vmatpush.msra.mxu0 %v2759
      %2830 = vmatmul.f32.gmra.mxu0 %v2720
      %v2831 = vpop.f32.mrf.mxu0
      %v2832 = vadd.f32 %v2809, %v2831
      %2833 = vmatmul.f32.gmra.mxu0 %v2722
      %v2834 = vpop.f32.mrf.mxu0
      %v2835 = vadd.f32 %v2812, %v2834
      %2836 = vdwg.mxu0
      %2837 = vmatpush.msra.mxu0 %v2758
      %2838 = vmatpush.msra.mxu0 %v2756
      %2839 = vmatpush.msra.mxu0 %v2754
      %2840 = vmatpush.msra.mxu0 %v2752
      %2841 = vmatpush.msra.mxu0 %v2750
      %2842 = vmatpush.msra.mxu0 %v2748
      %2843 = vmatpush.msra.mxu0 %v2746
      %2844 = vmatpush.msra.mxu0 %v2744
      %2845 = vmatpush.msra.mxu0 %v2742
      %2846 = vmatpush.msra.mxu0 %v2740
      %2847 = vmatpush.msra.mxu0 %v2738
      %2848 = vmatpush.msra.mxu0 %v2736
      %2849 = vmatpush.msra.mxu0 %v2734
      %2850 = vmatpush.msra.mxu0 %v2732
      %2851 = vmatpush.msra.mxu0 %v2730
      %2852 = vmatpush.msra.mxu0 %v2728
      %2853 = vmatmul.f32.gmra.mxu0 %v2719
      %v2854 = vpop.f32.mrf.mxu0
      %v2855 = vadd.f32 0.0, %v2854
      %2856 = vmatmul.f32.gmra.mxu0 %v2721
      %v2857 = vpop.f32.mrf.mxu0
      %v2858 = vadd.f32 0.0, %v2857
      %2859 = vdwg.mxu0
      %2860 = vmatpush.msra.mxu0 %v2790
      %2861 = vmatpush.msra.mxu0 %v2788
      %2862 = vmatpush.msra.mxu0 %v2786
      %2863 = vmatpush.msra.mxu0 %v2784
      %2864 = vmatpush.msra.mxu0 %v2782
      %2865 = vmatpush.msra.mxu0 %v2780
      %2866 = vmatpush.msra.mxu0 %v2778
      %2867 = vmatpush.msra.mxu0 %v2776
      %2868 = vmatpush.msra.mxu0 %v2774
      %2869 = vmatpush.msra.mxu0 %v2772
      %2870 = vmatpush.msra.mxu0 %v2770
      %2871 = vmatpush.msra.mxu0 %v2768
      %2872 = vmatpush.msra.mxu0 %v2766
      %2873 = vmatpush.msra.mxu0 %v2764
      %2874 = vmatpush.msra.mxu0 %v2762
      %2875 = vmatpush.msra.mxu0 %v2760
      %2876 = vmatmul.f32.gmra.mxu0 %v2720
      %v2877 = vpop.f32.mrf.mxu0
      %v2878 = vadd.f32 %v2855, %v2877
      %2879 = vmatmul.f32.gmra.mxu0 %v2722
      %v2880 = vpop.f32.mrf.mxu0
      %v2881 = vadd.f32 %v2858, %v2880
      %2882 = vdwg.mxu0
      %v2883 = vadd.f32 %v2723, %v2832
      %v2884 = vadd.f32 %v2724, %v2878
      %v2885 = vadd.f32 %v2725, %v2835
      %v2886 = vadd.f32 %v2726, %v2881
      %v2887 = vtanh.pop %v2883
      %v2888 = vtanh.pop %v2884
      %v2889 = vtanh.pop %v2885
      %v2890 = vtanh.pop %v2886
      %2891 = vst [vmem:[#allocation3 + $0x60] sm:$0xff] %v2887
      %2892 = vst [vmem:[#allocation3 + $0x68] sm:$0xff] %v2888
      %2893 = vst [vmem:[#allocation3 + $0x70] sm:$0xff] %v2889
      %2894 = vst [vmem:[#allocation3 + $0x78] sm:$0xff] %v2890
      %v2895 = vld [vmem:[%s8] sm:$0xff]
      %v2896 = vld [vmem:[%s8 + $0x8] sm:$0xff]
      %v2897 = vld [vmem:[%s8 + $0x10] sm:$0xff]
      %v2898 = vld [vmem:[%s8 + $0x18] sm:$0xff]
      %v2899 = vld [vmem:[%s8 + $0x20] sm:$0xff]
      %v2900 = vld [vmem:[%s8 + $0x28] sm:$0xff]
      %v2901 = vld [vmem:[%s8 + $0x30] sm:$0xff]
      %v2902 = vld [vmem:[%s8 + $0x38] sm:$0xff]
      %v2903 = vld [vmem:[%s8 + $0x40] sm:$0xff]
      %v2904 = vld [vmem:[%s8 + $0x48] sm:$0xff]
      %v2905 = vld [vmem:[%s8 + $0x50] sm:$0xff]
      %v2906 = vld [vmem:[%s8 + $0x58] sm:$0xff]
      %v2907 = vld [vmem:[%s8 + $0x60] sm:$0xff]
      %v2908 = vld [vmem:[%s8 + $0x68] sm:$0xff]
      %v2909 = vld [vmem:[%s8 + $0x70] sm:$0xff]
      %v2910 = vld [vmem:[%s8 + $0x78] sm:$0xff]
      %v2911 = vld [vmem:[%s8 + $0x80] sm:$0xff]
      %v2912 = vld [vmem:[%s8 + $0x88] sm:$0xff]
      %v2913 = vld [vmem:[%s8 + $0x90] sm:$0xff]
      %v2914 = vld [vmem:[%s8 + $0x98] sm:$0xff]
      %v2915 = vld [vmem:[%s8 + $0xa0] sm:$0xff]
      %v2916 = vld [vmem:[%s8 + $0xa8] sm:$0xff]
      %v2917 = vld [vmem:[%s8 + $0xb0] sm:$0xff]
      %v2918 = vld [vmem:[%s8 + $0xb8] sm:$0xff]
      %v2919 = vld [vmem:[%s8 + $0xc0] sm:$0xff]
      %v2920 = vld [vmem:[%s8 + $0xc8] sm:$0xff]
      %v2921 = vld [vmem:[%s8 + $0xd0] sm:$0xff]
      %v2922 = vld [vmem:[%s8 + $0xd8] sm:$0xff]
      %v2923 = vld [vmem:[%s8 + $0xe0] sm:$0xff]
      %v2924 = vld [vmem:[%s8 + $0xe8] sm:$0xff]
      %v2925 = vld [vmem:[%s8 + $0xf0] sm:$0xff]
      %v2926 = vld [vmem:[%s8 + $0xf8] sm:$0xff]
      %v2927 = vld [vmem:[%s8 + $0x100] sm:$0xff]
      %v2928 = vld [vmem:[%s8 + $0x108] sm:$0xff]
      %v2929 = vld [vmem:[%s8 + $0x110] sm:$0xff]
      %v2930 = vld [vmem:[%s8 + $0x118] sm:$0xff]
      %v2931 = vld [vmem:[%s8 + $0x120] sm:$0xff]
      %v2932 = vld [vmem:[%s8 + $0x128] sm:$0xff]
      %v2933 = vld [vmem:[%s8 + $0x130] sm:$0xff]
      %v2934 = vld [vmem:[%s8 + $0x138] sm:$0xff]
      %v2935 = vld [vmem:[%s8 + $0x140] sm:$0xff]
      %v2936 = vld [vmem:[%s8 + $0x148] sm:$0xff]
      %v2937 = vld [vmem:[%s8 + $0x150] sm:$0xff]
      %v2938 = vld [vmem:[%s8 + $0x158] sm:$0xff]
      %v2939 = vld [vmem:[%s8 + $0x160] sm:$0xff]
      %v2940 = vld [vmem:[%s8 + $0x168] sm:$0xff]
      %v2941 = vld [vmem:[%s8 + $0x170] sm:$0xff]
      %v2942 = vld [vmem:[%s8 + $0x178] sm:$0xff]
      %v2943 = vld [vmem:[%s8 + $0x180] sm:$0xff]
      %v2944 = vld [vmem:[%s8 + $0x188] sm:$0xff]
      %v2945 = vld [vmem:[%s8 + $0x190] sm:$0xff]
      %v2946 = vld [vmem:[%s8 + $0x198] sm:$0xff]
      %v2947 = vld [vmem:[%s8 + $0x1a0] sm:$0xff]
      %v2948 = vld [vmem:[%s8 + $0x1a8] sm:$0xff]
      %v2949 = vld [vmem:[%s8 + $0x1b0] sm:$0xff]
      %v2950 = vld [vmem:[%s8 + $0x1b8] sm:$0xff]
      %v2951 = vld [vmem:[%s8 + $0x1c0] sm:$0xff]
      %v2952 = vld [vmem:[%s8 + $0x1c8] sm:$0xff]
      %v2953 = vld [vmem:[%s8 + $0x1d0] sm:$0xff]
      %v2954 = vld [vmem:[%s8 + $0x1d8] sm:$0xff]
      %v2955 = vld [vmem:[%s8 + $0x1e0] sm:$0xff]
      %v2956 = vld [vmem:[%s8 + $0x1e8] sm:$0xff]
      %v2957 = vld [vmem:[%s8 + $0x1f0] sm:$0xff]
      %v2958 = vld [vmem:[%s8 + $0x1f8] sm:$0xff]
      %v2959 = vld [vmem:[%s9] sm:$0x3]
      %v2961 = vperm.slane %v2959, 0
      %v2962 = vperm.slane %v2959, 1
      %2965 = vmatpush.msra.mxu0 %v2925
      %2966 = vmatpush.msra.mxu0 %v2923
      %2967 = vmatpush.msra.mxu0 %v2921
      %2968 = vmatpush.msra.mxu0 %v2919
      %2969 = vmatpush.msra.mxu0 %v2917
      %2970 = vmatpush.msra.mxu0 %v2915
      %2971 = vmatpush.msra.mxu0 %v2913
      %2972 = vmatpush.msra.mxu0 %v2911
      %2973 = vmatpush.msra.mxu0 %v2909
      %2974 = vmatpush.msra.mxu0 %v2907
      %2975 = vmatpush.msra.mxu0 %v2905
      %2976 = vmatpush.msra.mxu0 %v2903
      %2977 = vmatpush.msra.mxu0 %v2901
      %2978 = vmatpush.msra.mxu0 %v2899
      %2979 = vmatpush.msra.mxu0 %v2897
      %2980 = vmatpush.msra.mxu0 %v2895
      %2981 = vmatmul.f32.gmra.mxu0 %v2887
      %v2982 = vpop.f32.mrf.mxu0
      %v2983 = vadd.f32 %v2961, %v2982
      %2984 = vmatmul.f32.gmra.mxu0 %v2889
      %v2985 = vpop.f32.mrf.mxu0
      %v2986 = vadd.f32 %v2961, %v2985
      %2987 = vdwg.mxu0
      %2988 = vmatpush.msra.mxu0 %v2957
      %2989 = vmatpush.msra.mxu0 %v2955
      %2990 = vmatpush.msra.mxu0 %v2953
      %2991 = vmatpush.msra.mxu0 %v2951
      %2992 = vmatpush.msra.mxu0 %v2949
      %2993 = vmatpush.msra.mxu0 %v2947
      %2994 = vmatpush.msra.mxu0 %v2945
      %2995 = vmatpush.msra.mxu0 %v2943
      %2996 = vmatpush.msra.mxu0 %v2941
      %2997 = vmatpush.msra.mxu0 %v2939
      %2998 = vmatpush.msra.mxu0 %v2937
      %2999 = vmatpush.msra.mxu0 %v2935
      %3000 = vmatpush.msra.mxu0 %v2933
      %3001 = vmatpush.msra.mxu0 %v2931
      %3002 = vmatpush.msra.mxu0 %v2929
      %3003 = vmatpush.msra.mxu0 %v2927
      %3004 = vmatmul.f32.gmra.mxu0 %v2888
      %v3005 = vpop.f32.mrf.mxu0
      %v3006 = vadd.f32 %v2983, %v3005
      %3007 = vmatmul.f32.gmra.mxu0 %v2890
      %v3008 = vpop.f32.mrf.mxu0
      %v3009 = vadd.f32 %v2986, %v3008
      %3010 = vdwg.mxu0
      %3011 = vmatpush.msra.mxu0 %v2926
      %3012 = vmatpush.msra.mxu0 %v2924
      %3013 = vmatpush.msra.mxu0 %v2922
      %3014 = vmatpush.msra.mxu0 %v2920
      %3015 = vmatpush.msra.mxu0 %v2918
      %3016 = vmatpush.msra.mxu0 %v2916
      %3017 = vmatpush.msra.mxu0 %v2914
      %3018 = vmatpush.msra.mxu0 %v2912
      %3019 = vmatpush.msra.mxu0 %v2910
      %3020 = vmatpush.msra.mxu0 %v2908
      %3021 = vmatpush.msra.mxu0 %v2906
      %3022 = vmatpush.msra.mxu0 %v2904
      %3023 = vmatpush.msra.mxu0 %v2902
      %3024 = vmatpush.msra.mxu0 %v2900
      %3025 = vmatpush.msra.mxu0 %v2898
      %3026 = vmatpush.msra.mxu0 %v2896
      %3027 = vmatmul.f32.gmra.mxu0 %v2887
      %v3028 = vpop.f32.mrf.mxu0
      %v3029 = vadd.f32 %v2962, %v3028
      %3030 = vmatmul.f32.gmra.mxu0 %v2889
      %v3031 = vpop.f32.mrf.mxu0
      %v3032 = vadd.f32 %v2962, %v3031
      %3033 = vdwg.mxu0
      %3034 = vmatpush.msra.mxu0 %v2958
      %3035 = vmatpush.msra.mxu0 %v2956
      %3036 = vmatpush.msra.mxu0 %v2954
      %3037 = vmatpush.msra.mxu0 %v2952
      %3038 = vmatpush.msra.mxu0 %v2950
      %3039 = vmatpush.msra.mxu0 %v2948
      %3040 = vmatpush.msra.mxu0 %v2946
      %3041 = vmatpush.msra.mxu0 %v2944
      %3042 = vmatpush.msra.mxu0 %v2942
      %3043 = vmatpush.msra.mxu0 %v2940
      %3044 = vmatpush.msra.mxu0 %v2938
      %3045 = vmatpush.msra.mxu0 %v2936
      %3046 = vmatpush.msra.mxu0 %v2934
      %3047 = vmatpush.msra.mxu0 %v2932
      %3048 = vmatpush.msra.mxu0 %v2930
      %3049 = vmatpush.msra.mxu0 %v2928
      %3050 = vmatmul.f32.gmra.mxu0 %v2888
      %v3051 = vpop.f32.mrf.mxu0
      %v3052 = vadd.f32 %v3029, %v3051
      %3053 = vmatmul.f32.gmra.mxu0 %v2890
      %v3054 = vpop.f32.mrf.mxu0
      %v3055 = vadd.f32 %v3032, %v3054
      %3056 = vdwg.mxu0
      %v3057 = vtanh.pop %v3006
      %v3058 = vtanh.pop %v3052
      %v3059 = vtanh.pop %v3009
      %v3060 = vtanh.pop %v3055
      %v3061 = vadd.f32 %v2887, %v3057
      %v3062 = vadd.f32 %v2888, %v3058
      %v3063 = vadd.f32 %v2889, %v3059
      %v3064 = vadd.f32 %v2890, %v3060
      %v3065 = vld [vmem:[#allocation2 + $0x80] sm:$0xff]
      %v3066 = vld [vmem:[#allocation2 + $0x88] sm:$0xff]
      %v3067 = vld [vmem:[#allocation2 + $0x90] sm:$0xff]
      %v3068 = vld [vmem:[#allocation2 + $0x98] sm:$0xff]
      %v3069 = vld [vmem:[%s10] sm:$0xff]
      %v3070 = vld [vmem:[%s10 + $0x8] sm:$0xff]
      %v3071 = vld [vmem:[%s10 + $0x10] sm:$0xff]
      %v3072 = vld [vmem:[%s10 + $0x18] sm:$0xff]
      %v3073 = vld [vmem:[%s10 + $0x20] sm:$0xff]
      %v3074 = vld [vmem:[%s10 + $0x28] sm:$0xff]
      %v3075 = vld [vmem:[%s10 + $0x30] sm:$0xff]
      %v3076 = vld [vmem:[%s10 + $0x38] sm:$0xff]
      %v3077 = vld [vmem:[%s10 + $0x40] sm:$0xff]
      %v3078 = vld [vmem:[%s10 + $0x48] sm:$0xff]
      %v3079 = vld [vmem:[%s10 + $0x50] sm:$0xff]
      %v3080 = vld [vmem:[%s10 + $0x58] sm:$0xff]
      %v3081 = vld [vmem:[%s10 + $0x60] sm:$0xff]
      %v3082 = vld [vmem:[%s10 + $0x68] sm:$0xff]
      %v3083 = vld [vmem:[%s10 + $0x70] sm:$0xff]
      %v3084 = vld [vmem:[%s10 + $0x78] sm:$0xff]
      %v3085 = vld [vmem:[%s10 + $0x80] sm:$0xff]
      %v3086 = vld [vmem:[%s10 + $0x88] sm:$0xff]
      %v3087 = vld [vmem:[%s10 + $0x90] sm:$0xff]
      %v3088 = vld [vmem:[%s10 + $0x98] sm:$0xff]
      %v3089 = vld [vmem:[%s10 + $0xa0] sm:$0xff]
      %v3090 = vld [vmem:[%s10 + $0xa8] sm:$0xff]
      %v3091 = vld [vmem:[%s10 + $0xb0] sm:$0xff]
      %v3092 = vld [vmem:[%s10 + $0xb8] sm:$0xff]
      %v3093 = vld [vmem:[%s10 + $0xc0] sm:$0xff]
      %v3094 = vld [vmem:[%s10 + $0xc8] sm:$0xff]
      %v3095 = vld [vmem:[%s10 + $0xd0] sm:$0xff]
      %v3096 = vld [vmem:[%s10 + $0xd8] sm:$0xff]
      %v3097 = vld [vmem:[%s10 + $0xe0] sm:$0xff]
      %v3098 = vld [vmem:[%s10 + $0xe8] sm:$0xff]
      %v3099 = vld [vmem:[%s10 + $0xf0] sm:$0xff]
      %v3100 = vld [vmem:[%s10 + $0xf8] sm:$0xff]
      %v3101 = vld [vmem:[%s10 + $0x100] sm:$0xff]
      %v3102 = vld [vmem:[%s10 + $0x108] sm:$0xff]
      %v3103 = vld [vmem:[%s10 + $0x110] sm:$0xff]
      %v3104 = vld [vmem:[%s10 + $0x118] sm:$0xff]
      %v3105 = vld [vmem:[%s10 + $0x120] sm:$0xff]
      %v3106 = vld [vmem:[%s10 + $0x128] sm:$0xff]
      %v3107 = vld [vmem:[%s10 + $0x130] sm:$0xff]
      %v3108 = vld [vmem:[%s10 + $0x138] sm:$0xff]
      %v3109 = vld [vmem:[%s10 + $0x140] sm:$0xff]
      %v3110 = vld [vmem:[%s10 + $0x148] sm:$0xff]
      %v3111 = vld [vmem:[%s10 + $0x150] sm:$0xff]
      %v3112 = vld [vmem:[%s10 + $0x158] sm:$0xff]
      %v3113 = vld [vmem:[%s10 + $0x160] sm:$0xff]
      %v3114 = vld [vmem:[%s10 + $0x168] sm:$0xff]
      %v3115 = vld [vmem:[%s10 + $0x170] sm:$0xff]
      %v3116 = vld [vmem:[%s10 + $0x178] sm:$0xff]
      %v3117 = vld [vmem:[%s10 + $0x180] sm:$0xff]
      %v3118 = vld [vmem:[%s10 + $0x188] sm:$0xff]
      %v3119 = vld [vmem:[%s10 + $0x190] sm:$0xff]
      %v3120 = vld [vmem:[%s10 + $0x198] sm:$0xff]
      %v3121 = vld [vmem:[%s10 + $0x1a0] sm:$0xff]
      %v3122 = vld [vmem:[%s10 + $0x1a8] sm:$0xff]
      %v3123 = vld [vmem:[%s10 + $0x1b0] sm:$0xff]
      %v3124 = vld [vmem:[%s10 + $0x1b8] sm:$0xff]
      %v3125 = vld [vmem:[%s10 + $0x1c0] sm:$0xff]
      %v3126 = vld [vmem:[%s10 + $0x1c8] sm:$0xff]
      %v3127 = vld [vmem:[%s10 + $0x1d0] sm:$0xff]
      %v3128 = vld [vmem:[%s10 + $0x1d8] sm:$0xff]
      %v3129 = vld [vmem:[%s10 + $0x1e0] sm:$0xff]
      %v3130 = vld [vmem:[%s10 + $0x1e8] sm:$0xff]
      %v3131 = vld [vmem:[%s10 + $0x1f0] sm:$0xff]
      %v3132 = vld [vmem:[%s10 + $0x1f8] sm:$0xff]
      %3133 = vmatpush.msra.mxu0 %v3099
      %3134 = vmatpush.msra.mxu0 %v3097
      %3135 = vmatpush.msra.mxu0 %v3095
      %3136 = vmatpush.msra.mxu0 %v3093
      %3137 = vmatpush.msra.mxu0 %v3091
      %3138 = vmatpush.msra.mxu0 %v3089
      %3139 = vmatpush.msra.mxu0 %v3087
      %3140 = vmatpush.msra.mxu0 %v3085
      %3141 = vmatpush.msra.mxu0 %v3083
      %3142 = vmatpush.msra.mxu0 %v3081
      %3143 = vmatpush.msra.mxu0 %v3079
      %3144 = vmatpush.msra.mxu0 %v3077
      %3145 = vmatpush.msra.mxu0 %v3075
      %3146 = vmatpush.msra.mxu0 %v3073
      %3147 = vmatpush.msra.mxu0 %v3071
      %3148 = vmatpush.msra.mxu0 %v3069
      %3149 = vmatmul.f32.gmra.mxu0 %v3061
      %v3150 = vpop.f32.mrf.mxu0
      %v3151 = vadd.f32 0.0, %v3150
      %3152 = vmatmul.f32.gmra.mxu0 %v3063
      %v3153 = vpop.f32.mrf.mxu0
      %v3154 = vadd.f32 0.0, %v3153
      %3155 = vdwg.mxu0
      %3156 = vmatpush.msra.mxu0 %v3131
      %3157 = vmatpush.msra.mxu0 %v3129
      %3158 = vmatpush.msra.mxu0 %v3127
      %3159 = vmatpush.msra.mxu0 %v3125
      %3160 = vmatpush.msra.mxu0 %v3123
      %3161 = vmatpush.msra.mxu0 %v3121
      %3162 = vmatpush.msra.mxu0 %v3119
      %3163 = vmatpush.msra.mxu0 %v3117
      %3164 = vmatpush.msra.mxu0 %v3115
      %3165 = vmatpush.msra.mxu0 %v3113
      %3166 = vmatpush.msra.mxu0 %v3111
      %3167 = vmatpush.msra.mxu0 %v3109
      %3168 = vmatpush.msra.mxu0 %v3107
      %3169 = vmatpush.msra.mxu0 %v3105
      %3170 = vmatpush.msra.mxu0 %v3103
      %3171 = vmatpush.msra.mxu0 %v3101
      %3172 = vmatmul.f32.gmra.mxu0 %v3062
      %v3173 = vpop.f32.mrf.mxu0
      %v3174 = vadd.f32 %v3151, %v3173
      %3175 = vmatmul.f32.gmra.mxu0 %v3064
      %v3176 = vpop.f32.mrf.mxu0
      %v3177 = vadd.f32 %v3154, %v3176
      %3178 = vdwg.mxu0
      %3179 = vmatpush.msra.mxu0 %v3100
      %3180 = vmatpush.msra.mxu0 %v3098
      %3181 = vmatpush.msra.mxu0 %v3096
      %3182 = vmatpush.msra.mxu0 %v3094
      %3183 = vmatpush.msra.mxu0 %v3092
      %3184 = vmatpush.msra.mxu0 %v3090
      %3185 = vmatpush.msra.mxu0 %v3088
      %3186 = vmatpush.msra.mxu0 %v3086
      %3187 = vmatpush.msra.mxu0 %v3084
      %3188 = vmatpush.msra.mxu0 %v3082
      %3189 = vmatpush.msra.mxu0 %v3080
      %3190 = vmatpush.msra.mxu0 %v3078
      %3191 = vmatpush.msra.mxu0 %v3076
      %3192 = vmatpush.msra.mxu0 %v3074
      %3193 = vmatpush.msra.mxu0 %v3072
      %3194 = vmatpush.msra.mxu0 %v3070
      %3195 = vmatmul.f32.gmra.mxu0 %v3061
      %v3196 = vpop.f32.mrf.mxu0
      %v3197 = vadd.f32 0.0, %v3196
      %3198 = vmatmul.f32.gmra.mxu0 %v3063
      %v3199 = vpop.f32.mrf.mxu0
      %v3200 = vadd.f32 0.0, %v3199
      %3201 = vdwg.mxu0
      %3202 = vmatpush.msra.mxu0 %v3132
      %3203 = vmatpush.msra.mxu0 %v3130
      %3204 = vmatpush.msra.mxu0 %v3128
      %3205 = vmatpush.msra.mxu0 %v3126
      %3206 = vmatpush.msra.mxu0 %v3124
      %3207 = vmatpush.msra.mxu0 %v3122
      %3208 = vmatpush.msra.mxu0 %v3120
      %3209 = vmatpush.msra.mxu0 %v3118
      %3210 = vmatpush.msra.mxu0 %v3116
      %3211 = vmatpush.msra.mxu0 %v3114
      %3212 = vmatpush.msra.mxu0 %v3112
      %3213 = vmatpush.msra.mxu0 %v3110
      %3214 = vmatpush.msra.mxu0 %v3108
      %3215 = vmatpush.msra.mxu0 %v3106
      %3216 = vmatpush.msra.mxu0 %v3104
      %3217 = vmatpush.msra.mxu0 %v3102
      %3218 = vmatmul.f32.gmra.mxu0 %v3062
      %v3219 = vpop.f32.mrf.mxu0
      %v3220 = vadd.f32 %v3197, %v3219
      %3221 = vmatmul.f32.gmra.mxu0 %v3064
      %v3222 = vpop.f32.mrf.mxu0
      %v3223 = vadd.f32 %v3200, %v3222
      %3224 = vdwg.mxu0
      %v3225 = vadd.f32 %v3065, %v3174
      %v3226 = vadd.f32 %v3066, %v3220
      %v3227 = vadd.f32 %v3067, %v3177
      %v3228 = vadd.f32 %v3068, %v3223
      %v3229 = vtanh.pop %v3225
      %v3230 = vtanh.pop %v3226
      %v3231 = vtanh.pop %v3227
      %v3232 = vtanh.pop %v3228
      %3233 = vst [vmem:[#allocation3 + $0x80] sm:$0xff] %v3229
      %3234 = vst [vmem:[#allocation3 + $0x88] sm:$0xff] %v3230
      %3235 = vst [vmem:[#allocation3 + $0x90] sm:$0xff] %v3231
      %3236 = vst [vmem:[#allocation3 + $0x98] sm:$0xff] %v3232
      %v3237 = vld [vmem:[%s8] sm:$0xff]
      %v3238 = vld [vmem:[%s8 + $0x8] sm:$0xff]
      %v3239 = vld [vmem:[%s8 + $0x10] sm:$0xff]
      %v3240 = vld [vmem:[%s8 + $0x18] sm:$0xff]
      %v3241 = vld [vmem:[%s8 + $0x20] sm:$0xff]
      %v3242 = vld [vmem:[%s8 + $0x28] sm:$0xff]
      %v3243 = vld [vmem:[%s8 + $0x30] sm:$0xff]
      %v3244 = vld [vmem:[%s8 + $0x38] sm:$0xff]
      %v3245 = vld [vmem:[%s8 + $0x40] sm:$0xff]
      %v3246 = vld [vmem:[%s8 + $0x48] sm:$0xff]
      %v3247 = vld [vmem:[%s8 + $0x50] sm:$0xff]
      %v3248 = vld [vmem:[%s8 + $0x58] sm:$0xff]
      %v3249 = vld [vmem:[%s8 + $0x60] sm:$0xff]
      %v3250 = vld [vmem:[%s8 + $0x68] sm:$0xff]
      %v3251 = vld [vmem:[%s8 + $0x70] sm:$0xff]
      %v3252 = vld [vmem:[%s8 + $0x78] sm:$0xff]
      %v3253 = vld [vmem:[%s8 + $0x80] sm:$0xff]
      %v3254 = vld [vmem:[%s8 + $0x88] sm:$0xff]
      %v3255 = vld [vmem:[%s8 + $0x90] sm:$0xff]
      %v3256 = vld [vmem:[%s8 + $0x98] sm:$0xff]
      %v3257 = vld [vmem:[%s8 + $0xa0] sm:$0xff]
      %v3258 = vld [vmem:[%s8 + $0xa8] sm:$0xff]
      %v3259 = vld [vmem:[%s8 + $0xb0] sm:$0xff]
      %v3260 = vld [vmem:[%s8 + $0xb8] sm:$0xff]
      %v3261 = vld [vmem:[%s8 + $0xc0] sm:$0xff]
      %v3262 = vld [vmem:[%s8 + $0xc8] sm:$0xff]
      %v3263 = vld [vmem:[%s8 + $0xd0] sm:$0xff]
      %v3264 = vld [vmem:[%s8 + $0xd8] sm:$0xff]
      %v3265 = vld [vmem:[%s8 + $0xe0] sm:$0xff]
      %v3266 = vld [vmem:[%s8 + $0xe8] sm:$0xff]
      %v3267 = vld [vmem:[%s8 + $0xf0] sm:$0xff]
      %v3268 = vld [vmem:[%s8 + $0xf8] sm:$0xff]
      %v3269 = vld [vmem:[%s8 + $0x100] sm:$0xff]
      %v3270 = vld [vmem:[%s8 + $0x108] sm:$0xff]
      %v3271 = vld [vmem:[%s8 + $0x110] sm:$0xff]
      %v3272 = vld [vmem:[%s8 + $0x118] sm:$0xff]
      %v3273 = vld [vmem:[%s8 + $0x120] sm:$0xff]
      %v3274 = vld [vmem:[%s8 + $0x128] sm:$0xff]
      %v3275 = vld [vmem:[%s8 + $0x130] sm:$0xff]
      %v3276 = vld [vmem:[%s8 + $0x138] sm:$0xff]
      %v3277 = vld [vmem:[%s8 + $0x140] sm:$0xff]
      %v3278 = vld [vmem:[%s8 + $0x148] sm:$0xff]
      %v3279 = vld [vmem:[%s8 + $0x150] sm:$0xff]
      %v3280 = vld [vmem:[%s8 + $0x158] sm:$0xff]
      %v3281 = vld [vmem:[%s8 + $0x160] sm:$0xff]
      %v3282 = vld [vmem:[%s8 + $0x168] sm:$0xff]
      %v3283 = vld [vmem:[%s8 + $0x170] sm:$0xff]
      %v3284 = vld [vmem:[%s8 + $0x178] sm:$0xff]
      %v3285 = vld [vmem:[%s8 + $0x180] sm:$0xff]
      %v3286 = vld [vmem:[%s8 + $0x188] sm:$0xff]
      %v3287 = vld [vmem:[%s8 + $0x190] sm:$0xff]
      %v3288 = vld [vmem:[%s8 + $0x198] sm:$0xff]
      %v3289 = vld [vmem:[%s8 + $0x1a0] sm:$0xff]
      %v3290 = vld [vmem:[%s8 + $0x1a8] sm:$0xff]
      %v3291 = vld [vmem:[%s8 + $0x1b0] sm:$0xff]
      %v3292 = vld [vmem:[%s8 + $0x1b8] sm:$0xff]
      %v3293 = vld [vmem:[%s8 + $0x1c0] sm:$0xff]
      %v3294 = vld [vmem:[%s8 + $0x1c8] sm:$0xff]
      %v3295 = vld [vmem:[%s8 + $0x1d0] sm:$0xff]
      %v3296 = vld [vmem:[%s8 + $0x1d8] sm:$0xff]
      %v3297 = vld [vmem:[%s8 + $0x1e0] sm:$0xff]
      %v3298 = vld [vmem:[%s8 + $0x1e8] sm:$0xff]
      %v3299 = vld [vmem:[%s8 + $0x1f0] sm:$0xff]
      %v3300 = vld [vmem:[%s8 + $0x1f8] sm:$0xff]
      %v3301 = vld [vmem:[%s9] sm:$0x3]
      %v3303 = vperm.slane %v3301, 0
      %v3304 = vperm.slane %v3301, 1
      %3307 = vmatpush.msra.mxu0 %v3267
      %3308 = vmatpush.msra.mxu0 %v3265
      %3309 = vmatpush.msra.mxu0 %v3263
      %3310 = vmatpush.msra.mxu0 %v3261
      %3311 = vmatpush.msra.mxu0 %v3259
      %3312 = vmatpush.msra.mxu0 %v3257
      %3313 = vmatpush.msra.mxu0 %v3255
      %3314 = vmatpush.msra.mxu0 %v3253
      %3315 = vmatpush.msra.mxu0 %v3251
      %3316 = vmatpush.msra.mxu0 %v3249
      %3317 = vmatpush.msra.mxu0 %v3247
      %3318 = vmatpush.msra.mxu0 %v3245
      %3319 = vmatpush.msra.mxu0 %v3243
      %3320 = vmatpush.msra.mxu0 %v3241
      %3321 = vmatpush.msra.mxu0 %v3239
      %3322 = vmatpush.msra.mxu0 %v3237
      %3323 = vmatmul.f32.gmra.mxu0 %v3229
      %v3324 = vpop.f32.mrf.mxu0
      %v3325 = vadd.f32 %v3303, %v3324
      %3326 = vmatmul.f32.gmra.mxu0 %v3231
      %v3327 = vpop.f32.mrf.mxu0
      %v3328 = vadd.f32 %v3303, %v3327
      %3329 = vdwg.mxu0
      %3330 = vmatpush.msra.mxu0 %v3299
      %3331 = vmatpush.msra.mxu0 %v3297
      %3332 = vmatpush.msra.mxu0 %v3295
      %3333 = vmatpush.msra.mxu0 %v3293
      %3334 = vmatpush.msra.mxu0 %v3291
      %3335 = vmatpush.msra.mxu0 %v3289
      %3336 = vmatpush.msra.mxu0 %v3287
      %3337 = vmatpush.msra.mxu0 %v3285
      %3338 = vmatpush.msra.mxu0 %v3283
      %3339 = vmatpush.msra.mxu0 %v3281
      %3340 = vmatpush.msra.mxu0 %v3279
      %3341 = vmatpush.msra.mxu0 %v3277
      %3342 = vmatpush.msra.mxu0 %v3275
      %3343 = vmatpush.msra.mxu0 %v3273
      %3344 = vmatpush.msra.mxu0 %v3271
      %3345 = vmatpush.msra.mxu0 %v3269
      %3346 = vmatmul.f32.gmra.mxu0 %v3230
      %v3347 = vpop.f32.mrf.mxu0
      %v3348 = vadd.f32 %v3325, %v3347
      %3349 = vmatmul.f32.gmra.mxu0 %v3232
      %v3350 = vpop.f32.mrf.mxu0
      %v3351 = vadd.f32 %v3328, %v3350
      %3352 = vdwg.mxu0
      %3353 = vmatpush.msra.mxu0 %v3268
      %3354 = vmatpush.msra.mxu0 %v3266
      %3355 = vmatpush.msra.mxu0 %v3264
      %3356 = vmatpush.msra.mxu0 %v3262
      %3357 = vmatpush.msra.mxu0 %v3260
      %3358 = vmatpush.msra.mxu0 %v3258
      %3359 = vmatpush.msra.mxu0 %v3256
      %3360 = vmatpush.msra.mxu0 %v3254
      %3361 = vmatpush.msra.mxu0 %v3252
      %3362 = vmatpush.msra.mxu0 %v3250
      %3363 = vmatpush.msra.mxu0 %v3248
      %3364 = vmatpush.msra.mxu0 %v3246
      %3365 = vmatpush.msra.mxu0 %v3244
      %3366 = vmatpush.msra.mxu0 %v3242
      %3367 = vmatpush.msra.mxu0 %v3240
      %3368 = vmatpush.msra.mxu0 %v3238
      %3369 = vmatmul.f32.gmra.mxu0 %v3229
      %v3370 = vpop.f32.mrf.mxu0
      %v3371 = vadd.f32 %v3304, %v3370
      %3372 = vmatmul.f32.gmra.mxu0 %v3231
      %v3373 = vpop.f32.mrf.mxu0
      %v3374 = vadd.f32 %v3304, %v3373
      %3375 = vdwg.mxu0
      %3376 = vmatpush.msra.mxu0 %v3300
      %3377 = vmatpush.msra.mxu0 %v3298
      %3378 = vmatpush.msra.mxu0 %v3296
      %3379 = vmatpush.msra.mxu0 %v3294
      %3380 = vmatpush.msra.mxu0 %v3292
      %3381 = vmatpush.msra.mxu0 %v3290
      %3382 = vmatpush.msra.mxu0 %v3288
      %3383 = vmatpush.msra.mxu0 %v3286
      %3384 = vmatpush.msra.mxu0 %v3284
      %3385 = vmatpush.msra.mxu0 %v3282
      %3386 = vmatpush.msra.mxu0 %v3280
      %3387 = vmatpush.msra.mxu0 %v3278
      %3388 = vmatpush.msra.mxu0 %v3276
      %3389 = vmatpush.msra.mxu0 %v3274
      %3390 = vmatpush.msra.mxu0 %v3272
      %3391 = vmatpush.msra.mxu0 %v3270
      %3392 = vmatmul.f32.gmra.mxu0 %v3230
      %v3393 = vpop.f32.mrf.mxu0
      %v3394 = vadd.f32 %v3371, %v3393
      %3395 = vmatmul.f32.gmra.mxu0 %v3232
      %v3396 = vpop.f32.mrf.mxu0
      %v3397 = vadd.f32 %v3374, %v3396
      %3398 = vdwg.mxu0
      %v3399 = vtanh.pop %v3348
      %v3400 = vtanh.pop %v3394
      %v3401 = vtanh.pop %v3351
      %v3402 = vtanh.pop %v3397
      %v3403 = vadd.f32 %v3229, %v3399
      %v3404 = vadd.f32 %v3230, %v3400
      %v3405 = vadd.f32 %v3231, %v3401
      %v3406 = vadd.f32 %v3232, %v3402
      %v3407 = vld [vmem:[#allocation2 + $0xa0] sm:$0xff]
      %v3408 = vld [vmem:[#allocation2 + $0xa8] sm:$0xff]
      %v3409 = vld [vmem:[#allocation2 + $0xb0] sm:$0xff]
      %v3410 = vld [vmem:[#allocation2 + $0xb8] sm:$0xff]
      %v3411 = vld [vmem:[%s10] sm:$0xff]
      %v3412 = vld [vmem:[%s10 + $0x8] sm:$0xff]
      %v3413 = vld [vmem:[%s10 + $0x10] sm:$0xff]
      %v3414 = vld [vmem:[%s10 + $0x18] sm:$0xff]
      %v3415 = vld [vmem:[%s10 + $0x20] sm:$0xff]
      %v3416 = vld [vmem:[%s10 + $0x28] sm:$0xff]
      %v3417 = vld [vmem:[%s10 + $0x30] sm:$0xff]
      %v3418 = vld [vmem:[%s10 + $0x38] sm:$0xff]
      %v3419 = vld [vmem:[%s10 + $0x40] sm:$0xff]
      %v3420 = vld [vmem:[%s10 + $0x48] sm:$0xff]
      %v3421 = vld [vmem:[%s10 + $0x50] sm:$0xff]
      %v3422 = vld [vmem:[%s10 + $0x58] sm:$0xff]
      %v3423 = vld [vmem:[%s10 + $0x60] sm:$0xff]
      %v3424 = vld [vmem:[%s10 + $0x68] sm:$0xff]
      %v3425 = vld [vmem:[%s10 + $0x70] sm:$0xff]
      %v3426 = vld [vmem:[%s10 + $0x78] sm:$0xff]
      %v3427 = vld [vmem:[%s10 + $0x80] sm:$0xff]
      %v3428 = vld [vmem:[%s10 + $0x88] sm:$0xff]
      %v3429 = vld [vmem:[%s10 + $0x90] sm:$0xff]
      %v3430 = vld [vmem:[%s10 + $0x98] sm:$0xff]
      %v3431 = vld [vmem:[%s10 + $0xa0] sm:$0xff]
      %v3432 = vld [vmem:[%s10 + $0xa8] sm:$0xff]
      %v3433 = vld [vmem:[%s10 + $0xb0] sm:$0xff]
      %v3434 = vld [vmem:[%s10 + $0xb8] sm:$0xff]
      %v3435 = vld [vmem:[%s10 + $0xc0] sm:$0xff]
      %v3436 = vld [vmem:[%s10 + $0xc8] sm:$0xff]
      %v3437 = vld [vmem:[%s10 + $0xd0] sm:$0xff]
      %v3438 = vld [vmem:[%s10 + $0xd8] sm:$0xff]
      %v3439 = vld [vmem:[%s10 + $0xe0] sm:$0xff]
      %v3440 = vld [vmem:[%s10 + $0xe8] sm:$0xff]
      %v3441 = vld [vmem:[%s10 + $0xf0] sm:$0xff]
      %v3442 = vld [vmem:[%s10 + $0xf8] sm:$0xff]
      %v3443 = vld [vmem:[%s10 + $0x100] sm:$0xff]
      %v3444 = vld [vmem:[%s10 + $0x108] sm:$0xff]
      %v3445 = vld [vmem:[%s10 + $0x110] sm:$0xff]
      %v3446 = vld [vmem:[%s10 + $0x118] sm:$0xff]
      %v3447 = vld [vmem:[%s10 + $0x120] sm:$0xff]
      %v3448 = vld [vmem:[%s10 + $0x128] sm:$0xff]
      %v3449 = vld [vmem:[%s10 + $0x130] sm:$0xff]
      %v3450 = vld [vmem:[%s10 + $0x138] sm:$0xff]
      %v3451 = vld [vmem:[%s10 + $0x140] sm:$0xff]
      %v3452 = vld [vmem:[%s10 + $0x148] sm:$0xff]
      %v3453 = vld [vmem:[%s10 + $0x150] sm:$0xff]
      %v3454 = vld [vmem:[%s10 + $0x158] sm:$0xff]
      %v3455 = vld [vmem:[%s10 + $0x160] sm:$0xff]
      %v3456 = vld [vmem:[%s10 + $0x168] sm:$0xff]
      %v3457 = vld [vmem:[%s10 + $0x170] sm:$0xff]
      %v3458 = vld [vmem:[%s10 + $0x178] sm:$0xff]
      %v3459 = vld [vmem:[%s10 + $0x180] sm:$0xff]
      %v3460 = vld [vmem:[%s10 + $0x188] sm:$0xff]
      %v3461 = vld [vmem:[%s10 + $0x190] sm:$0xff]
      %v3462 = vld [vmem:[%s10 + $0x198] sm:$0xff]
      %v3463 = vld [vmem:[%s10 + $0x1a0] sm:$0xff]
      %v3464 = vld [vmem:[%s10 + $0x1a8] sm:$0xff]
      %v3465 = vld [vmem:[%s10 + $0x1b0] sm:$0xff]
      %v3466 = vld [vmem:[%s10 + $0x1b8] sm:$0xff]
      %v3467 = vld [vmem:[%s10 + $0x1c0] sm:$0xff]
      %v3468 = vld [vmem:[%s10 + $0x1c8] sm:$0xff]
      %v3469 = vld [vmem:[%s10 + $0x1d0] sm:$0xff]
      %v3470 = vld [vmem:[%s10 + $0x1d8] sm:$0xff]
      %v3471 = vld [vmem:[%s10 + $0x1e0] sm:$0xff]
      %v3472 = vld [vmem:[%s10 + $0x1e8] sm:$0xff]
      %v3473 = vld [vmem:[%s10 + $0x1f0] sm:$0xff]
      %v3474 = vld [vmem:[%s10 + $0x1f8] sm:$0xff]
      %3475 = vmatpush.msra.mxu0 %v3441
      %3476 = vmatpush.msra.mxu0 %v3439
      %3477 = vmatpush.msra.mxu0 %v3437
      %3478 = vmatpush.msra.mxu0 %v3435
      %3479 = vmatpush.msra.mxu0 %v3433
      %3480 = vmatpush.msra.mxu0 %v3431
      %3481 = vmatpush.msra.mxu0 %v3429
      %3482 = vmatpush.msra.mxu0 %v3427
      %3483 = vmatpush.msra.mxu0 %v3425
      %3484 = vmatpush.msra.mxu0 %v3423
      %3485 = vmatpush.msra.mxu0 %v3421
      %3486 = vmatpush.msra.mxu0 %v3419
      %3487 = vmatpush.msra.mxu0 %v3417
      %3488 = vmatpush.msra.mxu0 %v3415
      %3489 = vmatpush.msra.mxu0 %v3413
      %3490 = vmatpush.msra.mxu0 %v3411
      %3491 = vmatmul.f32.gmra.mxu0 %v3403
      %v3492 = vpop.f32.mrf.mxu0
      %v3493 = vadd.f32 0.0, %v3492
      %3494 = vmatmul.f32.gmra.mxu0 %v3405
      %v3495 = vpop.f32.mrf.mxu0
      %v3496 = vadd.f32 0.0, %v3495
      %3497 = vdwg.mxu0
      %3498 = vmatpush.msra.mxu0 %v3473
      %3499 = vmatpush.msra.mxu0 %v3471
      %3500 = vmatpush.msra.mxu0 %v3469
      %3501 = vmatpush.msra.mxu0 %v3467
      %3502 = vmatpush.msra.mxu0 %v3465
      %3503 = vmatpush.msra.mxu0 %v3463
      %3504 = vmatpush.msra.mxu0 %v3461
      %3505 = vmatpush.msra.mxu0 %v3459
      %3506 = vmatpush.msra.mxu0 %v3457
      %3507 = vmatpush.msra.mxu0 %v3455
      %3508 = vmatpush.msra.mxu0 %v3453
      %3509 = vmatpush.msra.mxu0 %v3451
      %3510 = vmatpush.msra.mxu0 %v3449
      %3511 = vmatpush.msra.mxu0 %v3447
      %3512 = vmatpush.msra.mxu0 %v3445
      %3513 = vmatpush.msra.mxu0 %v3443
      %3514 = vmatmul.f32.gmra.mxu0 %v3404
      %v3515 = vpop.f32.mrf.mxu0
      %v3516 = vadd.f32 %v3493, %v3515
      %3517 = vmatmul.f32.gmra.mxu0 %v3406
      %v3518 = vpop.f32.mrf.mxu0
      %v3519 = vadd.f32 %v3496, %v3518
      %3520 = vdwg.mxu0
      %3521 = vmatpush.msra.mxu0 %v3442
      %3522 = vmatpush.msra.mxu0 %v3440
      %3523 = vmatpush.msra.mxu0 %v3438
      %3524 = vmatpush.msra.mxu0 %v3436
      %3525 = vmatpush.msra.mxu0 %v3434
      %3526 = vmatpush.msra.mxu0 %v3432
      %3527 = vmatpush.msra.mxu0 %v3430
      %3528 = vmatpush.msra.mxu0 %v3428
      %3529 = vmatpush.msra.mxu0 %v3426
      %3530 = vmatpush.msra.mxu0 %v3424
      %3531 = vmatpush.msra.mxu0 %v3422
      %3532 = vmatpush.msra.mxu0 %v3420
      %3533 = vmatpush.msra.mxu0 %v3418
      %3534 = vmatpush.msra.mxu0 %v3416
      %3535 = vmatpush.msra.mxu0 %v3414
      %3536 = vmatpush.msra.mxu0 %v3412
      %3537 = vmatmul.f32.gmra.mxu0 %v3403
      %v3538 = vpop.f32.mrf.mxu0
      %v3539 = vadd.f32 0.0, %v3538
      %3540 = vmatmul.f32.gmra.mxu0 %v3405
      %v3541 = vpop.f32.mrf.mxu0
      %v3542 = vadd.f32 0.0, %v3541
      %3543 = vdwg.mxu0
      %3544 = vmatpush.msra.mxu0 %v3474
      %3545 = vmatpush.msra.mxu0 %v3472
      %3546 = vmatpush.msra.mxu0 %v3470
      %3547 = vmatpush.msra.mxu0 %v3468
      %3548 = vmatpush.msra.mxu0 %v3466
      %3549 = vmatpush.msra.mxu0 %v3464
      %3550 = vmatpush.msra.mxu0 %v3462
      %3551 = vmatpush.msra.mxu0 %v3460
      %3552 = vmatpush.msra.mxu0 %v3458
      %3553 = vmatpush.msra.mxu0 %v3456
      %3554 = vmatpush.msra.mxu0 %v3454
      %3555 = vmatpush.msra.mxu0 %v3452
      %3556 = vmatpush.msra.mxu0 %v3450
      %3557 = vmatpush.msra.mxu0 %v3448
      %3558 = vmatpush.msra.mxu0 %v3446
      %3559 = vmatpush.msra.mxu0 %v3444
      %3560 = vmatmul.f32.gmra.mxu0 %v3404
      %v3561 = vpop.f32.mrf.mxu0
      %v3562 = vadd.f32 %v3539, %v3561
      %3563 = vmatmul.f32.gmra.mxu0 %v3406
      %v3564 = vpop.f32.mrf.mxu0
      %v3565 = vadd.f32 %v3542, %v3564
      %3566 = vdwg.mxu0
      %v3567 = vadd.f32 %v3407, %v3516
      %v3568 = vadd.f32 %v3408, %v3562
      %v3569 = vadd.f32 %v3409, %v3519
      %v3570 = vadd.f32 %v3410, %v3565
      %v3571 = vtanh.pop %v3567
      %v3572 = vtanh.pop %v3568
      %v3573 = vtanh.pop %v3569
      %v3574 = vtanh.pop %v3570
      %3575 = vst [vmem:[#allocation3 + $0xa0] sm:$0xff] %v3571
      %3576 = vst [vmem:[#allocation3 + $0xa8] sm:$0xff] %v3572
      %3577 = vst [vmem:[#allocation3 + $0xb0] sm:$0xff] %v3573
      %3578 = vst [vmem:[#allocation3 + $0xb8] sm:$0xff] %v3574
      %v3579 = vld [vmem:[%s8] sm:$0xff]
      %v3580 = vld [vmem:[%s8 + $0x8] sm:$0xff]
      %v3581 = vld [vmem:[%s8 + $0x10] sm:$0xff]
      %v3582 = vld [vmem:[%s8 + $0x18] sm:$0xff]
      %v3583 = vld [vmem:[%s8 + $0x20] sm:$0xff]
      %v3584 = vld [vmem:[%s8 + $0x28] sm:$0xff]
      %v3585 = vld [vmem:[%s8 + $0x30] sm:$0xff]
      %v3586 = vld [vmem:[%s8 + $0x38] sm:$0xff]
      %v3587 = vld [vmem:[%s8 + $0x40] sm:$0xff]
      %v3588 = vld [vmem:[%s8 + $0x48] sm:$0xff]
      %v3589 = vld [vmem:[%s8 + $0x50] sm:$0xff]
      %v3590 = vld [vmem:[%s8 + $0x58] sm:$0xff]
      %v3591 = vld [vmem:[%s8 + $0x60] sm:$0xff]
      %v3592 = vld [vmem:[%s8 + $0x68] sm:$0xff]
      %v3593 = vld [vmem:[%s8 + $0x70] sm:$0xff]
      %v3594 = vld [vmem:[%s8 + $0x78] sm:$0xff]
      %v3595 = vld [vmem:[%s8 + $0x80] sm:$0xff]
      %v3596 = vld [vmem:[%s8 + $0x88] sm:$0xff]
      %v3597 = vld [vmem:[%s8 + $0x90] sm:$0xff]
      %v3598 = vld [vmem:[%s8 + $0x98] sm:$0xff]
      %v3599 = vld [vmem:[%s8 + $0xa0] sm:$0xff]
      %v3600 = vld [vmem:[%s8 + $0xa8] sm:$0xff]
      %v3601 = vld [vmem:[%s8 + $0xb0] sm:$0xff]
      %v3602 = vld [vmem:[%s8 + $0xb8] sm:$0xff]
      %v3603 = vld [vmem:[%s8 + $0xc0] sm:$0xff]
      %v3604 = vld [vmem:[%s8 + $0xc8] sm:$0xff]
      %v3605 = vld [vmem:[%s8 + $0xd0] sm:$0xff]
      %v3606 = vld [vmem:[%s8 + $0xd8] sm:$0xff]
      %v3607 = vld [vmem:[%s8 + $0xe0] sm:$0xff]
      %v3608 = vld [vmem:[%s8 + $0xe8] sm:$0xff]
      %v3609 = vld [vmem:[%s8 + $0xf0] sm:$0xff]
      %v3610 = vld [vmem:[%s8 + $0xf8] sm:$0xff]
      %v3611 = vld [vmem:[%s8 + $0x100] sm:$0xff]
      %v3612 = vld [vmem:[%s8 + $0x108] sm:$0xff]
      %v3613 = vld [vmem:[%s8 + $0x110] sm:$0xff]
      %v3614 = vld [vmem:[%s8 + $0x118] sm:$0xff]
      %v3615 = vld [vmem:[%s8 + $0x120] sm:$0xff]
      %v3616 = vld [vmem:[%s8 + $0x128] sm:$0xff]
      %v3617 = vld [vmem:[%s8 + $0x130] sm:$0xff]
      %v3618 = vld [vmem:[%s8 + $0x138] sm:$0xff]
      %v3619 = vld [vmem:[%s8 + $0x140] sm:$0xff]
      %v3620 = vld [vmem:[%s8 + $0x148] sm:$0xff]
      %v3621 = vld [vmem:[%s8 + $0x150] sm:$0xff]
      %v3622 = vld [vmem:[%s8 + $0x158] sm:$0xff]
      %v3623 = vld [vmem:[%s8 + $0x160] sm:$0xff]
      %v3624 = vld [vmem:[%s8 + $0x168] sm:$0xff]
      %v3625 = vld [vmem:[%s8 + $0x170] sm:$0xff]
      %v3626 = vld [vmem:[%s8 + $0x178] sm:$0xff]
      %v3627 = vld [vmem:[%s8 + $0x180] sm:$0xff]
      %v3628 = vld [vmem:[%s8 + $0x188] sm:$0xff]
      %v3629 = vld [vmem:[%s8 + $0x190] sm:$0xff]
      %v3630 = vld [vmem:[%s8 + $0x198] sm:$0xff]
      %v3631 = vld [vmem:[%s8 + $0x1a0] sm:$0xff]
      %v3632 = vld [vmem:[%s8 + $0x1a8] sm:$0xff]
      %v3633 = vld [vmem:[%s8 + $0x1b0] sm:$0xff]
      %v3634 = vld [vmem:[%s8 + $0x1b8] sm:$0xff]
      %v3635 = vld [vmem:[%s8 + $0x1c0] sm:$0xff]
      %v3636 = vld [vmem:[%s8 + $0x1c8] sm:$0xff]
      %v3637 = vld [vmem:[%s8 + $0x1d0] sm:$0xff]
      %v3638 = vld [vmem:[%s8 + $0x1d8] sm:$0xff]
      %v3639 = vld [vmem:[%s8 + $0x1e0] sm:$0xff]
      %v3640 = vld [vmem:[%s8 + $0x1e8] sm:$0xff]
      %v3641 = vld [vmem:[%s8 + $0x1f0] sm:$0xff]
      %v3642 = vld [vmem:[%s8 + $0x1f8] sm:$0xff]
      %v3643 = vld [vmem:[%s9] sm:$0x3]
      %v3645 = vperm.slane %v3643, 0
      %v3646 = vperm.slane %v3643, 1
      %3649 = vmatpush.msra.mxu0 %v3609
      %3650 = vmatpush.msra.mxu0 %v3607
      %3651 = vmatpush.msra.mxu0 %v3605
      %3652 = vmatpush.msra.mxu0 %v3603
      %3653 = vmatpush.msra.mxu0 %v3601
      %3654 = vmatpush.msra.mxu0 %v3599
      %3655 = vmatpush.msra.mxu0 %v3597
      %3656 = vmatpush.msra.mxu0 %v3595
      %3657 = vmatpush.msra.mxu0 %v3593
      %3658 = vmatpush.msra.mxu0 %v3591
      %3659 = vmatpush.msra.mxu0 %v3589
      %3660 = vmatpush.msra.mxu0 %v3587
      %3661 = vmatpush.msra.mxu0 %v3585
      %3662 = vmatpush.msra.mxu0 %v3583
      %3663 = vmatpush.msra.mxu0 %v3581
      %3664 = vmatpush.msra.mxu0 %v3579
      %3665 = vmatmul.f32.gmra.mxu0 %v3571
      %v3666 = vpop.f32.mrf.mxu0
      %v3667 = vadd.f32 %v3645, %v3666
      %3668 = vmatmul.f32.gmra.mxu0 %v3573
      %v3669 = vpop.f32.mrf.mxu0
      %v3670 = vadd.f32 %v3645, %v3669
      %3671 = vdwg.mxu0
      %3672 = vmatpush.msra.mxu0 %v3641
      %3673 = vmatpush.msra.mxu0 %v3639
      %3674 = vmatpush.msra.mxu0 %v3637
      %3675 = vmatpush.msra.mxu0 %v3635
      %3676 = vmatpush.msra.mxu0 %v3633
      %3677 = vmatpush.msra.mxu0 %v3631
      %3678 = vmatpush.msra.mxu0 %v3629
      %3679 = vmatpush.msra.mxu0 %v3627
      %3680 = vmatpush.msra.mxu0 %v3625
      %3681 = vmatpush.msra.mxu0 %v3623
      %3682 = vmatpush.msra.mxu0 %v3621
      %3683 = vmatpush.msra.mxu0 %v3619
      %3684 = vmatpush.msra.mxu0 %v3617
      %3685 = vmatpush.msra.mxu0 %v3615
      %3686 = vmatpush.msra.mxu0 %v3613
      %3687 = vmatpush.msra.mxu0 %v3611
      %3688 = vmatmul.f32.gmra.mxu0 %v3572
      %v3689 = vpop.f32.mrf.mxu0
      %v3690 = vadd.f32 %v3667, %v3689
      %3691 = vmatmul.f32.gmra.mxu0 %v3574
      %v3692 = vpop.f32.mrf.mxu0
      %v3693 = vadd.f32 %v3670, %v3692
      %3694 = vdwg.mxu0
      %3695 = vmatpush.msra.mxu0 %v3610
      %3696 = vmatpush.msra.mxu0 %v3608
      %3697 = vmatpush.msra.mxu0 %v3606
      %3698 = vmatpush.msra.mxu0 %v3604
      %3699 = vmatpush.msra.mxu0 %v3602
      %3700 = vmatpush.msra.mxu0 %v3600
      %3701 = vmatpush.msra.mxu0 %v3598
      %3702 = vmatpush.msra.mxu0 %v3596
      %3703 = vmatpush.msra.mxu0 %v3594
      %3704 = vmatpush.msra.mxu0 %v3592
      %3705 = vmatpush.msra.mxu0 %v3590
      %3706 = vmatpush.msra.mxu0 %v3588
      %3707 = vmatpush.msra.mxu0 %v3586
      %3708 = vmatpush.msra.mxu0 %v3584
      %3709 = vmatpush.msra.mxu0 %v3582
      %3710 = vmatpush.msra.mxu0 %v3580
      %3711 = vmatmul.f32.gmra.mxu0 %v3571
      %v3712 = vpop.f32.mrf.mxu0
      %v3713 = vadd.f32 %v3646, %v3712
      %3714 = vmatmul.f32.gmra.mxu0 %v3573
      %v3715 = vpop.f32.mrf.mxu0
      %v3716 = vadd.f32 %v3646, %v3715
      %3717 = vdwg.mxu0
      %3718 = vmatpush.msra.mxu0 %v3642
      %3719 = vmatpush.msra.mxu0 %v3640
      %3720 = vmatpush.msra.mxu0 %v3638
      %3721 = vmatpush.msra.mxu0 %v3636
      %3722 = vmatpush.msra.mxu0 %v3634
      %3723 = vmatpush.msra.mxu0 %v3632
      %3724 = vmatpush.msra.mxu0 %v3630
      %3725 = vmatpush.msra.mxu0 %v3628
      %3726 = vmatpush.msra.mxu0 %v3626
      %3727 = vmatpush.msra.mxu0 %v3624
      %3728 = vmatpush.msra.mxu0 %v3622
      %3729 = vmatpush.msra.mxu0 %v3620
      %3730 = vmatpush.msra.mxu0 %v3618
      %3731 = vmatpush.msra.mxu0 %v3616
      %3732 = vmatpush.msra.mxu0 %v3614
      %3733 = vmatpush.msra.mxu0 %v3612
      %3734 = vmatmul.f32.gmra.mxu0 %v3572
      %v3735 = vpop.f32.mrf.mxu0
      %v3736 = vadd.f32 %v3713, %v3735
      %3737 = vmatmul.f32.gmra.mxu0 %v3574
      %v3738 = vpop.f32.mrf.mxu0
      %v3739 = vadd.f32 %v3716, %v3738
      %3740 = vdwg.mxu0
      %v3741 = vtanh.pop %v3690
      %v3742 = vtanh.pop %v3736
      %v3743 = vtanh.pop %v3693
      %v3744 = vtanh.pop %v3739
      %v3745 = vadd.f32 %v3571, %v3741
      %v3746 = vadd.f32 %v3572, %v3742
      %v3747 = vadd.f32 %v3573, %v3743
      %v3748 = vadd.f32 %v3574, %v3744
      %v3749 = vld [vmem:[#allocation2 + $0xc0] sm:$0xff]
      %v3750 = vld [vmem:[#allocation2 + $0xc8] sm:$0xff]
      %v3751 = vld [vmem:[#allocation2 + $0xd0] sm:$0xff]
      %v3752 = vld [vmem:[#allocation2 + $0xd8] sm:$0xff]
      %v3753 = vld [vmem:[%s10] sm:$0xff]
      %v3754 = vld [vmem:[%s10 + $0x8] sm:$0xff]
      %v3755 = vld [vmem:[%s10 + $0x10] sm:$0xff]
      %v3756 = vld [vmem:[%s10 + $0x18] sm:$0xff]
      %v3757 = vld [vmem:[%s10 + $0x20] sm:$0xff]
      %v3758 = vld [vmem:[%s10 + $0x28] sm:$0xff]
      %v3759 = vld [vmem:[%s10 + $0x30] sm:$0xff]
      %v3760 = vld [vmem:[%s10 + $0x38] sm:$0xff]
      %v3761 = vld [vmem:[%s10 + $0x40] sm:$0xff]
      %v3762 = vld [vmem:[%s10 + $0x48] sm:$0xff]
      %v3763 = vld [vmem:[%s10 + $0x50] sm:$0xff]
      %v3764 = vld [vmem:[%s10 + $0x58] sm:$0xff]
      %v3765 = vld [vmem:[%s10 + $0x60] sm:$0xff]
      %v3766 = vld [vmem:[%s10 + $0x68] sm:$0xff]
      %v3767 = vld [vmem:[%s10 + $0x70] sm:$0xff]
      %v3768 = vld [vmem:[%s10 + $0x78] sm:$0xff]
      %v3769 = vld [vmem:[%s10 + $0x80] sm:$0xff]
      %v3770 = vld [vmem:[%s10 + $0x88] sm:$0xff]
      %v3771 = vld [vmem:[%s10 + $0x90] sm:$0xff]
      %v3772 = vld [vmem:[%s10 + $0x98] sm:$0xff]
      %v3773 = vld [vmem:[%s10 + $0xa0] sm:$0xff]
      %v3774 = vld [vmem:[%s10 + $0xa8] sm:$0xff]
      %v3775 = vld [vmem:[%s10 + $0xb0] sm:$0xff]
      %v3776 = vld [vmem:[%s10 + $0xb8] sm:$0xff]
      %v3777 = vld [vmem:[%s10 + $0xc0] sm:$0xff]
      %v3778 = vld [vmem:[%s10 + $0xc8] sm:$0xff]
      %v3779 = vld [vmem:[%s10 + $0xd0] sm:$0xff]
      %v3780 = vld [vmem:[%s10 + $0xd8] sm:$0xff]
      %v3781 = vld [vmem:[%s10 + $0xe0] sm:$0xff]
      %v3782 = vld [vmem:[%s10 + $0xe8] sm:$0xff]
      %v3783 = vld [vmem:[%s10 + $0xf0] sm:$0xff]
      %v3784 = vld [vmem:[%s10 + $0xf8] sm:$0xff]
      %v3785 = vld [vmem:[%s10 + $0x100] sm:$0xff]
      %v3786 = vld [vmem:[%s10 + $0x108] sm:$0xff]
      %v3787 = vld [vmem:[%s10 + $0x110] sm:$0xff]
      %v3788 = vld [vmem:[%s10 + $0x118] sm:$0xff]
      %v3789 = vld [vmem:[%s10 + $0x120] sm:$0xff]
      %v3790 = vld [vmem:[%s10 + $0x128] sm:$0xff]
      %v3791 = vld [vmem:[%s10 + $0x130] sm:$0xff]
      %v3792 = vld [vmem:[%s10 + $0x138] sm:$0xff]
      %v3793 = vld [vmem:[%s10 + $0x140] sm:$0xff]
      %v3794 = vld [vmem:[%s10 + $0x148] sm:$0xff]
      %v3795 = vld [vmem:[%s10 + $0x150] sm:$0xff]
      %v3796 = vld [vmem:[%s10 + $0x158] sm:$0xff]
      %v3797 = vld [vmem:[%s10 + $0x160] sm:$0xff]
      %v3798 = vld [vmem:[%s10 + $0x168] sm:$0xff]
      %v3799 = vld [vmem:[%s10 + $0x170] sm:$0xff]
      %v3800 = vld [vmem:[%s10 + $0x178] sm:$0xff]
      %v3801 = vld [vmem:[%s10 + $0x180] sm:$0xff]
      %v3802 = vld [vmem:[%s10 + $0x188] sm:$0xff]
      %v3803 = vld [vmem:[%s10 + $0x190] sm:$0xff]
      %v3804 = vld [vmem:[%s10 + $0x198] sm:$0xff]
      %v3805 = vld [vmem:[%s10 + $0x1a0] sm:$0xff]
      %v3806 = vld [vmem:[%s10 + $0x1a8] sm:$0xff]
      %v3807 = vld [vmem:[%s10 + $0x1b0] sm:$0xff]
      %v3808 = vld [vmem:[%s10 + $0x1b8] sm:$0xff]
      %v3809 = vld [vmem:[%s10 + $0x1c0] sm:$0xff]
      %v3810 = vld [vmem:[%s10 + $0x1c8] sm:$0xff]
      %v3811 = vld [vmem:[%s10 + $0x1d0] sm:$0xff]
      %v3812 = vld [vmem:[%s10 + $0x1d8] sm:$0xff]
      %v3813 = vld [vmem:[%s10 + $0x1e0] sm:$0xff]
      %v3814 = vld [vmem:[%s10 + $0x1e8] sm:$0xff]
      %v3815 = vld [vmem:[%s10 + $0x1f0] sm:$0xff]
      %v3816 = vld [vmem:[%s10 + $0x1f8] sm:$0xff]
      %3817 = vmatpush.msra.mxu0 %v3783
      %3818 = vmatpush.msra.mxu0 %v3781
      %3819 = vmatpush.msra.mxu0 %v3779
      %3820 = vmatpush.msra.mxu0 %v3777
      %3821 = vmatpush.msra.mxu0 %v3775
      %3822 = vmatpush.msra.mxu0 %v3773
      %3823 = vmatpush.msra.mxu0 %v3771
      %3824 = vmatpush.msra.mxu0 %v3769
      %3825 = vmatpush.msra.mxu0 %v3767
      %3826 = vmatpush.msra.mxu0 %v3765
      %3827 = vmatpush.msra.mxu0 %v3763
      %3828 = vmatpush.msra.mxu0 %v3761
      %3829 = vmatpush.msra.mxu0 %v3759
      %3830 = vmatpush.msra.mxu0 %v3757
      %3831 = vmatpush.msra.mxu0 %v3755
      %3832 = vmatpush.msra.mxu0 %v3753
      %3833 = vmatmul.f32.gmra.mxu0 %v3745
      %v3834 = vpop.f32.mrf.mxu0
      %v3835 = vadd.f32 0.0, %v3834
      %3836 = vmatmul.f32.gmra.mxu0 %v3747
      %v3837 = vpop.f32.mrf.mxu0
      %v3838 = vadd.f32 0.0, %v3837
      %3839 = vdwg.mxu0
      %3840 = vmatpush.msra.mxu0 %v3815
      %3841 = vmatpush.msra.mxu0 %v3813
      %3842 = vmatpush.msra.mxu0 %v3811
      %3843 = vmatpush.msra.mxu0 %v3809
      %3844 = vmatpush.msra.mxu0 %v3807
      %3845 = vmatpush.msra.mxu0 %v3805
      %3846 = vmatpush.msra.mxu0 %v3803
      %3847 = vmatpush.msra.mxu0 %v3801
      %3848 = vmatpush.msra.mxu0 %v3799
      %3849 = vmatpush.msra.mxu0 %v3797
      %3850 = vmatpush.msra.mxu0 %v3795
      %3851 = vmatpush.msra.mxu0 %v3793
      %3852 = vmatpush.msra.mxu0 %v3791
      %3853 = vmatpush.msra.mxu0 %v3789
      %3854 = vmatpush.msra.mxu0 %v3787
      %3855 = vmatpush.msra.mxu0 %v3785
      %3856 = vmatmul.f32.gmra.mxu0 %v3746
      %v3857 = vpop.f32.mrf.mxu0
      %v3858 = vadd.f32 %v3835, %v3857
      %3859 = vmatmul.f32.gmra.mxu0 %v3748
      %v3860 = vpop.f32.mrf.mxu0
      %v3861 = vadd.f32 %v3838, %v3860
      %3862 = vdwg.mxu0
      %3863 = vmatpush.msra.mxu0 %v3784
      %3864 = vmatpush.msra.mxu0 %v3782
      %3865 = vmatpush.msra.mxu0 %v3780
      %3866 = vmatpush.msra.mxu0 %v3778
      %3867 = vmatpush.msra.mxu0 %v3776
      %3868 = vmatpush.msra.mxu0 %v3774
      %3869 = vmatpush.msra.mxu0 %v3772
      %3870 = vmatpush.msra.mxu0 %v3770
      %3871 = vmatpush.msra.mxu0 %v3768
      %3872 = vmatpush.msra.mxu0 %v3766
      %3873 = vmatpush.msra.mxu0 %v3764
      %3874 = vmatpush.msra.mxu0 %v3762
      %3875 = vmatpush.msra.mxu0 %v3760
      %3876 = vmatpush.msra.mxu0 %v3758
      %3877 = vmatpush.msra.mxu0 %v3756
      %3878 = vmatpush.msra.mxu0 %v3754
      %3879 = vmatmul.f32.gmra.mxu0 %v3745
      %v3880 = vpop.f32.mrf.mxu0
      %v3881 = vadd.f32 0.0, %v3880
      %3882 = vmatmul.f32.gmra.mxu0 %v3747
      %v3883 = vpop.f32.mrf.mxu0
      %v3884 = vadd.f32 0.0, %v3883
      %3885 = vdwg.mxu0
      %3886 = vmatpush.msra.mxu0 %v3816
      %3887 = vmatpush.msra.mxu0 %v3814
      %3888 = vmatpush.msra.mxu0 %v3812
      %3889 = vmatpush.msra.mxu0 %v3810
      %3890 = vmatpush.msra.mxu0 %v3808
      %3891 = vmatpush.msra.mxu0 %v3806
      %3892 = vmatpush.msra.mxu0 %v3804
      %3893 = vmatpush.msra.mxu0 %v3802
      %3894 = vmatpush.msra.mxu0 %v3800
      %3895 = vmatpush.msra.mxu0 %v3798
      %3896 = vmatpush.msra.mxu0 %v3796
      %3897 = vmatpush.msra.mxu0 %v3794
      %3898 = vmatpush.msra.mxu0 %v3792
      %3899 = vmatpush.msra.mxu0 %v3790
      %3900 = vmatpush.msra.mxu0 %v3788
      %3901 = vmatpush.msra.mxu0 %v3786
      %3902 = vmatmul.f32.gmra.mxu0 %v3746
      %v3903 = vpop.f32.mrf.mxu0
      %v3904 = vadd.f32 %v3881, %v3903
      %3905 = vmatmul.f32.gmra.mxu0 %v3748
      %v3906 = vpop.f32.mrf.mxu0
      %v3907 = vadd.f32 %v3884, %v3906
      %3908 = vdwg.mxu0
      %v3909 = vadd.f32 %v3749, %v3858
      %v3910 = vadd.f32 %v3750, %v3904
      %v3911 = vadd.f32 %v3751, %v3861
      %v3912 = vadd.f32 %v3752, %v3907
      %v3913 = vtanh.pop %v3909
      %v3914 = vtanh.pop %v3910
      %v3915 = vtanh.pop %v3911
      %v3916 = vtanh.pop %v3912
      %3917 = vst [vmem:[#allocation3 + $0xc0] sm:$0xff] %v3913
      %3918 = vst [vmem:[#allocation3 + $0xc8] sm:$0xff] %v3914
      %3919 = vst [vmem:[#allocation3 + $0xd0] sm:$0xff] %v3915
      %3920 = vst [vmem:[#allocation3 + $0xd8] sm:$0xff] %v3916
      %v3921 = vld [vmem:[%s8] sm:$0xff]
      %v3922 = vld [vmem:[%s8 + $0x8] sm:$0xff]
      %v3923 = vld [vmem:[%s8 + $0x10] sm:$0xff]
      %v3924 = vld [vmem:[%s8 + $0x18] sm:$0xff]
      %v3925 = vld [vmem:[%s8 + $0x20] sm:$0xff]
      %v3926 = vld [vmem:[%s8 + $0x28] sm:$0xff]
      %v3927 = vld [vmem:[%s8 + $0x30] sm:$0xff]
      %v3928 = vld [vmem:[%s8 + $0x38] sm:$0xff]
      %v3929 = vld [vmem:[%s8 + $0x40] sm:$0xff]
      %v3930 = vld [vmem:[%s8 + $0x48] sm:$0xff]
      %v3931 = vld [vmem:[%s8 + $0x50] sm:$0xff]
      %v3932 = vld [vmem:[%s8 + $0x58] sm:$0xff]
      %v3933 = vld [vmem:[%s8 + $0x60] sm:$0xff]
      %v3934 = vld [vmem:[%s8 + $0x68] sm:$0xff]
      %v3935 = vld [vmem:[%s8 + $0x70] sm:$0xff]
      %v3936 = vld [vmem:[%s8 + $0x78] sm:$0xff]
      %v3937 = vld [vmem:[%s8 + $0x80] sm:$0xff]
      %v3938 = vld [vmem:[%s8 + $0x88] sm:$0xff]
      %v3939 = vld [vmem:[%s8 + $0x90] sm:$0xff]
      %v3940 = vld [vmem:[%s8 + $0x98] sm:$0xff]
      %v3941 = vld [vmem:[%s8 + $0xa0] sm:$0xff]
      %v3942 = vld [vmem:[%s8 + $0xa8] sm:$0xff]
      %v3943 = vld [vmem:[%s8 + $0xb0] sm:$0xff]
      %v3944 = vld [vmem:[%s8 + $0xb8] sm:$0xff]
      %v3945 = vld [vmem:[%s8 + $0xc0] sm:$0xff]
      %v3946 = vld [vmem:[%s8 + $0xc8] sm:$0xff]
      %v3947 = vld [vmem:[%s8 + $0xd0] sm:$0xff]
      %v3948 = vld [vmem:[%s8 + $0xd8] sm:$0xff]
      %v3949 = vld [vmem:[%s8 + $0xe0] sm:$0xff]
      %v3950 = vld [vmem:[%s8 + $0xe8] sm:$0xff]
      %v3951 = vld [vmem:[%s8 + $0xf0] sm:$0xff]
      %v3952 = vld [vmem:[%s8 + $0xf8] sm:$0xff]
      %v3953 = vld [vmem:[%s8 + $0x100] sm:$0xff]
      %v3954 = vld [vmem:[%s8 + $0x108] sm:$0xff]
      %v3955 = vld [vmem:[%s8 + $0x110] sm:$0xff]
      %v3956 = vld [vmem:[%s8 + $0x118] sm:$0xff]
      %v3957 = vld [vmem:[%s8 + $0x120] sm:$0xff]
      %v3958 = vld [vmem:[%s8 + $0x128] sm:$0xff]
      %v3959 = vld [vmem:[%s8 + $0x130] sm:$0xff]
      %v3960 = vld [vmem:[%s8 + $0x138] sm:$0xff]
      %v3961 = vld [vmem:[%s8 + $0x140] sm:$0xff]
      %v3962 = vld [vmem:[%s8 + $0x148] sm:$0xff]
      %v3963 = vld [vmem:[%s8 + $0x150] sm:$0xff]
      %v3964 = vld [vmem:[%s8 + $0x158] sm:$0xff]
      %v3965 = vld [vmem:[%s8 + $0x160] sm:$0xff]
      %v3966 = vld [vmem:[%s8 + $0x168] sm:$0xff]
      %v3967 = vld [vmem:[%s8 + $0x170] sm:$0xff]
      %v3968 = vld [vmem:[%s8 + $0x178] sm:$0xff]
      %v3969 = vld [vmem:[%s8 + $0x180] sm:$0xff]
      %v3970 = vld [vmem:[%s8 + $0x188] sm:$0xff]
      %v3971 = vld [vmem:[%s8 + $0x190] sm:$0xff]
      %v3972 = vld [vmem:[%s8 + $0x198] sm:$0xff]
      %v3973 = vld [vmem:[%s8 + $0x1a0] sm:$0xff]
      %v3974 = vld [vmem:[%s8 + $0x1a8] sm:$0xff]
      %v3975 = vld [vmem:[%s8 + $0x1b0] sm:$0xff]
      %v3976 = vld [vmem:[%s8 + $0x1b8] sm:$0xff]
      %v3977 = vld [vmem:[%s8 + $0x1c0] sm:$0xff]
      %v3978 = vld [vmem:[%s8 + $0x1c8] sm:$0xff]
      %v3979 = vld [vmem:[%s8 + $0x1d0] sm:$0xff]
      %v3980 = vld [vmem:[%s8 + $0x1d8] sm:$0xff]
      %v3981 = vld [vmem:[%s8 + $0x1e0] sm:$0xff]
      %v3982 = vld [vmem:[%s8 + $0x1e8] sm:$0xff]
      %v3983 = vld [vmem:[%s8 + $0x1f0] sm:$0xff]
      %v3984 = vld [vmem:[%s8 + $0x1f8] sm:$0xff]
      %v3985 = vld [vmem:[%s9] sm:$0x3]
      %v3987 = vperm.slane %v3985, 0
      %v3988 = vperm.slane %v3985, 1
      %3991 = vmatpush.msra.mxu0 %v3951
      %3992 = vmatpush.msra.mxu0 %v3949
      %3993 = vmatpush.msra.mxu0 %v3947
      %3994 = vmatpush.msra.mxu0 %v3945
      %3995 = vmatpush.msra.mxu0 %v3943
      %3996 = vmatpush.msra.mxu0 %v3941
      %3997 = vmatpush.msra.mxu0 %v3939
      %3998 = vmatpush.msra.mxu0 %v3937
      %3999 = vmatpush.msra.mxu0 %v3935
      %4000 = vmatpush.msra.mxu0 %v3933
      %4001 = vmatpush.msra.mxu0 %v3931
      %4002 = vmatpush.msra.mxu0 %v3929
      %4003 = vmatpush.msra.mxu0 %v3927
      %4004 = vmatpush.msra.mxu0 %v3925
      %4005 = vmatpush.msra.mxu0 %v3923
      %4006 = vmatpush.msra.mxu0 %v3921
      %4007 = vmatmul.f32.gmra.mxu0 %v3913
      %v4008 = vpop.f32.mrf.mxu0
      %v4009 = vadd.f32 %v3987, %v4008
      %4010 = vmatmul.f32.gmra.mxu0 %v3915
      %v4011 = vpop.f32.mrf.mxu0
      %v4012 = vadd.f32 %v3987, %v4011
      %4013 = vdwg.mxu0
      %4014 = vmatpush.msra.mxu0 %v3983
      %4015 = vmatpush.msra.mxu0 %v3981
      %4016 = vmatpush.msra.mxu0 %v3979
      %4017 = vmatpush.msra.mxu0 %v3977
      %4018 = vmatpush.msra.mxu0 %v3975
      %4019 = vmatpush.msra.mxu0 %v3973
      %4020 = vmatpush.msra.mxu0 %v3971
      %4021 = vmatpush.msra.mxu0 %v3969
      %4022 = vmatpush.msra.mxu0 %v3967
      %4023 = vmatpush.msra.mxu0 %v3965
      %4024 = vmatpush.msra.mxu0 %v3963
      %4025 = vmatpush.msra.mxu0 %v3961
      %4026 = vmatpush.msra.mxu0 %v3959
      %4027 = vmatpush.msra.mxu0 %v3957
      %4028 = vmatpush.msra.mxu0 %v3955
      %4029 = vmatpush.msra.mxu0 %v3953
      %4030 = vmatmul.f32.gmra.mxu0 %v3914
      %v4031 = vpop.f32.mrf.mxu0
      %v4032 = vadd.f32 %v4009, %v4031
      %4033 = vmatmul.f32.gmra.mxu0 %v3916
      %v4034 = vpop.f32.mrf.mxu0
      %v4035 = vadd.f32 %v4012, %v4034
      %4036 = vdwg.mxu0
      %4037 = vmatpush.msra.mxu0 %v3952
      %4038 = vmatpush.msra.mxu0 %v3950
      %4039 = vmatpush.msra.mxu0 %v3948
      %4040 = vmatpush.msra.mxu0 %v3946
      %4041 = vmatpush.msra.mxu0 %v3944
      %4042 = vmatpush.msra.mxu0 %v3942
      %4043 = vmatpush.msra.mxu0 %v3940
      %4044 = vmatpush.msra.mxu0 %v3938
      %4045 = vmatpush.msra.mxu0 %v3936
      %4046 = vmatpush.msra.mxu0 %v3934
      %4047 = vmatpush.msra.mxu0 %v3932
      %4048 = vmatpush.msra.mxu0 %v3930
      %4049 = vmatpush.msra.mxu0 %v3928
      %4050 = vmatpush.msra.mxu0 %v3926
      %4051 = vmatpush.msra.mxu0 %v3924
      %4052 = vmatpush.msra.mxu0 %v3922
      %4053 = vmatmul.f32.gmra.mxu0 %v3913
      %v4054 = vpop.f32.mrf.mxu0
      %v4055 = vadd.f32 %v3988, %v4054
      %4056 = vmatmul.f32.gmra.mxu0 %v3915
      %v4057 = vpop.f32.mrf.mxu0
      %v4058 = vadd.f32 %v3988, %v4057
      %4059 = vdwg.mxu0
      %4060 = vmatpush.msra.mxu0 %v3984
      %4061 = vmatpush.msra.mxu0 %v3982
      %4062 = vmatpush.msra.mxu0 %v3980
      %4063 = vmatpush.msra.mxu0 %v3978
      %4064 = vmatpush.msra.mxu0 %v3976
      %4065 = vmatpush.msra.mxu0 %v3974
      %4066 = vmatpush.msra.mxu0 %v3972
      %4067 = vmatpush.msra.mxu0 %v3970
      %4068 = vmatpush.msra.mxu0 %v3968
      %4069 = vmatpush.msra.mxu0 %v3966
      %4070 = vmatpush.msra.mxu0 %v3964
      %4071 = vmatpush.msra.mxu0 %v3962
      %4072 = vmatpush.msra.mxu0 %v3960
      %4073 = vmatpush.msra.mxu0 %v3958
      %4074 = vmatpush.msra.mxu0 %v3956
      %4075 = vmatpush.msra.mxu0 %v3954
      %4076 = vmatmul.f32.gmra.mxu0 %v3914
      %v4077 = vpop.f32.mrf.mxu0
      %v4078 = vadd.f32 %v4055, %v4077
      %4079 = vmatmul.f32.gmra.mxu0 %v3916
      %v4080 = vpop.f32.mrf.mxu0
      %v4081 = vadd.f32 %v4058, %v4080
      %4082 = vdwg.mxu0
      %v4083 = vtanh.pop %v4032
      %v4084 = vtanh.pop %v4078
      %v4085 = vtanh.pop %v4035
      %v4086 = vtanh.pop %v4081
      %v4087 = vadd.f32 %v3913, %v4083
      %v4088 = vadd.f32 %v3914, %v4084
      %v4089 = vadd.f32 %v3915, %v4085
      %v4090 = vadd.f32 %v3916, %v4086
      %v4091 = vld [vmem:[#allocation2 + $0xe0] sm:$0xff]
      %v4092 = vld [vmem:[#allocation2 + $0xe8] sm:$0xff]
      %v4093 = vld [vmem:[#allocation2 + $0xf0] sm:$0xff]
      %v4094 = vld [vmem:[#allocation2 + $0xf8] sm:$0xff]
      %v4095 = vld [vmem:[%s10] sm:$0xff]
      %v4096 = vld [vmem:[%s10 + $0x8] sm:$0xff]
      %v4097 = vld [vmem:[%s10 + $0x10] sm:$0xff]
      %v4098 = vld [vmem:[%s10 + $0x18] sm:$0xff]
      %v4099 = vld [vmem:[%s10 + $0x20] sm:$0xff]
      %v4100 = vld [vmem:[%s10 + $0x28] sm:$0xff]
      %v4101 = vld [vmem:[%s10 + $0x30] sm:$0xff]
      %v4102 = vld [vmem:[%s10 + $0x38] sm:$0xff]
      %v4103 = vld [vmem:[%s10 + $0x40] sm:$0xff]
      %v4104 = vld [vmem:[%s10 + $0x48] sm:$0xff]
      %v4105 = vld [vmem:[%s10 + $0x50] sm:$0xff]
      %v4106 = vld [vmem:[%s10 + $0x58] sm:$0xff]
      %v4107 = vld [vmem:[%s10 + $0x60] sm:$0xff]
      %v4108 = vld [vmem:[%s10 + $0x68] sm:$0xff]
      %v4109 = vld [vmem:[%s10 + $0x70] sm:$0xff]
      %v4110 = vld [vmem:[%s10 + $0x78] sm:$0xff]
      %v4111 = vld [vmem:[%s10 + $0x80] sm:$0xff]
      %v4112 = vld [vmem:[%s10 + $0x88] sm:$0xff]
      %v4113 = vld [vmem:[%s10 + $0x90] sm:$0xff]
      %v4114 = vld [vmem:[%s10 + $0x98] sm:$0xff]
      %v4115 = vld [vmem:[%s10 + $0xa0] sm:$0xff]
      %v4116 = vld [vmem:[%s10 + $0xa8] sm:$0xff]
      %v4117 = vld [vmem:[%s10 + $0xb0] sm:$0xff]
      %v4118 = vld [vmem:[%s10 + $0xb8] sm:$0xff]
      %v4119 = vld [vmem:[%s10 + $0xc0] sm:$0xff]
      %v4120 = vld [vmem:[%s10 + $0xc8] sm:$0xff]
      %v4121 = vld [vmem:[%s10 + $0xd0] sm:$0xff]
      %v4122 = vld [vmem:[%s10 + $0xd8] sm:$0xff]
      %v4123 = vld [vmem:[%s10 + $0xe0] sm:$0xff]
      %v4124 = vld [vmem:[%s10 + $0xe8] sm:$0xff]
      %v4125 = vld [vmem:[%s10 + $0xf0] sm:$0xff]
      %v4126 = vld [vmem:[%s10 + $0xf8] sm:$0xff]
      %v4127 = vld [vmem:[%s10 + $0x100] sm:$0xff]
      %v4128 = vld [vmem:[%s10 + $0x108] sm:$0xff]
      %v4129 = vld [vmem:[%s10 + $0x110] sm:$0xff]
      %v4130 = vld [vmem:[%s10 + $0x118] sm:$0xff]
      %v4131 = vld [vmem:[%s10 + $0x120] sm:$0xff]
      %v4132 = vld [vmem:[%s10 + $0x128] sm:$0xff]
      %v4133 = vld [vmem:[%s10 + $0x130] sm:$0xff]
      %v4134 = vld [vmem:[%s10 + $0x138] sm:$0xff]
      %v4135 = vld [vmem:[%s10 + $0x140] sm:$0xff]
      %v4136 = vld [vmem:[%s10 + $0x148] sm:$0xff]
      %v4137 = vld [vmem:[%s10 + $0x150] sm:$0xff]
      %v4138 = vld [vmem:[%s10 + $0x158] sm:$0xff]
      %v4139 = vld [vmem:[%s10 + $0x160] sm:$0xff]
      %v4140 = vld [vmem:[%s10 + $0x168] sm:$0xff]
      %v4141 = vld [vmem:[%s10 + $0x170] sm:$0xff]
      %v4142 = vld [vmem:[%s10 + $0x178] sm:$0xff]
      %v4143 = vld [vmem:[%s10 + $0x180] sm:$0xff]
      %v4144 = vld [vmem:[%s10 + $0x188] sm:$0xff]
      %v4145 = vld [vmem:[%s10 + $0x190] sm:$0xff]
      %v4146 = vld [vmem:[%s10 + $0x198] sm:$0xff]
      %v4147 = vld [vmem:[%s10 + $0x1a0] sm:$0xff]
      %v4148 = vld [vmem:[%s10 + $0x1a8] sm:$0xff]
      %v4149 = vld [vmem:[%s10 + $0x1b0] sm:$0xff]
      %v4150 = vld [vmem:[%s10 + $0x1b8] sm:$0xff]
      %v4151 = vld [vmem:[%s10 + $0x1c0] sm:$0xff]
      %v4152 = vld [vmem:[%s10 + $0x1c8] sm:$0xff]
      %v4153 = vld [vmem:[%s10 + $0x1d0] sm:$0xff]
      %v4154 = vld [vmem:[%s10 + $0x1d8] sm:$0xff]
      %v4155 = vld [vmem:[%s10 + $0x1e0] sm:$0xff]
      %v4156 = vld [vmem:[%s10 + $0x1e8] sm:$0xff]
      %v4157 = vld [vmem:[%s10 + $0x1f0] sm:$0xff]
      %v4158 = vld [vmem:[%s10 + $0x1f8] sm:$0xff]
      %4159 = vmatpush.msra.mxu0 %v4125
      %4160 = vmatpush.msra.mxu0 %v4123
      %4161 = vmatpush.msra.mxu0 %v4121
      %4162 = vmatpush.msra.mxu0 %v4119
      %4163 = vmatpush.msra.mxu0 %v4117
      %4164 = vmatpush.msra.mxu0 %v4115
      %4165 = vmatpush.msra.mxu0 %v4113
      %4166 = vmatpush.msra.mxu0 %v4111
      %4167 = vmatpush.msra.mxu0 %v4109
      %4168 = vmatpush.msra.mxu0 %v4107
      %4169 = vmatpush.msra.mxu0 %v4105
      %4170 = vmatpush.msra.mxu0 %v4103
      %4171 = vmatpush.msra.mxu0 %v4101
      %4172 = vmatpush.msra.mxu0 %v4099
      %4173 = vmatpush.msra.mxu0 %v4097
      %4174 = vmatpush.msra.mxu0 %v4095
      %4175 = vmatmul.f32.gmra.mxu0 %v4087
      %v4176 = vpop.f32.mrf.mxu0
      %v4177 = vadd.f32 0.0, %v4176
      %4178 = vmatmul.f32.gmra.mxu0 %v4089
      %v4179 = vpop.f32.mrf.mxu0
      %v4180 = vadd.f32 0.0, %v4179
      %4181 = vdwg.mxu0
      %4182 = vmatpush.msra.mxu0 %v4157
      %4183 = vmatpush.msra.mxu0 %v4155
      %4184 = vmatpush.msra.mxu0 %v4153
      %4185 = vmatpush.msra.mxu0 %v4151
      %4186 = vmatpush.msra.mxu0 %v4149
      %4187 = vmatpush.msra.mxu0 %v4147
      %4188 = vmatpush.msra.mxu0 %v4145
      %4189 = vmatpush.msra.mxu0 %v4143
      %4190 = vmatpush.msra.mxu0 %v4141
      %4191 = vmatpush.msra.mxu0 %v4139
      %4192 = vmatpush.msra.mxu0 %v4137
      %4193 = vmatpush.msra.mxu0 %v4135
      %4194 = vmatpush.msra.mxu0 %v4133
      %4195 = vmatpush.msra.mxu0 %v4131
      %4196 = vmatpush.msra.mxu0 %v4129
      %4197 = vmatpush.msra.mxu0 %v4127
      %4198 = vmatmul.f32.gmra.mxu0 %v4088
      %v4199 = vpop.f32.mrf.mxu0
      %v4200 = vadd.f32 %v4177, %v4199
      %4201 = vmatmul.f32.gmra.mxu0 %v4090
      %v4202 = vpop.f32.mrf.mxu0
      %v4203 = vadd.f32 %v4180, %v4202
      %4204 = vdwg.mxu0
      %4205 = vmatpush.msra.mxu0 %v4126
      %4206 = vmatpush.msra.mxu0 %v4124
      %4207 = vmatpush.msra.mxu0 %v4122
      %4208 = vmatpush.msra.mxu0 %v4120
      %4209 = vmatpush.msra.mxu0 %v4118
      %4210 = vmatpush.msra.mxu0 %v4116
      %4211 = vmatpush.msra.mxu0 %v4114
      %4212 = vmatpush.msra.mxu0 %v4112
      %4213 = vmatpush.msra.mxu0 %v4110
      %4214 = vmatpush.msra.mxu0 %v4108
      %4215 = vmatpush.msra.mxu0 %v4106
      %4216 = vmatpush.msra.mxu0 %v4104
      %4217 = vmatpush.msra.mxu0 %v4102
      %4218 = vmatpush.msra.mxu0 %v4100
      %4219 = vmatpush.msra.mxu0 %v4098
      %4220 = vmatpush.msra.mxu0 %v4096
      %4221 = vmatmul.f32.gmra.mxu0 %v4087
      %v4222 = vpop.f32.mrf.mxu0
      %v4223 = vadd.f32 0.0, %v4222
      %4224 = vmatmul.f32.gmra.mxu0 %v4089
      %v4225 = vpop.f32.mrf.mxu0
      %v4226 = vadd.f32 0.0, %v4225
      %4227 = vdwg.mxu0
      %4228 = vmatpush.msra.mxu0 %v4158
      %4229 = vmatpush.msra.mxu0 %v4156
      %4230 = vmatpush.msra.mxu0 %v4154
      %4231 = vmatpush.msra.mxu0 %v4152
      %4232 = vmatpush.msra.mxu0 %v4150
      %4233 = vmatpush.msra.mxu0 %v4148
      %4234 = vmatpush.msra.mxu0 %v4146
      %4235 = vmatpush.msra.mxu0 %v4144
      %4236 = vmatpush.msra.mxu0 %v4142
      %4237 = vmatpush.msra.mxu0 %v4140
      %4238 = vmatpush.msra.mxu0 %v4138
      %4239 = vmatpush.msra.mxu0 %v4136
      %4240 = vmatpush.msra.mxu0 %v4134
      %4241 = vmatpush.msra.mxu0 %v4132
      %4242 = vmatpush.msra.mxu0 %v4130
      %4243 = vmatpush.msra.mxu0 %v4128
      %4244 = vmatmul.f32.gmra.mxu0 %v4088
      %v4245 = vpop.f32.mrf.mxu0
      %v4246 = vadd.f32 %v4223, %v4245
      %4247 = vmatmul.f32.gmra.mxu0 %v4090
      %v4248 = vpop.f32.mrf.mxu0
      %v4249 = vadd.f32 %v4226, %v4248
      %4250 = vdwg.mxu0
      %v4251 = vadd.f32 %v4091, %v4200
      %v4252 = vadd.f32 %v4092, %v4246
      %v4253 = vadd.f32 %v4093, %v4203
      %v4254 = vadd.f32 %v4094, %v4249
      %v4255 = vtanh.pop %v4251
      %v4256 = vtanh.pop %v4252
      %v4257 = vtanh.pop %v4253
      %v4258 = vtanh.pop %v4254
      %4259 = vst [vmem:[#allocation3 + $0xe0] sm:$0xff] %v4255
      %4260 = vst [vmem:[#allocation3 + $0xe8] sm:$0xff] %v4256
      %4261 = vst [vmem:[#allocation3 + $0xf0] sm:$0xff] %v4257
      %4262 = vst [vmem:[#allocation3 + $0xf8] sm:$0xff] %v4258
      %v4263 = vld [vmem:[#allocation3] sm:$0xff]
      %v4264 = vld [vmem:[#allocation3 + $0x8] sm:$0xff]
      %v4265 = vld [vmem:[#allocation3 + $0x10] sm:$0xff]
      %v4266 = vld [vmem:[#allocation3 + $0x18] sm:$0xff]
      %v4267 = vld [vmem:[#allocation3 + $0x20] sm:$0xff]
      %v4268 = vld [vmem:[#allocation3 + $0x28] sm:$0xff]
      %v4269 = vld [vmem:[#allocation3 + $0x30] sm:$0xff]
      %v4270 = vld [vmem:[#allocation3 + $0x38] sm:$0xff]
      %v4271 = vld [vmem:[#allocation3 + $0x40] sm:$0xff]
      %v4272 = vld [vmem:[#allocation3 + $0x48] sm:$0xff]
      %v4273 = vld [vmem:[#allocation3 + $0x50] sm:$0xff]
      %v4274 = vld [vmem:[#allocation3 + $0x58] sm:$0xff]
      %v4275 = vld [vmem:[#allocation3 + $0x60] sm:$0xff]
      %v4276 = vld [vmem:[#allocation3 + $0x68] sm:$0xff]
      %v4277 = vld [vmem:[#allocation3 + $0x70] sm:$0xff]
      %v4278 = vld [vmem:[#allocation3 + $0x78] sm:$0xff]
      %v4279 = vld [vmem:[#allocation3 + $0x80] sm:$0xff]
      %v4280 = vld [vmem:[#allocation3 + $0x88] sm:$0xff]
      %v4281 = vld [vmem:[#allocation3 + $0x90] sm:$0xff]
      %v4282 = vld [vmem:[#allocation3 + $0x98] sm:$0xff]
      %v4283 = vld [vmem:[#allocation3 + $0xa0] sm:$0xff]
      %v4284 = vld [vmem:[#allocation3 + $0xa8] sm:$0xff]
      %v4285 = vld [vmem:[#allocation3 + $0xb0] sm:$0xff]
      %v4286 = vld [vmem:[#allocation3 + $0xb8] sm:$0xff]
      %v4287 = vld [vmem:[#allocation3 + $0xc0] sm:$0xff]
      %v4288 = vld [vmem:[#allocation3 + $0xc8] sm:$0xff]
      %v4289 = vld [vmem:[#allocation3 + $0xd0] sm:$0xff]
      %v4290 = vld [vmem:[#allocation3 + $0xd8] sm:$0xff]
      %v4291 = vld [vmem:[#allocation3 + $0xe0] sm:$0xff]
      %v4292 = vld [vmem:[#allocation3 + $0xe8] sm:$0xff]
      %v4293 = vld [vmem:[#allocation3 + $0xf0] sm:$0xff]
      %v4294 = vld [vmem:[#allocation3 + $0xf8] sm:$0xff]
      %v4295 = vld [vmem:[%s11] sm:$0xff]
      %v4296 = vld [vmem:[%s11 + $0x8] sm:$0xff]
      %v4297 = vld [vmem:[%s11 + $0x10] sm:$0xff]
      %v4298 = vld [vmem:[%s11 + $0x18] sm:$0xff]
      %v4299 = vld [vmem:[%s12] sm:$0xff]
      %v4300 = vld [vmem:[%s12 + $0x8] sm:$0xff]
      %4302 = vset.pattern.permute.xlu0 0
      %4303 = vperm.xlu0 %4302, %v4299
      %v4304 = vpop.permute.xlu0 %4303
      %4307 = vset.pattern.permute.xlu0 0
      %4308 = vperm.xlu0 %4307, %v4300
      %v4309 = vpop.permute.xlu0 %4308
      %4311 = vmatpush.xpose.msra.mxu0 %v4293
      %4312 = vmatpush.xpose.msra.mxu0 %v4291
      %4313 = vmatpush.xpose.msra.mxu0 %v4289
      %4314 = vmatpush.xpose.msra.mxu0 %v4287
      %4315 = vmatpush.xpose.msra.mxu0 %v4285
      %4316 = vmatpush.xpose.msra.mxu0 %v4283
      %4317 = vmatpush.xpose.msra.mxu0 %v4281
      %4318 = vmatpush.xpose.msra.mxu0 %v4279
      %4319 = vmatpush.xpose.msra.mxu0 %v4277
      %4320 = vmatpush.xpose.msra.mxu0 %v4275
      %4321 = vmatpush.xpose.msra.mxu0 %v4273
      %4322 = vmatpush.xpose.msra.mxu0 %v4271
      %4323 = vmatpush.xpose.msra.mxu0 %v4269
      %4324 = vmatpush.xpose.msra.mxu0 %v4267
      %4325 = vmatpush.xpose.msra.mxu0 %v4265
      %4326 = vmatpush.xpose.msra.mxu0 %v4263
      %4327 = vmatmul.f32.gmra.mxu0 %v4295
      %v4328 = vpop.f32.mrf.mxu0
      %v4329 = vadd.f32 %v4304, %v4328
      %4330 = vmatmul.f32.gmra.mxu0 %v4297
      %v4331 = vpop.f32.mrf.mxu0
      %v4332 = vadd.f32 %v4309, %v4331
      %4333 = vdwg.mxu0
      %4334 = vmatpush.xpose.msra.mxu0 %v4294
      %4335 = vmatpush.xpose.msra.mxu0 %v4292
      %4336 = vmatpush.xpose.msra.mxu0 %v4290
      %4337 = vmatpush.xpose.msra.mxu0 %v4288
      %4338 = vmatpush.xpose.msra.mxu0 %v4286
      %4339 = vmatpush.xpose.msra.mxu0 %v4284
      %4340 = vmatpush.xpose.msra.mxu0 %v4282
      %4341 = vmatpush.xpose.msra.mxu0 %v4280
      %4342 = vmatpush.xpose.msra.mxu0 %v4278
      %4343 = vmatpush.xpose.msra.mxu0 %v4276
      %4344 = vmatpush.xpose.msra.mxu0 %v4274
      %4345 = vmatpush.xpose.msra.mxu0 %v4272
      %4346 = vmatpush.xpose.msra.mxu0 %v4270
      %4347 = vmatpush.xpose.msra.mxu0 %v4268
      %4348 = vmatpush.xpose.msra.mxu0 %v4266
      %4349 = vmatpush.xpose.msra.mxu0 %v4264
      %4350 = vmatmul.f32.gmra.mxu0 %v4296
      %v4351 = vpop.f32.mrf.mxu0
      %v4352 = vadd.f32 %v4329, %v4351
      %4353 = vmatmul.f32.gmra.mxu0 %v4298
      %v4354 = vpop.f32.mrf.mxu0
      %v4355 = vadd.f32 %v4332, %v4354
      %4356 = vdwg.mxu0
      %4357 = vst [vmem:[%s617] sm:$0xff] %v4352
      %4358 = vst [vmem:[%s617 + $0x8] sm:$0xff] %v4355
      %v4359 = vld [vmem:[%s13] sm:$0xff]
      %v4360 = vld [vmem:[%s13 + $0x8] sm:$0xff]
      %v4361 = vld [vmem:[%s13 + $0x10] sm:$0xff]
      %v4362 = vld [vmem:[%s13 + $0x18] sm:$0xff]
      %v4363 = vld [vmem:[%s14] sm:$0xff]
      %v4364 = vld [vmem:[%s14 + $0x8] sm:$0xff]
      %4366 = vset.pattern.permute.xlu0 0
      %4367 = vperm.xlu0 %4366, %v4363
      %v4368 = vpop.permute.xlu0 %4367
      %4371 = vset.pattern.permute.xlu0 0
      %4372 = vperm.xlu0 %4371, %v4364
      %v4373 = vpop.permute.xlu0 %4372
      %4375 = vmatpush.xpose.msra.mxu0 %v4293
      %4376 = vmatpush.xpose.msra.mxu0 %v4291
      %4377 = vmatpush.xpose.msra.mxu0 %v4289
      %4378 = vmatpush.xpose.msra.mxu0 %v4287
      %4379 = vmatpush.xpose.msra.mxu0 %v4285
      %4380 = vmatpush.xpose.msra.mxu0 %v4283
      %4381 = vmatpush.xpose.msra.mxu0 %v4281
      %4382 = vmatpush.xpose.msra.mxu0 %v4279
      %4383 = vmatpush.xpose.msra.mxu0 %v4277
      %4384 = vmatpush.xpose.msra.mxu0 %v4275
      %4385 = vmatpush.xpose.msra.mxu0 %v4273
      %4386 = vmatpush.xpose.msra.mxu0 %v4271
      %4387 = vmatpush.xpose.msra.mxu0 %v4269
      %4388 = vmatpush.xpose.msra.mxu0 %v4267
      %4389 = vmatpush.xpose.msra.mxu0 %v4265
      %4390 = vmatpush.xpose.msra.mxu0 %v4263
      %4391 = vmatmul.f32.gmra.mxu0 %v4359
      %v4392 = vpop.f32.mrf.mxu0
      %v4393 = vadd.f32 %v4368, %v4392
      %4394 = vmatmul.f32.gmra.mxu0 %v4361
      %v4395 = vpop.f32.mrf.mxu0
      %v4396 = vadd.f32 %v4373, %v4395
      %4397 = vdwg.mxu0
      %4398 = vmatpush.xpose.msra.mxu0 %v4294
      %4399 = vmatpush.xpose.msra.mxu0 %v4292
      %4400 = vmatpush.xpose.msra.mxu0 %v4290
      %4401 = vmatpush.xpose.msra.mxu0 %v4288
      %4402 = vmatpush.xpose.msra.mxu0 %v4286
      %4403 = vmatpush.xpose.msra.mxu0 %v4284
      %4404 = vmatpush.xpose.msra.mxu0 %v4282
      %4405 = vmatpush.xpose.msra.mxu0 %v4280
      %4406 = vmatpush.xpose.msra.mxu0 %v4278
      %4407 = vmatpush.xpose.msra.mxu0 %v4276
      %4408 = vmatpush.xpose.msra.mxu0 %v4274
      %4409 = vmatpush.xpose.msra.mxu0 %v4272
      %4410 = vmatpush.xpose.msra.mxu0 %v4270
      %4411 = vmatpush.xpose.msra.mxu0 %v4268
      %4412 = vmatpush.xpose.msra.mxu0 %v4266
      %4413 = vmatpush.xpose.msra.mxu0 %v4264
      %4414 = vmatmul.f32.gmra.mxu0 %v4360
      %v4415 = vpop.f32.mrf.mxu0
      %v4416 = vadd.f32 %v4393, %v4415
      %4417 = vmatmul.f32.gmra.mxu0 %v4362
      %v4418 = vpop.f32.mrf.mxu0
      %v4419 = vadd.f32 %v4396, %v4418
      %4420 = vdwg.mxu0
      %4421 = vst [vmem:[%s622] sm:$0xff] %v4416
      %4422 = vst [vmem:[%s622 + $0x8] sm:$0xff] %v4419
      %v4423 = vld [vmem:[%s15] sm:$0xff]
      %v4424 = vld [vmem:[%s15 + $0x8] sm:$0xff]
      %v4425 = vld [vmem:[%s15 + $0x10] sm:$0xf]
      %v4426 = vld [vmem:[%s15 + $0x18] sm:$0xf]
      %v4427 = vld [vmem:[%s16] sm:$0xff]
      %v4428 = vld [vmem:[%s16 + $0x8] sm:$0xf]
      %4430 = vset.pattern.permute.xlu0 0
      %4431 = vperm.xlu0 %4430, %v4427
      %v4432 = vpop.permute.xlu0 %4431
      %4435 = vset.pattern.permute.xlu0 0
      %4436 = vperm.xlu0 %4435, %v4428
      %v4437 = vpop.permute.xlu0 %4436
      %4439 = vmatpush.xpose.msra.mxu0 %v4293
      %4440 = vmatpush.xpose.msra.mxu0 %v4291
      %4441 = vmatpush.xpose.msra.mxu0 %v4289
      %4442 = vmatpush.xpose.msra.mxu0 %v4287
      %4443 = vmatpush.xpose.msra.mxu0 %v4285
      %4444 = vmatpush.xpose.msra.mxu0 %v4283
      %4445 = vmatpush.xpose.msra.mxu0 %v4281
      %4446 = vmatpush.xpose.msra.mxu0 %v4279
      %4447 = vmatpush.xpose.msra.mxu0 %v4277
      %4448 = vmatpush.xpose.msra.mxu0 %v4275
      %4449 = vmatpush.xpose.msra.mxu0 %v4273
      %4450 = vmatpush.xpose.msra.mxu0 %v4271
      %4451 = vmatpush.xpose.msra.mxu0 %v4269
      %4452 = vmatpush.xpose.msra.mxu0 %v4267
      %4453 = vmatpush.xpose.msra.mxu0 %v4265
      %4454 = vmatpush.xpose.msra.mxu0 %v4263
      %4455 = vmatmul.f32.gmra.mxu0 %v4423
      %v4456 = vpop.f32.mrf.mxu0
      %v4457 = vadd.f32 %v4432, %v4456
      %4458 = vmatmul.f32.gmra.mxu0 %v4425
      %v4459 = vpop.f32.mrf.mxu0
      %v4460 = vadd.f32 %v4437, %v4459
      %4461 = vdwg.mxu0
      %4462 = vmatpush.xpose.msra.mxu0 %v4294
      %4463 = vmatpush.xpose.msra.mxu0 %v4292
      %4464 = vmatpush.xpose.msra.mxu0 %v4290
      %4465 = vmatpush.xpose.msra.mxu0 %v4288
      %4466 = vmatpush.xpose.msra.mxu0 %v4286
      %4467 = vmatpush.xpose.msra.mxu0 %v4284
      %4468 = vmatpush.xpose.msra.mxu0 %v4282
      %4469 = vmatpush.xpose.msra.mxu0 %v4280
      %4470 = vmatpush.xpose.msra.mxu0 %v4278
      %4471 = vmatpush.xpose.msra.mxu0 %v4276
      %4472 = vmatpush.xpose.msra.mxu0 %v4274
      %4473 = vmatpush.xpose.msra.mxu0 %v4272
      %4474 = vmatpush.xpose.msra.mxu0 %v4270
      %4475 = vmatpush.xpose.msra.mxu0 %v4268
      %4476 = vmatpush.xpose.msra.mxu0 %v4266
      %4477 = vmatpush.xpose.msra.mxu0 %v4264
      %4478 = vmatmul.f32.gmra.mxu0 %v4424
      %v4479 = vpop.f32.mrf.mxu0
      %v4480 = vadd.f32 %v4457, %v4479
      %4481 = vmatmul.f32.gmra.mxu0 %v4426
      %v4482 = vpop.f32.mrf.mxu0
      %v4483 = vadd.f32 %v4460, %v4482
      %4484 = vdwg.mxu0
      %4485 = vst [vmem:[%s627] sm:$0xff] %v4480
      %4486 = vst [vmem:[%s627 + $0x8] sm:$0xf] %v4483
      %p4487 = scmp.lt.s32.totalorder %s31, 1
      %s4488 = scalar_select %p4487, %s31, 1
      %s4489 = smul.addr %s4488, 2
      %s4490 = smul.addr %s4489, 8
      %s4491 = scalar_lea.vmem %s17, %s4490
      %p4492 = scmp.lt.s32.totalorder %s31, 1
      %s4493 = scalar_select %p4492, %s31, 1
      %s4494 = smul.addr %s4493, 2
      %s4495 = smul.addr %s4494, 8
      %s4496 = scalar_lea.vmem %s18, %s4495
      %p4497 = scmp.lt.s32.totalorder %s31, 1
      %s4498 = scalar_select %p4497, %s31, 1
      %s4499 = smul.addr %s4498, 2
      %s4500 = smul.addr %s4499, 8
      %s4501 = scalar_lea.vmem %s19, %s4500
      // Predicated region
      $region89: #{hybrid_ssm_forward.1} parent=87 // pred_check
        %p4502 = pneg %p411
      $region90: #{hybrid_ssm_forward.1} parent=87 // pred_check_branch
        %4504 = sbr.rel (%p4502) target = $region92
      $region91: #{hybrid_ssm_forward.1} parent=87 // pred_region
        _
      $region92: #{hybrid_ssm_forward.1} parent=87 // pred_fallthru
        _
      // Predicated region
      $region93: #{hybrid_ssm_forward.1} parent=87 // pred_check
        %p4505 = pneg %p437
      $region94: #{hybrid_ssm_forward.1} parent=87 // pred_check_branch
        %4507 = sbr.rel (%p4505) target = $region96
      $region95: #{hybrid_ssm_forward.1} parent=87 // pred_region
        _
      $region96: #{hybrid_ssm_forward.1} parent=87 // pred_fallthru
        _
      // Predicated region
      $region97: #{hybrid_ssm_forward.1} parent=87 // pred_check
        %p4508 = pneg %p463
      $region98: #{hybrid_ssm_forward.1} parent=87 // pred_check_branch
        %4510 = sbr.rel (%p4508) target = $region100
      $region99: #{hybrid_ssm_forward.1} parent=87 // pred_region
        _
      $region100: #{hybrid_ssm_forward.1} parent=87 // pred_fallthru
        _
    $region88: #{hybrid_ssm_forward.1} parent=5 // pred_fallthru
      _
    %p4511 = scmp.le.s32.totalorder 2, %s26
    // Predicated region
    $region101: #{hybrid_ssm_forward.1} parent=5 // pred_check
      %p4512 = pneg %p4511
    $region102: #{hybrid_ssm_forward.1} parent=5 // pred_check_branch
      %4514 = sbr.rel (%p4512) target = $region104
    $region103: #{hybrid_ssm_forward.1} parent=5 // pred_region
      %s4515 = ssub.s32 %s26, 2
      // Predicated region
      $region105: #{hybrid_ssm_forward.1} parent=103 // pred_check
        %p4516 = pneg %p417
      $region106: #{hybrid_ssm_forward.1} parent=103 // pred_check_branch
        %4518 = sbr.rel (%p4516) target = $region108
      $region107: #{hybrid_ssm_forward.1} parent=103 // pred_region
        %p4519 = scmp.lt.s32.totalorder %s32, 1
        %s4520 = scalar_select %p4519, %s32, 1
        %s4521 = smul.addr %s4520, 2
        %s4522 = smul.addr %s4521, 8
        %s4523 = scalar_lea.vmem %s17, %s4522
      $region108: #{hybrid_ssm_forward.1} parent=103 // pred_fallthru
        _
      // Predicated region
      $region109: #{hybrid_ssm_forward.1} parent=103 // pred_check
        %p4524 = pneg %p443
      $region110: #{hybrid_ssm_forward.1} parent=103 // pred_check_branch
        %4526 = sbr.rel (%p4524) target = $region112
      $region111: #{hybrid_ssm_forward.1} parent=103 // pred_region
        %p4527 = scmp.lt.s32.totalorder %s32, 1
        %s4528 = scalar_select %p4527, %s32, 1
        %s4529 = smul.addr %s4528, 2
        %s4530 = smul.addr %s4529, 8
        %s4531 = scalar_lea.vmem %s18, %s4530
      $region112: #{hybrid_ssm_forward.1} parent=103 // pred_fallthru
        _
      // Predicated region
      $region113: #{hybrid_ssm_forward.1} parent=103 // pred_check
        %p4532 = pneg %p469
      $region114: #{hybrid_ssm_forward.1} parent=103 // pred_check_branch
        %4534 = sbr.rel (%p4532) target = $region116
      $region115: #{hybrid_ssm_forward.1} parent=103 // pred_region
        %p4535 = scmp.lt.s32.totalorder %s32, 1
        %s4536 = scalar_select %p4535, %s32, 1
        %s4537 = smul.addr %s4536, 2
        %s4538 = smul.addr %s4537, 8
        %s4539 = scalar_lea.vmem %s19, %s4538
      $region116: #{hybrid_ssm_forward.1} parent=103 // pred_fallthru
        _
    $region104: #{hybrid_ssm_forward.1} parent=5 // pred_fallthru
      _
  $region6: #{hybrid_ssm_forward.1} parent=0 // loop_footer
    %s30 = sadd.s32 1, %s26
  $region7: #{hybrid_ssm_forward.1} parent=0 // loop_footer_branch
    %25 = sbr.rel target = $region3
  $region8: #{hybrid_ssm_forward.1} parent=0 // loop_exit
    _

</llo_original>
